<compile_context>
chip_gen: v6e
topology: v6e:2x2x1
jax: 0.10.0
libtpu: 0.0.40
codegen_flags: <defaults>
</compile_context>

<pallas_src>
import functools

import jax
import jax.numpy as jnp
from jax.experimental import pallas as pl
from jax.experimental.pallas import tpu as pltpu


def _gelu_tanh(x):
    # tanh-approximate GELU (used in both kernel and reference).
    # TODO(synk): PyTorch nn.GELU() defaults to the exact erf form; the tanh
    # approximation (<~1e-3 abs diff) is used because erf is not a guaranteed
    # Mosaic lowering.
    return jax.nn.gelu(x, approximate=True)


def _pick_tile(n, target):
    """Largest tile <= target that divides n and respects the 8-sublane pack.

    Falls back to the full extent (always layout-legal), never to a tiny or
    misaligned tile.
    """
    if n <= target:
        return n
    for t in range(min(target, n), 7, -1):
        if n % t == 0 and t % 8 == 0:
            return t
    return n


# --------------------------------------------------------------------------
# Kernel 1: fused LayerNorm(C) + Linear(C -> N) (+bias) (+GELU)
# --------------------------------------------------------------------------
def _ln_linear_kernel(x_ref, gamma_ref, beta_ref, w_ref, b_ref, o_ref,
                      *, eps, inv_k, use_gelu):
    x = x_ref[0].astype(jnp.float32)                       # (tl, K)
    mean = jnp.sum(x, axis=-1, keepdims=True) * inv_k
    xc = x - mean
    var = jnp.sum(xc * xc, axis=-1, keepdims=True) * inv_k
    x_hat = xc * jax.lax.rsqrt(var + eps)
    x_hat = (x_hat * gamma_ref[...].astype(jnp.float32)
             + beta_ref[...].astype(jnp.float32))
    w = w_ref[...]                                          # (K, N), param dtype
    y = jnp.dot(x_hat.astype(w.dtype), w,
                preferred_element_type=jnp.float32)         # (tl, N)
    y = y + b_ref[...].astype(jnp.float32)
    if use_gelu:
        y = _gelu_tanh(y)
    o_ref[0] = y.astype(o_ref.dtype)


def _ln_linear(x, gamma, beta, w_t, bias, *, use_gelu, eps=1e-5, tile_l=512):
    B, L, K = x.shape
    N = w_t.shape[1]
    tl = _pick_tile(L, tile_l)
    if bias is None:
        bias = jnp.zeros((N,), dtype=w_t.dtype)
    gamma2 = gamma.reshape(1, K)
    beta2 = beta.reshape(1, K)
    bias2 = bias.reshape(1, N)

    M = B * L
    ib = x.dtype.itemsize
    cost = pl.CostEstimate(
        flops=2 * M * K * N + 10 * M * K + (8 if use_gelu else 2) * M * N,
        transcendentals=M + (M * N if use_gelu else 0),
        bytes_accessed=(M * K + M * N) * ib + (K * N + 2 * K + N) * w_t.dtype.itemsize,
    )
    kernel = functools.partial(_ln_linear_kernel, eps=eps, inv_k=1.0 / K,
                               use_gelu=use_gelu)
    return pl.pallas_call(
        kernel,
        out_shape=jax.ShapeDtypeStruct((B, L, N), x.dtype),
        grid=(B, L // tl),
        in_specs=[
            pl.BlockSpec((1, tl, K), lambda b, i: (b, i, 0)),
            pl.BlockSpec((1, K), lambda b, i: (0, 0)),
            pl.BlockSpec((1, K), lambda b, i: (0, 0)),
            pl.BlockSpec((K, N), lambda b, i: (0, 0)),
            pl.BlockSpec((1, N), lambda b, i: (0, 0)),
        ],
        out_specs=pl.BlockSpec((1, tl, N), lambda b, i: (b, i, 0)),
        compiler_params=pltpu.CompilerParams(
            dimension_semantics=("parallel", "parallel")),
        cost_estimate=cost,
    )(x, gamma2, beta2, w_t, bias2)


# --------------------------------------------------------------------------
# Kernel 2: multi-head attention, flash-style online softmax
# --------------------------------------------------------------------------
def _attention_kernel(q_ref, k_ref, v_ref, o_ref, m_sc, l_sc, acc_sc, *, scale):
    kv = pl.program_id(2)

    @pl.when(kv == 0)
    def _():
        m_sc[...] = jnp.full_like(m_sc, -jnp.inf)
        l_sc[...] = jnp.zeros_like(l_sc)
        acc_sc[...] = jnp.zeros_like(acc_sc)

    q = q_ref[0]                                            # (tq, D)
    k = k_ref[0]                                            # (tk, D)
    s = jax.lax.dot_general(q, k, (((1,), (1,)), ((), ())),
                            preferred_element_type=jnp.float32) * scale  # (tq, tk)

    m_prev = m_sc[...]
    m_new = jnp.maximum(m_prev, jnp.max(s, axis=-1, keepdims=True))
    alpha = jnp.exp(m_prev - m_new)
    p = jnp.exp(s - m_new)
    l_sc[...] = alpha * l_sc[...] + jnp.sum(p, axis=-1, keepdims=True)
    acc_sc[...] = alpha * acc_sc[...] + jnp.dot(
        p.astype(v_ref.dtype), v_ref[0], preferred_element_type=jnp.float32)
    m_sc[...] = m_new

    @pl.when(kv == pl.num_programs(2) - 1)
    def _():
        o_ref[0] = (acc_sc[...] / l_sc[...]).astype(o_ref.dtype)


def _attention(qkv, num_heads, *, tq=256, tk=256):
    B, L, C3 = qkv.shape
    C = C3 // 3
    D = C // num_heads
    # Head split (same ordering as rearrange 'b n (h d) -> b h n d').
    qkv_h = qkv.reshape(B, L, 3, num_heads, D).transpose(2, 0, 3, 1, 4)
    BH = B * num_heads
    q = qkv_h[0].reshape(BH, L, D)
    k = qkv_h[1].reshape(BH, L, D)
    v = qkv_h[2].reshape(BH, L, D)

    tq = _pick_tile(L, tq)
    tk = _pick_tile(L, tk)
    scale = float(D) ** -0.5
    ib = qkv.dtype.itemsize
    cost = pl.CostEstimate(
        flops=4 * BH * L * L * D + 8 * BH * L * L,
        transcendentals=BH * L * L,
        bytes_accessed=4 * BH * L * D * ib,
    )
    kernel = functools.partial(_attention_kernel, scale=scale)
    out = pl.pallas_call(
        kernel,
        out_shape=jax.ShapeDtypeStruct((BH, L, D), qkv.dtype),
        grid=(BH, L // tq, L // tk),
        in_specs=[
            pl.BlockSpec((1, tq, D), lambda b, i, j: (b, i, 0)),
            pl.BlockSpec((1, tk, D), lambda b, i, j: (b, j, 0)),
            pl.BlockSpec((1, tk, D), lambda b, i, j: (b, j, 0)),
        ],
        out_specs=pl.BlockSpec((1, tq, D), lambda b, i, j: (b, i, 0)),
        scratch_shapes=[
            pltpu.VMEM((tq, 1), jnp.float32),
            pltpu.VMEM((tq, 1), jnp.float32),
            pltpu.VMEM((tq, D), jnp.float32),
        ],
        compiler_params=pltpu.CompilerParams(
            dimension_semantics=("parallel", "parallel", "arbitrary")),
        cost_estimate=cost,
    )(q, k, v)
    # Merge heads: (B*H, L, D) -> (B, L, C)
    return out.reshape(B, num_heads, L, D).transpose(0, 2, 1, 3).reshape(B, L, C)


# --------------------------------------------------------------------------
# Kernel 3: fused Linear(K -> N) + bias + residual add
# --------------------------------------------------------------------------
def _linear_bias_residual_kernel(x_ref, w_ref, b_ref, res_ref, o_ref):
    x = x_ref[0]                                            # (tl, K)
    w = w_ref[...]                                          # (K, N)
    y = jnp.dot(x.astype(w.dtype), w, preferred_element_type=jnp.float32)
    y = y + b_ref[...].astype(jnp.float32) + res_ref[0].astype(jnp.float32)
    o_ref[0] = y.astype(o_ref.dtype)


def _linear_bias_residual(x, w_t, bias, residual, *, tile_l=512):
    B, L, K = x.shape
    N = w_t.shape[1]
    tl = _pick_tile(L, tile_l)
    bias2 = bias.reshape(1, N)

    M = B * L
    ib = x.dtype.itemsize
    cost = pl.CostEstimate(
        flops=2 * M * K * N + 2 * M * N,
        transcendentals=0,
        bytes_accessed=(M * K + 2 * M * N) * ib + (K * N + N) * w_t.dtype.itemsize,
    )
    return pl.pallas_call(
        _linear_bias_residual_kernel,
        out_shape=jax.ShapeDtypeStruct((B, L, N), x.dtype),
        grid=(B, L // tl),
        in_specs=[
            pl.BlockSpec((1, tl, K), lambda b, i: (b, i, 0)),
            pl.BlockSpec((K, N), lambda b, i: (0, 0)),
            pl.BlockSpec((1, N), lambda b, i: (0, 0)),
            pl.BlockSpec((1, tl, N), lambda b, i: (b, i, 0)),
        ],
        out_specs=pl.BlockSpec((1, tl, N), lambda b, i: (b, i, 0)),
        compiler_params=pltpu.CompilerParams(
            dimension_semantics=("parallel", "parallel")),
        cost_estimate=cost,
    )(x, w_t, bias2, residual)


# --------------------------------------------------------------------------
# Full block
# --------------------------------------------------------------------------
def vision_transformer_block(x, params, *, num_heads, eps=1e-5,
                             tile_l=512, tq=256, tk=256):
    """x: (B, L, C) with L = H*W.  Matches VisionTransformerBlock.forward
    (drop / attn_drop / drop_path = 0, heads > 1 so to_out is a real Linear)."""
    B, L, C = x.shape
    assert C % num_heads == 0, "dim must be divisible by num_heads"

    # norm1 + to_qkv (bias-free)
    qkv = _ln_linear(x, params["gamma1"], params["beta1"], params["w_qkv_t"],
                     None, use_gelu=False, eps=eps, tile_l=tile_l)
    # multi-head attention
    attn = _attention(qkv, num_heads, tq=tq, tk=tk)
    # to_out projection + bias + shortcut residual
    x1 = _linear_bias_residual(attn, params["w_out_t"], params["b_out"], x,
                               tile_l=tile_l)
    # norm2 + fc1 + GELU
    h = _ln_linear(x1, params["gamma2"], params["beta2"], params["w1_t"],
                   params["b1"], use_gelu=True, eps=eps, tile_l=tile_l)
    # fc2 + bias + residual
    return _linear_bias_residual(h, params["w2_t"], params["b2"], x1,
                                 tile_l=tile_l)


# --------------------------------------------------------------------------
# Pure-JAX reference mirroring the PyTorch forward
# --------------------------------------------------------------------------
def reference_block(x, params, *, num_heads, eps=1e-5):
    hp = jax.lax.Precision.HIGHEST
    B, L, C = x.shape
    D = C // num_heads

    def ln(z, g, b):
        mu = jnp.mean(z, axis=-1, keepdims=True)
        var = jnp.mean((z - mu) ** 2, axis=-1, keepdims=True)
        return (z - mu) / jnp.sqrt(var + eps) * g + b

    h = ln(x, params["gamma1"], params["beta1"])
    qkv = jnp.einsum("blc,cn->bln", h, params["w_qkv_t"], precision=hp)
    q, k, v = jnp.split(qkv, 3, axis=-1)

    def split_heads(t):
        return t.reshape(B, L, num_heads, D).transpose(0, 2, 1, 3)

    q, k, v = map(split_heads, (q, k, v))
    s = jnp.einsum("bhid,bhjd->bhij", q, k, precision=hp) * (D ** -0.5)
    p = jax.nn.softmax(s, axis=-1)
    o = jnp.einsum("bhij,bhjd->bhid", p, v, precision=hp)
    o = o.transpose(0, 2, 1, 3).reshape(B, L, C)
    x1 = x + jnp.einsum("blc,cn->bln", o, params["w_out_t"], precision=hp) \
           + params["b_out"]
    h2 = ln(x1, params["gamma2"], params["beta2"])
    h2 = jnp.einsum("blc,cn->bln", h2, params["w1_t"], precision=hp) + params["b1"]
    h2 = _gelu_tanh(h2)
    return x1 + jnp.einsum("bln,nc->blc", h2, params["w2_t"], precision=hp) \
              + params["b2"]


if __name__ == "__main__":
    # Small shapes consistent with the module: dim=32, heads=4, 8x8 tokens.
    B, H_img, W_img = 2, 8, 8
    C, num_heads, mlp_ratio = 32, 4, 4.0
    L = H_img * W_img
    hidden = int(C * mlp_ratio)

    key = jax.random.PRNGKey(0)
    ks = jax.random.split(key, 12)
    x = jax.random.normal(ks[0], (B, L, C), dtype=jnp.float32)

    w_scale = 0.05
    params = dict(
        gamma1=1.0 + 0.1 * jax.random.normal(ks[1], (C,), jnp.float32),
        beta1=0.1 * jax.random.normal(ks[2], (C,), jnp.float32),
        w_qkv_t=w_scale * jax.random.normal(ks[3], (C, 3 * C), jnp.float32),
        w_out_t=w_scale * jax.random.normal(ks[4], (C, C), jnp.float32),
        b_out=0.02 * jax.random.normal(ks[5], (C,), jnp.float32),
        gamma2=1.0 + 0.1 * jax.random.normal(ks[6], (C,), jnp.float32),
        beta2=0.1 * jax.random.normal(ks[7], (C,), jnp.float32),
        w1_t=w_scale * jax.random.normal(ks[8], (C, hidden), jnp.float32),
        b1=0.02 * jax.random.normal(ks[9], (hidden,), jnp.float32),
        w2_t=w_scale * jax.random.normal(ks[10], (hidden, C), jnp.float32),
        b2=0.02 * jax.random.normal(ks[11], (C,), jnp.float32),
    )

    block = jax.jit(functools.partial(vision_transformer_block, num_heads=num_heads))
    out = jax.block_until_ready(block(x, params))

    ref = reference_block(x, params, num_heads=num_heads)
    assert out.shape == (B, L, C), out.shape
    assert jnp.allclose(out, ref, atol=1e-3, rtol=1e-3), (
        float(jnp.max(jnp.abs(out - ref))))

    print("KERNEL_OK")
</pallas_src>

<mosaic_0001>
module attributes {stable_mosaic.version = 11 : i64} {
  func.func @_ln_linear_kernel(%arg0: i32, %arg1: i32, %arg2: memref<1x64x32xf32, #tpu.memory_space<vmem>>, %arg3: memref<1x32xf32, #tpu.memory_space<vmem>>, %arg4: memref<1x32xf32, #tpu.memory_space<vmem>>, %arg5: memref<32x96xf32, #tpu.memory_space<vmem>>, %arg6: memref<1x96xf32, #tpu.memory_space<vmem>>, %arg7: memref<1x64x96xf32, #tpu.memory_space<vmem>>) attributes {dimension_semantics = [#tpu.dimension_semantics<parallel>, #tpu.dimension_semantics<parallel>], iteration_bounds = array<i64: 2, 1>, scalar_prefetch = 0 : i64, scratch_operands = 0 : i64, tpu.core_type = #tpu.core_type<tc>, window_params = [{transform_indices = @transform_0, window_bounds = array<i64: 1, 64, 32>}, {pipeline_mode = #tpu.pipeline_mode<synchronous>, transform_indices = @transform_1, window_bounds = array<i64: 1, 32>}, {pipeline_mode = #tpu.pipeline_mode<synchronous>, transform_indices = @transform_2, window_bounds = array<i64: 1, 32>}, {pipeline_mode = #tpu.pipeline_mode<synchronous>, transform_indices = @transform_3, window_bounds = array<i64: 32, 96>}, {pipeline_mode = #tpu.pipeline_mode<synchronous>, transform_indices = @transform_4, window_bounds = array<i64: 1, 96>}, {transform_indices = @transform_5, window_bounds = array<i64: 1, 64, 96>}]} {
    %c0 = arith.constant 0 : index
    %c0_0 = arith.constant 0 : index
    %c0_1 = arith.constant 0 : index
    %0 = vector.load %arg2[%c0, %c0_0, %c0_1] : memref<1x64x32xf32, #tpu.memory_space<vmem>>, vector<1x64x32xf32>
    %1 = vector.shape_cast %0 : vector<1x64x32xf32> to vector<64x32xf32>
    %cst = arith.constant dense<0.000000e+00> : vector<64xf32>
    %2 = vector.multi_reduction <add>, %1, %cst [1] : vector<64x32xf32> to vector<64xf32>
    %3 = vector.shape_cast %2 : vector<64xf32> to vector<64x1xf32>
    %cst_2 = arith.constant 3.125000e-02 : f32
    %4 = vector.broadcast %cst_2 : f32 to vector<64x1xf32>
    %5 = arith.mulf %3, %4 : vector<64x1xf32>
    %6 = vector.broadcast %5 : vector<64x1xf32> to vector<64x32xf32>
    %7 = arith.subf %1, %6 : vector<64x32xf32>
    %8 = arith.mulf %7, %7 : vector<64x32xf32>
    %cst_3 = arith.constant dense<0.000000e+00> : vector<64xf32>
    %9 = vector.multi_reduction <add>, %8, %cst_3 [1] : vector<64x32xf32> to vector<64xf32>
    %10 = vector.shape_cast %9 : vector<64xf32> to vector<64x1xf32>
    %cst_4 = arith.constant 3.125000e-02 : f32
    %11 = vector.broadcast %cst_4 : f32 to vector<64x1xf32>
    %12 = arith.mulf %10, %11 : vector<64x1xf32>
    %cst_5 = arith.constant 9.99999974E-6 : f32
    %13 = vector.broadcast %cst_5 : f32 to vector<64x1xf32>
    %14 = arith.addf %12, %13 : vector<64x1xf32>
    %15 = math.rsqrt %14 : vector<64x1xf32>
    %16 = vector.broadcast %15 : vector<64x1xf32> to vector<64x32xf32>
    %17 = arith.mulf %7, %16 : vector<64x32xf32>
    %c0_6 = arith.constant 0 : index
    %c0_7 = arith.constant 0 : index
    %18 = vector.load %arg3[%c0_6, %c0_7] : memref<1x32xf32, #tpu.memory_space<vmem>>, vector<1x32xf32>
    %19 = vector.broadcast %18 : vector<1x32xf32> to vector<64x32xf32>
    %20 = arith.mulf %17, %19 : vector<64x32xf32>
    %c0_8 = arith.constant 0 : index
    %c0_9 = arith.constant 0 : index
    %21 = vector.load %arg4[%c0_8, %c0_9] : memref<1x32xf32, #tpu.memory_space<vmem>>, vector<1x32xf32>
    %22 = vector.broadcast %21 : vector<1x32xf32> to vector<64x32xf32>
    %23 = arith.addf %20, %22 : vector<64x32xf32>
    %c0_10 = arith.constant 0 : index
    %c0_11 = arith.constant 0 : index
    %24 = vector.load %arg5[%c0_10, %c0_11] : memref<32x96xf32, #tpu.memory_space<vmem>>, vector<32x96xf32>
    %cst_12 = arith.constant dense<0.000000e+00> : vector<64x96xf32>
    %25 = tpu.matmul %23, %24, %cst_12 {dimension_numbers = #tpu.dot_dimension_numbers<[1], [0], [0], [1], [0, 0, 1, 1], [], []>} : vector<64x32xf32>, vector<32x96xf32>, vector<64x96xf32> -> vector<64x96xf32>
    %c0_13 = arith.constant 0 : index
    %c0_14 = arith.constant 0 : index
    %26 = vector.load %arg6[%c0_13, %c0_14] : memref<1x96xf32, #tpu.memory_space<vmem>>, vector<1x96xf32>
    %27 = vector.broadcast %26 : vector<1x96xf32> to vector<64x96xf32>
    %28 = arith.addf %25, %27 : vector<64x96xf32>
    %c0_15 = arith.constant 0 : index
    %c0_16 = arith.constant 0 : index
    %c0_17 = arith.constant 0 : index
    %29 = vector.load %arg7[%c0_15, %c0_16, %c0_17] : memref<1x64x96xf32, #tpu.memory_space<vmem>>, vector<1x64x96xf32>
    %30 = vector.shape_cast %29 : vector<1x64x96xf32> to vector<64x96xf32>
    %31 = vector.shape_cast %28 : vector<64x96xf32> to vector<1x64x96xf32>
    tpu.vector_store %arg7[%c0_15, %c0_16, %c0_17], %31 {strides = array<i32>} : memref<1x64x96xf32, #tpu.memory_space<vmem>>, vector<1x64x96xf32>,
    return
  }
  func.func @transform_0(%arg0: i32, %arg1: i32) -> (i32, i32, i32) {
    %c0_i32 = arith.constant 0 : i32
    %c0_i32_0 = arith.constant 0 : i32
    return %arg0, %arg1, %c0_i32 : i32, i32, i32
  }
  func.func @transform_1(%arg0: i32, %arg1: i32) -> (i32, i32) {
    %c0_i32 = arith.constant 0 : i32
    %c0_i32_0 = arith.constant 0 : i32
    %c0_i32_1 = arith.constant 0 : i32
    return %c0_i32, %c0_i32_0 : i32, i32
  }
  func.func @transform_2(%arg0: i32, %arg1: i32) -> (i32, i32) {
    %c0_i32 = arith.constant 0 : i32
    %c0_i32_0 = arith.constant 0 : i32
    %c0_i32_1 = arith.constant 0 : i32
    return %c0_i32, %c0_i32_0 : i32, i32
  }
  func.func @transform_3(%arg0: i32, %arg1: i32) -> (i32, i32) {
    %c0_i32 = arith.constant 0 : i32
    %c0_i32_0 = arith.constant 0 : i32
    %c0_i32_1 = arith.constant 0 : i32
    return %c0_i32, %c0_i32_0 : i32, i32
  }
  func.func @transform_4(%arg0: i32, %arg1: i32) -> (i32, i32) {
    %c0_i32 = arith.constant 0 : i32
    %c0_i32_0 = arith.constant 0 : i32
    %c0_i32_1 = arith.constant 0 : i32
    return %c0_i32, %c0_i32_0 : i32, i32
  }
  func.func @transform_5(%arg0: i32, %arg1: i32) -> (i32, i32, i32) {
    %c0_i32 = arith.constant 0 : i32
    %c0_i32_0 = arith.constant 0 : i32
    return %arg0, %arg1, %c0_i32 : i32, i32, i32
  }
}

module attributes {stable_mosaic.version = 11 : i64} {
  func.func @_attention_kernel(%arg0: i32, %arg1: i32, %arg2: i32, %arg3: memref<1x64x8xf32, #tpu.memory_space<vmem>>, %arg4: memref<1x64x8xf32, #tpu.memory_space<vmem>>, %arg5: memref<1x64x8xf32, #tpu.memory_space<vmem>>, %arg6: memref<1x64x8xf32, #tpu.memory_space<vmem>>, %arg7: memref<64x1xf32, #tpu.memory_space<vmem>>, %arg8: memref<64x1xf32, #tpu.memory_space<vmem>>, %arg9: memref<64x8xf32, #tpu.memory_space<vmem>>) attributes {dimension_semantics = [#tpu.dimension_semantics<parallel>, #tpu.dimension_semantics<parallel>, #tpu.dimension_semantics<arbitrary>], iteration_bounds = array<i64: 8, 1, 1>, scalar_prefetch = 0 : i64, scratch_operands = 3 : i64, tpu.core_type = #tpu.core_type<tc>, window_params = [{transform_indices = @transform_0, window_bounds = array<i64: 1, 64, 8>}, {transform_indices = @transform_1, window_bounds = array<i64: 1, 64, 8>}, {transform_indices = @transform_2, window_bounds = array<i64: 1, 64, 8>}, {transform_indices = @transform_3, window_bounds = array<i64: 1, 64, 8>}]} {
    %c0_i32 = arith.constant 0 : i32
    %0 = arith.cmpi eq, %arg2, %c0_i32 : i32
    %1 = arith.extui %0 : i1 to i32
    %c0_i32_0 = arith.constant 0 : i32
    %2 = arith.cmpi ne, %1, %c0_i32_0 : i32
    scf.if %2 {
      %cst_27 = arith.constant 0xFF800000 : f32
      %37 = vector.broadcast %cst_27 : f32 to vector<64x1xf32>
      %c0_28 = arith.constant 0 : index
      %c0_29 = arith.constant 0 : index
      %38 = vector.load %arg7[%c0_28, %c0_29] : memref<64x1xf32, #tpu.memory_space<vmem>>, vector<64x1xf32>
      tpu.vector_store %arg7[%c0_28, %c0_29], %37 {strides = array<i32>} : memref<64x1xf32, #tpu.memory_space<vmem>>, vector<64x1xf32>,
      %cst_30 = arith.constant 0.000000e+00 : f32
      %39 = vector.broadcast %cst_30 : f32 to vector<64x1xf32>
      %c0_31 = arith.constant 0 : index
      %c0_32 = arith.constant 0 : index
      %40 = vector.load %arg8[%c0_31, %c0_32] : memref<64x1xf32, #tpu.memory_space<vmem>>, vector<64x1xf32>
      tpu.vector_store %arg8[%c0_31, %c0_32], %39 {strides = array<i32>} : memref<64x1xf32, #tpu.memory_space<vmem>>, vector<64x1xf32>,
      %cst_33 = arith.constant 0.000000e+00 : f32
      %41 = vector.broadcast %cst_33 : f32 to vector<64x8xf32>
      %c0_34 = arith.constant 0 : index
      %c0_35 = arith.constant 0 : index
      %42 = vector.load %arg9[%c0_34, %c0_35] : memref<64x8xf32, #tpu.memory_space<vmem>>, vector<64x8xf32>
      tpu.vector_store %arg9[%c0_34, %c0_35], %41 {strides = array<i32>} : memref<64x8xf32, #tpu.memory_space<vmem>>, vector<64x8xf32>,
    } else {
    }
    %c0 = arith.constant 0 : index
    %c0_1 = arith.constant 0 : index
    %c0_2 = arith.constant 0 : index
    %3 = vector.load %arg3[%c0, %c0_1, %c0_2] : memref<1x64x8xf32, #tpu.memory_space<vmem>>, vector<1x64x8xf32>
    %4 = vector.shape_cast %3 : vector<1x64x8xf32> to vector<64x8xf32>
    %c0_3 = arith.constant 0 : index
    %c0_4 = arith.constant 0 : index
    %c0_5 = arith.constant 0 : index
    %5 = vector.load %arg4[%c0_3, %c0_4, %c0_5] : memref<1x64x8xf32, #tpu.memory_space<vmem>>, vector<1x64x8xf32>
    %6 = vector.shape_cast %5 : vector<1x64x8xf32> to vector<64x8xf32>
    %cst = arith.constant dense<0.000000e+00> : vector<64x64xf32>
    %7 = tpu.matmul %4, %6, %cst {dimension_numbers = #tpu.dot_dimension_numbers<[1], [1], [0], [0], [0, 0, 1, 0], [], []>} : vector<64x8xf32>, vector<64x8xf32>, vector<64x64xf32> -> vector<64x64xf32>
    %cst_6 = arith.constant 0.353553385 : f32
    %8 = vector.broadcast %cst_6 : f32 to vector<64x64xf32>
    %9 = arith.mulf %7, %8 : vector<64x64xf32>
    %c0_7 = arith.constant 0 : index
    %c0_8 = arith.constant 0 : index
    %10 = vector.load %arg7[%c0_7, %c0_8] : memref<64x1xf32, #tpu.memory_space<vmem>>, vector<64x1xf32>
    %cst_9 = arith.constant dense<0xFF800000> : vector<64xf32>
    %11 = vector.multi_reduction <maximumf>, %9, %cst_9 [1] : vector<64x64xf32> to vector<64xf32>
    %12 = vector.shape_cast %11 : vector<64xf32> to vector<64x1xf32>
    %13 = arith.maximumf %10, %12 : vector<64x1xf32>
    %14 = arith.subf %10, %13 : vector<64x1xf32>
    %15 = math.exp %14 : vector<64x1xf32>
    %16 = vector.broadcast %13 : vector<64x1xf32> to vector<64x64xf32>
    %17 = arith.subf %9, %16 : vector<64x64xf32>
    %18 = math.exp %17 : vector<64x64xf32>
    %c0_10 = arith.constant 0 : index
    %c0_11 = arith.constant 0 : index
    %19 = vector.load %arg8[%c0_10, %c0_11] : memref<64x1xf32, #tpu.memory_space<vmem>>, vector<64x1xf32>
    %20 = arith.mulf %15, %19 : vector<64x1xf32>
    %cst_12 = arith.constant dense<0.000000e+00> : vector<64xf32>
    %21 = vector.multi_reduction <add>, %18, %cst_12 [1] : vector<64x64xf32> to vector<64xf32>
    %22 = vector.shape_cast %21 : vector<64xf32> to vector<64x1xf32>
    %23 = arith.addf %20, %22 : vector<64x1xf32>
    %c0_13 = arith.constant 0 : index
    %c0_14 = arith.constant 0 : index
    %24 = vector.load %arg8[%c0_13, %c0_14] : memref<64x1xf32, #tpu.memory_space<vmem>>, vector<64x1xf32>
    tpu.vector_store %arg8[%c0_13, %c0_14], %23 {strides = array<i32>} : memref<64x1xf32, #tpu.memory_space<vmem>>, vector<64x1xf32>,
    %c0_15 = arith.constant 0 : index
    %c0_16 = arith.constant 0 : index
    %25 = vector.load %arg9[%c0_15, %c0_16] : memref<64x8xf32, #tpu.memory_space<vmem>>, vector<64x8xf32>
    %26 = vector.broadcast %15 : vector<64x1xf32> to vector<64x8xf32>
    %27 = arith.mulf %26, %25 : vector<64x8xf32>
    %c0_17 = arith.constant 0 : index
    %c0_18 = arith.constant 0 : index
    %c0_19 = arith.constant 0 : index
    %28 = vector.load %arg5[%c0_17, %c0_18, %c0_19] : memref<1x64x8xf32, #tpu.memory_space<vmem>>, vector<1x64x8xf32>
    %29 = vector.shape_cast %28 : vector<1x64x8xf32> to vector<64x8xf32>
    %cst_20 = arith.constant dense<0.000000e+00> : vector<64x8xf32>
    %30 = tpu.matmul %18, %29, %cst_20 {dimension_numbers = #tpu.dot_dimension_numbers<[1], [0], [0], [1], [0, 0, 1, 1], [], []>} : vector<64x64xf32>, vector<64x8xf32>, vector<64x8xf32> -> vector<64x8xf32>
    %31 = arith.addf %27, %30 : vector<64x8xf32>
    %c0_21 = arith.constant 0 : index
    %c0_22 = arith.constant 0 : index
    %32 = vector.load %arg9[%c0_21, %c0_22] : memref<64x8xf32, #tpu.memory_space<vmem>>, vector<64x8xf32>
    tpu.vector_store %arg9[%c0_21, %c0_22], %31 {strides = array<i32>} : memref<64x8xf32, #tpu.memory_space<vmem>>, vector<64x8xf32>,
    %c0_23 = arith.constant 0 : index
    %c0_24 = arith.constant 0 : index
    %33 = vector.load %arg7[%c0_23, %c0_24] : memref<64x1xf32, #tpu.memory_space<vmem>>, vector<64x1xf32>
    tpu.vector_store %arg7[%c0_23, %c0_24], %13 {strides = array<i32>} : memref<64x1xf32, #tpu.memory_space<vmem>>, vector<64x1xf32>,
    %c0_i32_25 = arith.constant 0 : i32
    %34 = arith.cmpi eq, %arg2, %c0_i32_25 : i32
    %35 = arith.extui %34 : i1 to i32
    %c0_i32_26 = arith.constant 0 : i32
    %36 = arith.cmpi ne, %35, %c0_i32_26 : i32
    scf.if %36 {
      %c0_27 = arith.constant 0 : index
      %c0_28 = arith.constant 0 : index
      %37 = vector.load %arg9[%c0_27, %c0_28] : memref<64x8xf32, #tpu.memory_space<vmem>>, vector<64x8xf32>
      %c0_29 = arith.constant 0 : index
      %c0_30 = arith.constant 0 : index
      %38 = vector.load %arg8[%c0_29, %c0_30] : memref<64x1xf32, #tpu.memory_space<vmem>>, vector<64x1xf32>
      %39 = vector.broadcast %38 : vector<64x1xf32> to vector<64x8xf32>
      %40 = arith.divf %37, %39 : vector<64x8xf32>
      %c0_31 = arith.constant 0 : index
      %c0_32 = arith.constant 0 : index
      %c0_33 = arith.constant 0 : index
      %41 = vector.load %arg6[%c0_31, %c0_32, %c0_33] : memref<1x64x8xf32, #tpu.memory_space<vmem>>, vector<1x64x8xf32>
      %42 = vector.shape_cast %41 : vector<1x64x8xf32> to vector<64x8xf32>
      %43 = vector.shape_cast %40 : vector<64x8xf32> to vector<1x64x8xf32>
      tpu.vector_store %arg6[%c0_31, %c0_32, %c0_33], %43 {strides = array<i32>} : memref<1x64x8xf32, #tpu.memory_space<vmem>>, vector<1x64x8xf32>,
    } else {
    }
    return
  }
  func.func @transform_0(%arg0: i32, %arg1: i32, %arg2: i32) -> (i32, i32, i32) {
    %c0_i32 = arith.constant 0 : i32
    %c0_i32_0 = arith.constant 0 : i32
    return %arg0, %arg1, %c0_i32 : i32, i32, i32
  }
  func.func @transform_1(%arg0: i32, %arg1: i32, %arg2: i32) -> (i32, i32, i32) {
    %c0_i32 = arith.constant 0 : i32
    %c0_i32_0 = arith.constant 0 : i32
    return %arg0, %arg2, %c0_i32 : i32, i32, i32
  }
  func.func @transform_2(%arg0: i32, %arg1: i32, %arg2: i32) -> (i32, i32, i32) {
    %c0_i32 = arith.constant 0 : i32
    %c0_i32_0 = arith.constant 0 : i32
    return %arg0, %arg2, %c0_i32 : i32, i32, i32
  }
  func.func @transform_3(%arg0: i32, %arg1: i32, %arg2: i32) -> (i32, i32, i32) {
    %c0_i32 = arith.constant 0 : i32
    %c0_i32_0 = arith.constant 0 : i32
    return %arg0, %arg1, %c0_i32 : i32, i32, i32
  }
}

module attributes {stable_mosaic.version = 11 : i64} {
  func.func @_linear_bias_residual_kernel(%arg0: i32, %arg1: i32, %arg2: memref<1x64x32xf32, #tpu.memory_space<vmem>>, %arg3: memref<32x32xf32, #tpu.memory_space<vmem>>, %arg4: memref<1x32xf32, #tpu.memory_space<vmem>>, %arg5: memref<1x64x32xf32, #tpu.memory_space<vmem>>, %arg6: memref<1x64x32xf32, #tpu.memory_space<vmem>>) attributes {dimension_semantics = [#tpu.dimension_semantics<parallel>, #tpu.dimension_semantics<parallel>], iteration_bounds = array<i64: 2, 1>, scalar_prefetch = 0 : i64, scratch_operands = 0 : i64, tpu.core_type = #tpu.core_type<tc>, window_params = [{transform_indices = @transform_0, window_bounds = array<i64: 1, 64, 32>}, {pipeline_mode = #tpu.pipeline_mode<synchronous>, transform_indices = @transform_1, window_bounds = array<i64: 32, 32>}, {pipeline_mode = #tpu.pipeline_mode<synchronous>, transform_indices = @transform_2, window_bounds = array<i64: 1, 32>}, {transform_indices = @transform_3, window_bounds = array<i64: 1, 64, 32>}, {transform_indices = @transform_4, window_bounds = array<i64: 1, 64, 32>}]} {
    %c0 = arith.constant 0 : index
    %c0_0 = arith.constant 0 : index
    %c0_1 = arith.constant 0 : index
    %0 = vector.load %arg2[%c0, %c0_0, %c0_1] : memref<1x64x32xf32, #tpu.memory_space<vmem>>, vector<1x64x32xf32>
    %1 = vector.shape_cast %0 : vector<1x64x32xf32> to vector<64x32xf32>
    %c0_2 = arith.constant 0 : index
    %c0_3 = arith.constant 0 : index
    %2 = vector.load %arg3[%c0_2, %c0_3] : memref<32x32xf32, #tpu.memory_space<vmem>>, vector<32x32xf32>
    %cst = arith.constant dense<0.000000e+00> : vector<64x32xf32>
    %3 = tpu.matmul %1, %2, %cst {dimension_numbers = #tpu.dot_dimension_numbers<[1], [0], [0], [1], [0, 0, 1, 1], [], []>} : vector<64x32xf32>, vector<32x32xf32>, vector<64x32xf32> -> vector<64x32xf32>
    %c0_4 = arith.constant 0 : index
    %c0_5 = arith.constant 0 : index
    %4 = vector.load %arg4[%c0_4, %c0_5] : memref<1x32xf32, #tpu.memory_space<vmem>>, vector<1x32xf32>
    %5 = vector.broadcast %4 : vector<1x32xf32> to vector<64x32xf32>
    %6 = arith.addf %3, %5 : vector<64x32xf32>
    %c0_6 = arith.constant 0 : index
    %c0_7 = arith.constant 0 : index
    %c0_8 = arith.constant 0 : index
    %7 = vector.load %arg5[%c0_6, %c0_7, %c0_8] : memref<1x64x32xf32, #tpu.memory_space<vmem>>, vector<1x64x32xf32>
    %8 = vector.shape_cast %7 : vector<1x64x32xf32> to vector<64x32xf32>
    %9 = arith.addf %6, %8 : vector<64x32xf32>
    %c0_9 = arith.constant 0 : index
    %c0_10 = arith.constant 0 : index
    %c0_11 = arith.constant 0 : index
    %10 = vector.load %arg6[%c0_9, %c0_10, %c0_11] : memref<1x64x32xf32, #tpu.memory_space<vmem>>, vector<1x64x32xf32>
    %11 = vector.shape_cast %10 : vector<1x64x32xf32> to vector<64x32xf32>
    %12 = vector.shape_cast %9 : vector<64x32xf32> to vector<1x64x32xf32>
    tpu.vector_store %arg6[%c0_9, %c0_10, %c0_11], %12 {strides = array<i32>} : memref<1x64x32xf32, #tpu.memory_space<vmem>>, vector<1x64x32xf32>,
    return
  }
  func.func @transform_0(%arg0: i32, %arg1: i32) -> (i32, i32, i32) {
    %c0_i32 = arith.constant 0 : i32
    %c0_i32_0 = arith.constant 0 : i32
    return %arg0, %arg1, %c0_i32 : i32, i32, i32
  }
  func.func @transform_1(%arg0: i32, %arg1: i32) -> (i32, i32) {
    %c0_i32 = arith.constant 0 : i32
    %c0_i32_0 = arith.constant 0 : i32
    %c0_i32_1 = arith.constant 0 : i32
    return %c0_i32, %c0_i32_0 : i32, i32
  }
  func.func @transform_2(%arg0: i32, %arg1: i32) -> (i32, i32) {
    %c0_i32 = arith.constant 0 : i32
    %c0_i32_0 = arith.constant 0 : i32
    %c0_i32_1 = arith.constant 0 : i32
    return %c0_i32, %c0_i32_0 : i32, i32
  }
  func.func @transform_3(%arg0: i32, %arg1: i32) -> (i32, i32, i32) {
    %c0_i32 = arith.constant 0 : i32
    %c0_i32_0 = arith.constant 0 : i32
    return %arg0, %arg1, %c0_i32 : i32, i32, i32
  }
  func.func @transform_4(%arg0: i32, %arg1: i32) -> (i32, i32, i32) {
    %c0_i32 = arith.constant 0 : i32
    %c0_i32_0 = arith.constant 0 : i32
    return %arg0, %arg1, %c0_i32 : i32, i32, i32
  }
}

module attributes {stable_mosaic.version = 11 : i64} {
  func.func @_ln_linear_kernel(%arg0: i32, %arg1: i32, %arg2: memref<1x64x32xf32, #tpu.memory_space<vmem>>, %arg3: memref<1x32xf32, #tpu.memory_space<vmem>>, %arg4: memref<1x32xf32, #tpu.memory_space<vmem>>, %arg5: memref<32x128xf32, #tpu.memory_space<vmem>>, %arg6: memref<1x128xf32, #tpu.memory_space<vmem>>, %arg7: memref<1x64x128xf32, #tpu.memory_space<vmem>>) attributes {dimension_semantics = [#tpu.dimension_semantics<parallel>, #tpu.dimension_semantics<parallel>], iteration_bounds = array<i64: 2, 1>, scalar_prefetch = 0 : i64, scratch_operands = 0 : i64, tpu.core_type = #tpu.core_type<tc>, window_params = [{transform_indices = @transform_0, window_bounds = array<i64: 1, 64, 32>}, {pipeline_mode = #tpu.pipeline_mode<synchronous>, transform_indices = @transform_1, window_bounds = array<i64: 1, 32>}, {pipeline_mode = #tpu.pipeline_mode<synchronous>, transform_indices = @transform_2, window_bounds = array<i64: 1, 32>}, {pipeline_mode = #tpu.pipeline_mode<synchronous>, transform_indices = @transform_3, window_bounds = array<i64: 32, 128>}, {pipeline_mode = #tpu.pipeline_mode<synchronous>, transform_indices = @transform_4, window_bounds = array<i64: 1, 128>}, {transform_indices = @transform_5, window_bounds = array<i64: 1, 64, 128>}]} {
    %c0 = arith.constant 0 : index
    %c0_0 = arith.constant 0 : index
    %c0_1 = arith.constant 0 : index
    %0 = vector.load %arg2[%c0, %c0_0, %c0_1] : memref<1x64x32xf32, #tpu.memory_space<vmem>>, vector<1x64x32xf32>
    %1 = vector.shape_cast %0 : vector<1x64x32xf32> to vector<64x32xf32>
    %cst = arith.constant dense<0.000000e+00> : vector<64xf32>
    %2 = vector.multi_reduction <add>, %1, %cst [1] : vector<64x32xf32> to vector<64xf32>
    %3 = vector.shape_cast %2 : vector<64xf32> to vector<64x1xf32>
    %cst_2 = arith.constant 3.125000e-02 : f32
    %4 = vector.broadcast %cst_2 : f32 to vector<64x1xf32>
    %5 = arith.mulf %3, %4 : vector<64x1xf32>
    %6 = vector.broadcast %5 : vector<64x1xf32> to vector<64x32xf32>
    %7 = arith.subf %1, %6 : vector<64x32xf32>
    %8 = arith.mulf %7, %7 : vector<64x32xf32>
    %cst_3 = arith.constant dense<0.000000e+00> : vector<64xf32>
    %9 = vector.multi_reduction <add>, %8, %cst_3 [1] : vector<64x32xf32> to vector<64xf32>
    %10 = vector.shape_cast %9 : vector<64xf32> to vector<64x1xf32>
    %cst_4 = arith.constant 3.125000e-02 : f32
    %11 = vector.broadcast %cst_4 : f32 to vector<64x1xf32>
    %12 = arith.mulf %10, %11 : vector<64x1xf32>
    %cst_5 = arith.constant 9.99999974E-6 : f32
    %13 = vector.broadcast %cst_5 : f32 to vector<64x1xf32>
    %14 = arith.addf %12, %13 : vector<64x1xf32>
    %15 = math.rsqrt %14 : vector<64x1xf32>
    %16 = vector.broadcast %15 : vector<64x1xf32> to vector<64x32xf32>
    %17 = arith.mulf %7, %16 : vector<64x32xf32>
    %c0_6 = arith.constant 0 : index
    %c0_7 = arith.constant 0 : index
    %18 = vector.load %arg3[%c0_6, %c0_7] : memref<1x32xf32, #tpu.memory_space<vmem>>, vector<1x32xf32>
    %19 = vector.broadcast %18 : vector<1x32xf32> to vector<64x32xf32>
    %20 = arith.mulf %17, %19 : vector<64x32xf32>
    %c0_8 = arith.constant 0 : index
    %c0_9 = arith.constant 0 : index
    %21 = vector.load %arg4[%c0_8, %c0_9] : memref<1x32xf32, #tpu.memory_space<vmem>>, vector<1x32xf32>
    %22 = vector.broadcast %21 : vector<1x32xf32> to vector<64x32xf32>
    %23 = arith.addf %20, %22 : vector<64x32xf32>
    %c0_10 = arith.constant 0 : index
    %c0_11 = arith.constant 0 : index
    %24 = vector.load %arg5[%c0_10, %c0_11] : memref<32x128xf32, #tpu.memory_space<vmem>>, vector<32x128xf32>
    %cst_12 = arith.constant dense<0.000000e+00> : vector<64x128xf32>
    %25 = tpu.matmul %23, %24, %cst_12 {dimension_numbers = #tpu.dot_dimension_numbers<[1], [0], [0], [1], [0, 0, 1, 1], [], []>} : vector<64x32xf32>, vector<32x128xf32>, vector<64x128xf32> -> vector<64x128xf32>
    %c0_13 = arith.constant 0 : index
    %c0_14 = arith.constant 0 : index
    %26 = vector.load %arg6[%c0_13, %c0_14] : memref<1x128xf32, #tpu.memory_space<vmem>>, vector<1x128xf32>
    %27 = vector.broadcast %26 : vector<1x128xf32> to vector<64x128xf32>
    %28 = arith.addf %25, %27 : vector<64x128xf32>
    %29 = arith.mulf %28, %28 : vector<64x128xf32>
    %30 = arith.mulf %28, %29 : vector<64x128xf32>
    %cst_15 = arith.constant 4.471500e-02 : f32
    %31 = vector.broadcast %cst_15 : f32 to vector<64x128xf32>
    %32 = arith.mulf %31, %30 : vector<64x128xf32>
    %33 = arith.addf %28, %32 : vector<64x128xf32>
    %cst_16 = arith.constant 0.797884583 : f32
    %34 = vector.broadcast %cst_16 : f32 to vector<64x128xf32>
    %35 = arith.mulf %34, %33 : vector<64x128xf32>
    %36 = math.tanh %35 : vector<64x128xf32>
    %cst_17 = arith.constant 1.000000e+00 : f32
    %37 = vector.broadcast %cst_17 : f32 to vector<64x128xf32>
    %38 = arith.addf %37, %36 : vector<64x128xf32>
    %cst_18 = arith.constant 5.000000e-01 : f32
    %39 = vector.broadcast %cst_18 : f32 to vector<64x128xf32>
    %40 = arith.mulf %39, %38 : vector<64x128xf32>
    %41 = arith.mulf %28, %40 : vector<64x128xf32>
    %c0_19 = arith.constant 0 : index
    %c0_20 = arith.constant 0 : index
    %c0_21 = arith.constant 0 : index
    %42 = vector.load %arg7[%c0_19, %c0_20, %c0_21] : memref<1x64x128xf32, #tpu.memory_space<vmem>>, vector<1x64x128xf32>
    %43 = vector.shape_cast %42 : vector<1x64x128xf32> to vector<64x128xf32>
    %44 = vector.shape_cast %41 : vector<64x128xf32> to vector<1x64x128xf32>
    tpu.vector_store %arg7[%c0_19, %c0_20, %c0_21], %44 {strides = array<i32>} : memref<1x64x128xf32, #tpu.memory_space<vmem>>, vector<1x64x128xf32>,
    return
  }
  func.func @transform_0(%arg0: i32, %arg1: i32) -> (i32, i32, i32) {
    %c0_i32 = arith.constant 0 : i32
    %c0_i32_0 = arith.constant 0 : i32
    return %arg0, %arg1, %c0_i32 : i32, i32, i32
  }
  func.func @transform_1(%arg0: i32, %arg1: i32) -> (i32, i32) {
    %c0_i32 = arith.constant 0 : i32
    %c0_i32_0 = arith.constant 0 : i32
    %c0_i32_1 = arith.constant 0 : i32
    return %c0_i32, %c0_i32_0 : i32, i32
  }
  func.func @transform_2(%arg0: i32, %arg1: i32) -> (i32, i32) {
    %c0_i32 = arith.constant 0 : i32
    %c0_i32_0 = arith.constant 0 : i32
    %c0_i32_1 = arith.constant 0 : i32
    return %c0_i32, %c0_i32_0 : i32, i32
  }
  func.func @transform_3(%arg0: i32, %arg1: i32) -> (i32, i32) {
    %c0_i32 = arith.constant 0 : i32
    %c0_i32_0 = arith.constant 0 : i32
    %c0_i32_1 = arith.constant 0 : i32
    return %c0_i32, %c0_i32_0 : i32, i32
  }
  func.func @transform_4(%arg0: i32, %arg1: i32) -> (i32, i32) {
    %c0_i32 = arith.constant 0 : i32
    %c0_i32_0 = arith.constant 0 : i32
    %c0_i32_1 = arith.constant 0 : i32
    return %c0_i32, %c0_i32_0 : i32, i32
  }
  func.func @transform_5(%arg0: i32, %arg1: i32) -> (i32, i32, i32) {
    %c0_i32 = arith.constant 0 : i32
    %c0_i32_0 = arith.constant 0 : i32
    return %arg0, %arg1, %c0_i32 : i32, i32, i32
  }
}

module attributes {stable_mosaic.version = 11 : i64} {
  func.func @_linear_bias_residual_kernel(%arg0: i32, %arg1: i32, %arg2: memref<1x64x128xf32, #tpu.memory_space<vmem>>, %arg3: memref<128x32xf32, #tpu.memory_space<vmem>>, %arg4: memref<1x32xf32, #tpu.memory_space<vmem>>, %arg5: memref<1x64x32xf32, #tpu.memory_space<vmem>>, %arg6: memref<1x64x32xf32, #tpu.memory_space<vmem>>) attributes {dimension_semantics = [#tpu.dimension_semantics<parallel>, #tpu.dimension_semantics<parallel>], iteration_bounds = array<i64: 2, 1>, scalar_prefetch = 0 : i64, scratch_operands = 0 : i64, tpu.core_type = #tpu.core_type<tc>, window_params = [{transform_indices = @transform_0, window_bounds = array<i64: 1, 64, 128>}, {pipeline_mode = #tpu.pipeline_mode<synchronous>, transform_indices = @transform_1, window_bounds = array<i64: 128, 32>}, {pipeline_mode = #tpu.pipeline_mode<synchronous>, transform_indices = @transform_2, window_bounds = array<i64: 1, 32>}, {transform_indices = @transform_3, window_bounds = array<i64: 1, 64, 32>}, {transform_indices = @transform_4, window_bounds = array<i64: 1, 64, 32>}]} {
    %c0 = arith.constant 0 : index
    %c0_0 = arith.constant 0 : index
    %c0_1 = arith.constant 0 : index
    %0 = vector.load %arg2[%c0, %c0_0, %c0_1] : memref<1x64x128xf32, #tpu.memory_space<vmem>>, vector<1x64x128xf32>
    %1 = vector.shape_cast %0 : vector<1x64x128xf32> to vector<64x128xf32>
    %c0_2 = arith.constant 0 : index
    %c0_3 = arith.constant 0 : index
    %2 = vector.load %arg3[%c0_2, %c0_3] : memref<128x32xf32, #tpu.memory_space<vmem>>, vector<128x32xf32>
    %cst = arith.constant dense<0.000000e+00> : vector<64x32xf32>
    %3 = tpu.matmul %1, %2, %cst {dimension_numbers = #tpu.dot_dimension_numbers<[1], [0], [0], [1], [0, 0, 1, 1], [], []>} : vector<64x128xf32>, vector<128x32xf32>, vector<64x32xf32> -> vector<64x32xf32>
    %c0_4 = arith.constant 0 : index
    %c0_5 = arith.constant 0 : index
    %4 = vector.load %arg4[%c0_4, %c0_5] : memref<1x32xf32, #tpu.memory_space<vmem>>, vector<1x32xf32>
    %5 = vector.broadcast %4 : vector<1x32xf32> to vector<64x32xf32>
    %6 = arith.addf %3, %5 : vector<64x32xf32>
    %c0_6 = arith.constant 0 : index
    %c0_7 = arith.constant 0 : index
    %c0_8 = arith.constant 0 : index
    %7 = vector.load %arg5[%c0_6, %c0_7, %c0_8] : memref<1x64x32xf32, #tpu.memory_space<vmem>>, vector<1x64x32xf32>
    %8 = vector.shape_cast %7 : vector<1x64x32xf32> to vector<64x32xf32>
    %9 = arith.addf %6, %8 : vector<64x32xf32>
    %c0_9 = arith.constant 0 : index
    %c0_10 = arith.constant 0 : index
    %c0_11 = arith.constant 0 : index
    %10 = vector.load %arg6[%c0_9, %c0_10, %c0_11] : memref<1x64x32xf32, #tpu.memory_space<vmem>>, vector<1x64x32xf32>
    %11 = vector.shape_cast %10 : vector<1x64x32xf32> to vector<64x32xf32>
    %12 = vector.shape_cast %9 : vector<64x32xf32> to vector<1x64x32xf32>
    tpu.vector_store %arg6[%c0_9, %c0_10, %c0_11], %12 {strides = array<i32>} : memref<1x64x32xf32, #tpu.memory_space<vmem>>, vector<1x64x32xf32>,
    return
  }
  func.func @transform_0(%arg0: i32, %arg1: i32) -> (i32, i32, i32) {
    %c0_i32 = arith.constant 0 : i32
    %c0_i32_0 = arith.constant 0 : i32
    return %arg0, %arg1, %c0_i32 : i32, i32, i32
  }
  func.func @transform_1(%arg0: i32, %arg1: i32) -> (i32, i32) {
    %c0_i32 = arith.constant 0 : i32
    %c0_i32_0 = arith.constant 0 : i32
    %c0_i32_1 = arith.constant 0 : i32
    return %c0_i32, %c0_i32_0 : i32, i32
  }
  func.func @transform_2(%arg0: i32, %arg1: i32) -> (i32, i32) {
    %c0_i32 = arith.constant 0 : i32
    %c0_i32_0 = arith.constant 0 : i32
    %c0_i32_1 = arith.constant 0 : i32
    return %c0_i32, %c0_i32_0 : i32, i32
  }
  func.func @transform_3(%arg0: i32, %arg1: i32) -> (i32, i32, i32) {
    %c0_i32 = arith.constant 0 : i32
    %c0_i32_0 = arith.constant 0 : i32
    return %arg0, %arg1, %c0_i32 : i32, i32, i32
  }
  func.func @transform_4(%arg0: i32, %arg1: i32) -> (i32, i32, i32) {
    %c0_i32 = arith.constant 0 : i32
    %c0_i32_0 = arith.constant 0 : i32
    return %arg0, %arg1, %c0_i32 : i32, i32, i32
  }
}

</mosaic_0001>

<llo_original>
// kernel: vision_transformer_block.5
$region0: #{vision_transformer_block.5}
  #allocation0 [shape = 'u32[]', space=smem, size = 0x4, offset = 0x4, fixed_abs, tag = 'smem constant byte address 0x4 - core index']
  #allocation1 [shape = 'u32[144,128]{1,0:T(1,128)}', space=vmem, size = 0x12000, scoped, tag = 'internal scratch']
  %s0 = inlined_call_operand.vmem [shape: f32[2,64,32], index: 0, kind: input, shape index: {}]
  %s1 = inlined_call_operand.vmem [shape: f32[1,32], index: 1, kind: input, shape index: {}]
  %s2 = inlined_call_operand.vmem [shape: f32[1,32], index: 2, kind: input, shape index: {}]
  %s3 = inlined_call_operand.vmem [shape: f32[32,96], index: 3, kind: input, shape index: {}]
  %s4 = inlined_call_operand.vmem [shape: f32[1,96], index: 4, kind: input, shape index: {}]
  %s5 = inlined_call_operand.vmem [shape: f32[2,64,96], index: 5, kind: output, shape index: {}]
  %s6 = sld [smem:[#allocation0]]
  $region53: #{vision_transformer_block.5} parent=0
    _
  %s8 = ssub.s32 1, %s6
  %s9 = scalar_select 0, %s8, %s6
  loop: start=0, step=1, limit=4
  $region2: #{vision_transformer_block.5} parent=0 // loop_pre_header
    _
  $region3: #{vision_transformer_block.5} parent=0 // loop_header
    %s11 = sphi 0, %s15
    %p12 = scmp.ge.s32.totalorder %s11, 4
    %s18 = sphi 0, %s30
    %s19 = sphi 0, %s26
    %s20 = sphi 0, %s18
    %s21 = sphi 0, %s19
    %s22 = sphi 0, %s20
    %s23 = sphi 0, %s21
    %s35 = sphi 0, %s37
    %s38 = sphi 0, %s35
    %s39 = sphi 0, %s38
    %s55 = sphi 0, %s39
    %s59 = sphi 0, %s59
    %s61 = sphi 0, %s59
    %s62 = sphi 0, %s61
    %s76 = sphi 0, %s62
    %s80 = sphi 0, %s80
    %s82 = sphi 0, %s80
    %s83 = sphi 0, %s82
    %s97 = sphi 0, %s83
    %s101 = sphi 0, %s101
    %s103 = sphi 0, %s101
    %s104 = sphi 0, %s103
    %s118 = sphi 0, %s104
    %s122 = sphi 0, %s122
    %s124 = sphi 0, %s122
    %s125 = sphi 0, %s124
    %s139 = sphi 0, %s125
    %s147 = sphi 0, %s149
    %s150 = sphi 0, %s147
    %s151 = sphi 0, %s150
    %s167 = sphi 0, %s151
  $region4: #{vision_transformer_block.5} parent=0 // loop_header_branch
    %14 = sbr.rel (%p12) target = $region8
  $region5: #{vision_transformer_block.5} parent=0 // loop_body
    %s16 = ssub.s32 %s11, 1
    %s17 = ssub.s32 %s11, 2
    %s24 = sadd.s32 1, %s19
    %p25 = scmp.ge.s32.totalorder %s24, 1
    %s26 = scalar_select %p25, 0, %s24
    %s27 = sadd.s32 1, %s18
    %s28 = scalar_select %p25, %s27, %s18
    %p29 = scmp.ge.s32.totalorder %s28, 2
    %s30 = scalar_select %p29, 0, %s28
    %s31 = ssub.s32 %s18, %s30
    %s32 = ssub.s32 %s19, %s26
    %s33 = sor.u32 %s31, %s32
    %p34 = scmp.eq.s32.totalorder %s33, 0
    %s36 = sadd.s32 %s35, 1
    %s37 = scalar_select %p34, %s35, %s36
    %p40 = pneg %p34
    %p41 = scmp.eq.s32.totalorder %s11, 1
    %p42 = por %p40, %p41
    %p43 = scmp.ne.s32.totalorder %s35, %s38
    %p44 = scmp.eq.s32.totalorder %s11, 0
    %p45 = por %p43, %p44
    %p46 = scmp.ne.s32.totalorder %s35, %s38
    %p47 = scmp.eq.s32.totalorder %s16, 1
    %p48 = por %p46, %p47
    %p49 = scmp.ne.s32.totalorder %s38, %s39
    %p50 = scmp.eq.s32.totalorder %s16, 0
    %p51 = por %p49, %p50
    %p52 = scmp.ne.s32.totalorder %s38, %s39
    %p53 = scmp.eq.s32.totalorder %s17, 1
    %p54 = por %p52, %p53
    %p56 = scmp.ne.s32.totalorder %s39, %s55
    %p57 = scmp.eq.s32.totalorder %s17, 0
    %p58 = por %p56, %p57
    %s60 = sadd.s32 %s59, 1
    %p63 = scmp.eq.s32.totalorder %s11, 1
    %p64 = scmp.ne.s32.totalorder %s59, %s61
    %p65 = scmp.eq.s32.totalorder %s11, 0
    %p66 = por %p64, %p65
    %p67 = scmp.ne.s32.totalorder %s59, %s61
    %p68 = scmp.eq.s32.totalorder %s16, 1
    %p69 = por %p67, %p68
    %p70 = scmp.ne.s32.totalorder %s61, %s62
    %p71 = scmp.eq.s32.totalorder %s16, 0
    %p72 = por %p70, %p71
    %p73 = scmp.ne.s32.totalorder %s61, %s62
    %p74 = scmp.eq.s32.totalorder %s17, 1
    %p75 = por %p73, %p74
    %p77 = scmp.ne.s32.totalorder %s62, %s76
    %p78 = scmp.eq.s32.totalorder %s17, 0
    %p79 = por %p77, %p78
    %s81 = sadd.s32 %s80, 1
    %p84 = scmp.eq.s32.totalorder %s11, 1
    %p85 = scmp.ne.s32.totalorder %s80, %s82
    %p86 = scmp.eq.s32.totalorder %s11, 0
    %p87 = por %p85, %p86
    %p88 = scmp.ne.s32.totalorder %s80, %s82
    %p89 = scmp.eq.s32.totalorder %s16, 1
    %p90 = por %p88, %p89
    %p91 = scmp.ne.s32.totalorder %s82, %s83
    %p92 = scmp.eq.s32.totalorder %s16, 0
    %p93 = por %p91, %p92
    %p94 = scmp.ne.s32.totalorder %s82, %s83
    %p95 = scmp.eq.s32.totalorder %s17, 1
    %p96 = por %p94, %p95
    %p98 = scmp.ne.s32.totalorder %s83, %s97
    %p99 = scmp.eq.s32.totalorder %s17, 0
    %p100 = por %p98, %p99
    %s102 = sadd.s32 %s101, 1
    %p105 = scmp.eq.s32.totalorder %s11, 1
    %p106 = scmp.ne.s32.totalorder %s101, %s103
    %p107 = scmp.eq.s32.totalorder %s11, 0
    %p108 = por %p106, %p107
    %p109 = scmp.ne.s32.totalorder %s101, %s103
    %p110 = scmp.eq.s32.totalorder %s16, 1
    %p111 = por %p109, %p110
    %p112 = scmp.ne.s32.totalorder %s103, %s104
    %p113 = scmp.eq.s32.totalorder %s16, 0
    %p114 = por %p112, %p113
    %p115 = scmp.ne.s32.totalorder %s103, %s104
    %p116 = scmp.eq.s32.totalorder %s17, 1
    %p117 = por %p115, %p116
    %p119 = scmp.ne.s32.totalorder %s104, %s118
    %p120 = scmp.eq.s32.totalorder %s17, 0
    %p121 = por %p119, %p120
    %s123 = sadd.s32 %s122, 1
    %p126 = scmp.eq.s32.totalorder %s11, 1
    %p127 = scmp.ne.s32.totalorder %s122, %s124
    %p128 = scmp.eq.s32.totalorder %s11, 0
    %p129 = por %p127, %p128
    %p130 = scmp.ne.s32.totalorder %s122, %s124
    %p131 = scmp.eq.s32.totalorder %s16, 1
    %p132 = por %p130, %p131
    %p133 = scmp.ne.s32.totalorder %s124, %s125
    %p134 = scmp.eq.s32.totalorder %s16, 0
    %p135 = por %p133, %p134
    %p136 = scmp.ne.s32.totalorder %s124, %s125
    %p137 = scmp.eq.s32.totalorder %s17, 1
    %p138 = por %p136, %p137
    %p140 = scmp.ne.s32.totalorder %s125, %s139
    %p141 = scmp.eq.s32.totalorder %s17, 0
    %p142 = por %p140, %p141
    %s143 = ssub.s32 %s18, %s30
    %s144 = ssub.s32 %s19, %s26
    %s145 = sor.u32 %s143, %s144
    %p146 = scmp.eq.s32.totalorder %s145, 0
    %s148 = sadd.s32 %s147, 1
    %s149 = scalar_select %p146, %s147, %s148
    %p152 = pneg %p146
    %p153 = scmp.eq.s32.totalorder %s11, 1
    %p154 = por %p152, %p153
    %p155 = scmp.ne.s32.totalorder %s147, %s150
    %p156 = scmp.eq.s32.totalorder %s11, 0
    %p157 = por %p155, %p156
    %p158 = scmp.ne.s32.totalorder %s147, %s150
    %p159 = scmp.eq.s32.totalorder %s16, 1
    %p160 = por %p158, %p159
    %p161 = scmp.ne.s32.totalorder %s150, %s151
    %p162 = scmp.eq.s32.totalorder %s16, 0
    %p163 = por %p161, %p162
    %p164 = scmp.ne.s32.totalorder %s150, %s151
    %p165 = scmp.eq.s32.totalorder %s17, 1
    %p166 = por %p164, %p165
    %p168 = scmp.ne.s32.totalorder %s151, %s167
    %p169 = scmp.eq.s32.totalorder %s17, 0
    %p170 = por %p168, %p169
    %p171 = scmp.le.s32.totalorder 1, %s11
    %p172 = scmp.lt.s32.totalorder %s11, 3
    %p173 = pnand %p171, %p172
    %p174 = pneg %p173
    // Predicated region
    $region9: #{vision_transformer_block.5} parent=5 // pred_check
      _
    $region10: #{vision_transformer_block.5} parent=5 // pred_check_branch
      %176 = sbr.rel (%p173) target = $region12
    $region11: #{vision_transformer_block.5} parent=5 // pred_region
      %s177 = ssub.s32 %s11, 1
      // Predicated region
      $region13: #{vision_transformer_block.5} parent=11 // pred_check
        %p178 = pneg %p72
      $region14: #{vision_transformer_block.5} parent=11 // pred_check_branch
        %180 = sbr.rel (%p178) target = $region16
      $region15: #{vision_transformer_block.5} parent=11 // pred_region
        _
      $region16: #{vision_transformer_block.5} parent=11 // pred_fallthru
        _
      // Predicated region
      $region17: #{vision_transformer_block.5} parent=11 // pred_check
        %p181 = pneg %p93
      $region18: #{vision_transformer_block.5} parent=11 // pred_check_branch
        %183 = sbr.rel (%p181) target = $region20
      $region19: #{vision_transformer_block.5} parent=11 // pred_region
        _
      $region20: #{vision_transformer_block.5} parent=11 // pred_fallthru
        _
      // Predicated region
      $region21: #{vision_transformer_block.5} parent=11 // pred_check
        %p184 = pneg %p114
      $region22: #{vision_transformer_block.5} parent=11 // pred_check_branch
        %186 = sbr.rel (%p184) target = $region24
      $region23: #{vision_transformer_block.5} parent=11 // pred_region
        _
      $region24: #{vision_transformer_block.5} parent=11 // pred_fallthru
        _
      // Predicated region
      $region25: #{vision_transformer_block.5} parent=11 // pred_check
        %p187 = pneg %p135
      $region26: #{vision_transformer_block.5} parent=11 // pred_check_branch
        %189 = sbr.rel (%p187) target = $region28
      $region27: #{vision_transformer_block.5} parent=11 // pred_region
        _
      $region28: #{vision_transformer_block.5} parent=11 // pred_fallthru
        _
    $region12: #{vision_transformer_block.5} parent=5 // pred_fallthru
      _
    %p190 = scmp.lt.s32.totalorder %s11, 2
    // Predicated region
    $region29: #{vision_transformer_block.5} parent=5 // pred_check
      %p191 = pneg %p190
    $region30: #{vision_transformer_block.5} parent=5 // pred_check_branch
      %193 = sbr.rel (%p191) target = $region32
    $region31: #{vision_transformer_block.5} parent=5 // pred_region
      // Predicated region
      $region33: #{vision_transformer_block.5} parent=31 // pred_check
        %p194 = pneg %p45
      $region34: #{vision_transformer_block.5} parent=31 // pred_check_branch
        %196 = sbr.rel (%p194) target = $region36
      $region35: #{vision_transformer_block.5} parent=31 // pred_region
        %s197 = smul.u32 8, %s19
        %p198 = scmp.lt.s32.totalorder %s18, 1
        %s199 = scalar_select %p198, %s18, 1
        %p200 = scmp.lt.s32.totalorder %s197, 7
        %s201 = scalar_select %p200, %s197, 7
        %s202 = smul.addr %s199, 8
        %s203 = sadd.s32 %s201, %s202
        %s204 = smul.addr %s203, 8
        %s205 = scalar_lea.vmem %s0, %s204
        %s206 = smul.u32 8, %s19
      $region36: #{vision_transformer_block.5} parent=31 // pred_fallthru
        _
    $region32: #{vision_transformer_block.5} parent=5 // pred_fallthru
      _
    %p207 = scmp.le.s32.totalorder 1, %s11
    %p208 = scmp.lt.s32.totalorder %s11, 3
    %p209 = pnand %p207, %p208
    %p210 = pneg %p209
    // Predicated region
    $region37: #{vision_transformer_block.5} parent=5 // pred_check
      _
    $region38: #{vision_transformer_block.5} parent=5 // pred_check_branch
      %212 = sbr.rel (%p209) target = $region40
    $region39: #{vision_transformer_block.5} parent=5 // pred_region
      %s213 = ssub.s32 %s11, 1
      %s214 = smul.u32 8, %s21
      %p215 = scmp.lt.s32.totalorder %s20, 1
      %s216 = scalar_select %p215, %s20, 1
      %p217 = scmp.lt.s32.totalorder %s214, 7
      %s218 = scalar_select %p217, %s214, 7
      %s219 = smul.addr %s216, 8
      %s220 = sadd.s32 %s218, %s219
      %s221 = smul.addr %s220, 8
      %s222 = scalar_lea.vmem %s0, %s221
      %p223 = pneg %p51
      %p224 = pneg %p48
      %p225 = pneg %p72
      %p226 = pneg %p69
      %p227 = pneg %p93
      %p228 = pneg %p90
      %p229 = pneg %p114
      %p230 = pneg %p111
      %p231 = pneg %p135
      %p232 = pneg %p132
      %p233 = pneg %p163
      %p234 = pneg %p160
      %s235 = smul.u32 8, %s21
      %p236 = scmp.lt.s32.totalorder %s20, 1
      %s237 = scalar_select %p236, %s20, 1
      %p238 = scmp.lt.s32.totalorder %s235, 7
      %s239 = scalar_select %p238, %s235, 7
      %s240 = smul.addr %s237, 8
      %s241 = sadd.s32 %s239, %s240
      %s242 = smul.addr %s241, 8
      %s243 = scalar_lea.vmem %s5, %s242
      %s244 = smul.u32 8, %s21
      %p245 = scmp.lt.s32.totalorder %s20, 1
      %s246 = scalar_select %p245, %s20, 1
      %p247 = scmp.lt.s32.totalorder %s244, 7
      %s248 = scalar_select %p247, %s244, 7
      %s249 = smul.addr %s246, 8
      %s250 = sadd.s32 %s248, %s249
      %s251 = smul.addr %s250, 8
      %s252 = scalar_lea.vmem %s0, %s251
      %s253 = smul.u32 8, %s21
      %s254 = smul.u32 8, %s21
      %p255 = scmp.lt.s32.totalorder %s20, 1
      %s256 = scalar_select %p255, %s20, 1
      %p257 = scmp.lt.s32.totalorder %s254, 7
      %s258 = scalar_select %p257, %s254, 7
      %s259 = smul.addr %s256, 8
      %s260 = sadd.s32 %s258, %s259
      %s261 = smul.addr %s260, 8
      %s262 = scalar_lea.vmem %s5, %s261
      %s263 = smul.u32 8, %s21
      %v264 = vld [vmem:[%s252] sm:$0xff]
      %v265 = vld [vmem:[%s252 + $0x8] sm:$0xff]
      %v266 = vld [vmem:[%s252 + $0x10] sm:$0xff]
      %v267 = vld [vmem:[%s252 + $0x18] sm:$0xff]
      %v268 = vld [vmem:[%s252 + $0x20] sm:$0xff]
      %v269 = vld [vmem:[%s252 + $0x28] sm:$0xff]
      %v270 = vld [vmem:[%s252 + $0x30] sm:$0xff]
      %v271 = vld [vmem:[%s252 + $0x38] sm:$0xff]
      %vm272 = vcmask 261120
      %v273 = vsel %vm272, %v264, 0.0
      %274 = vadd.xlane.f32.xlu0 %v273
      %v275 = vpop.xlane.xlu0 %274
      %v276 = vsel %vm272, %v265, 0.0
      %277 = vadd.xlane.f32.xlu0 %v276
      %v278 = vpop.xlane.xlu0 %277
      %v279 = vsel %vm272, %v266, 0.0
      %280 = vadd.xlane.f32.xlu0 %v279
      %v281 = vpop.xlane.xlu0 %280
      %v282 = vsel %vm272, %v267, 0.0
      %283 = vadd.xlane.f32.xlu0 %v282
      %v284 = vpop.xlane.xlu0 %283
      %v285 = vsel %vm272, %v268, 0.0
      %286 = vadd.xlane.f32.xlu0 %v285
      %v287 = vpop.xlane.xlu0 %286
      %v288 = vsel %vm272, %v269, 0.0
      %289 = vadd.xlane.f32.xlu0 %v288
      %v290 = vpop.xlane.xlu0 %289
      %v291 = vsel %vm272, %v270, 0.0
      %292 = vadd.xlane.f32.xlu0 %v291
      %v293 = vpop.xlane.xlu0 %292
      %v294 = vsel %vm272, %v271, 0.0
      %295 = vadd.xlane.f32.xlu0 %v294
      %v296 = vpop.xlane.xlu0 %295
      %v297 = vmul.f32 %v275, 0.03125
      %v298 = vmul.f32 %v278, 0.03125
      %v299 = vmul.f32 %v281, 0.03125
      %v300 = vmul.f32 %v284, 0.03125
      %v301 = vmul.f32 %v287, 0.03125
      %v302 = vmul.f32 %v290, 0.03125
      %v303 = vmul.f32 %v293, 0.03125
      %v304 = vmul.f32 %v296, 0.03125
      %v305 = vsub.f32 %v264, %v297
      %v306 = vsub.f32 %v265, %v298
      %v307 = vsub.f32 %v266, %v299
      %v308 = vsub.f32 %v267, %v300
      %v309 = vsub.f32 %v268, %v301
      %v310 = vsub.f32 %v269, %v302
      %v311 = vsub.f32 %v270, %v303
      %v312 = vsub.f32 %v271, %v304
      %v313 = vmul.f32 %v305, %v305
      %v314 = vmul.f32 %v306, %v306
      %v315 = vmul.f32 %v307, %v307
      %v316 = vmul.f32 %v308, %v308
      %v317 = vmul.f32 %v309, %v309
      %v318 = vmul.f32 %v310, %v310
      %v319 = vmul.f32 %v311, %v311
      %v320 = vmul.f32 %v312, %v312
      %v321 = vsel %vm272, %v313, 0.0
      %322 = vadd.xlane.f32.xlu0 %v321
      %v323 = vpop.xlane.xlu0 %322
      %v324 = vsel %vm272, %v314, 0.0
      %325 = vadd.xlane.f32.xlu0 %v324
      %v326 = vpop.xlane.xlu0 %325
      %v327 = vsel %vm272, %v315, 0.0
      %328 = vadd.xlane.f32.xlu0 %v327
      %v329 = vpop.xlane.xlu0 %328
      %v330 = vsel %vm272, %v316, 0.0
      %331 = vadd.xlane.f32.xlu0 %v330
      %v332 = vpop.xlane.xlu0 %331
      %v333 = vsel %vm272, %v317, 0.0
      %334 = vadd.xlane.f32.xlu0 %v333
      %v335 = vpop.xlane.xlu0 %334
      %v336 = vsel %vm272, %v318, 0.0
      %337 = vadd.xlane.f32.xlu0 %v336
      %v338 = vpop.xlane.xlu0 %337
      %v339 = vsel %vm272, %v319, 0.0
      %340 = vadd.xlane.f32.xlu0 %v339
      %v341 = vpop.xlane.xlu0 %340
      %v342 = vsel %vm272, %v320, 0.0
      %343 = vadd.xlane.f32.xlu0 %v342
      %v344 = vpop.xlane.xlu0 %343
      %v345 = vmul.f32 %v323, 0.03125
      %v346 = vmul.f32 %v326, 0.03125
      %v347 = vmul.f32 %v329, 0.03125
      %v348 = vmul.f32 %v332, 0.03125
      %v349 = vmul.f32 %v335, 0.03125
      %v350 = vmul.f32 %v338, 0.03125
      %v351 = vmul.f32 %v341, 0.03125
      %v352 = vmul.f32 %v344, 0.03125
      %v353 = vadd.f32 %v345, 1e-05
      %v354 = vadd.f32 %v346, 1e-05
      %v355 = vadd.f32 %v347, 1e-05
      %v356 = vadd.f32 %v348, 1e-05
      %v357 = vadd.f32 %v349, 1e-05
      %v358 = vadd.f32 %v350, 1e-05
      %v359 = vadd.f32 %v351, 1e-05
      %v360 = vadd.f32 %v352, 1e-05
      %v361 = vrsqrt.pop %v353
      %v362 = vrsqrt.pop %v354
      %v363 = vrsqrt.pop %v355
      %v364 = vrsqrt.pop %v356
      %v365 = vrsqrt.pop %v357
      %v366 = vrsqrt.pop %v358
      %v367 = vrsqrt.pop %v359
      %v368 = vrsqrt.pop %v360
      %v369 = vmul.f32 %v305, %v361
      %v370 = vmul.f32 %v306, %v362
      %v371 = vmul.f32 %v307, %v363
      %v372 = vmul.f32 %v308, %v364
      %v373 = vmul.f32 %v309, %v365
      %v374 = vmul.f32 %v310, %v366
      %v375 = vmul.f32 %v311, %v367
      %v376 = vmul.f32 %v312, %v368
      %v377 = vld [vmem:[%s1] sm:$0x1]
      %v379 = vlaneseq
      %v380 = vshrl.u32 %v379, 7
      %v381 = vsub.s32 0, %v380
      %v382 = vrot.slane %v377, %v381
      %v384 = vmul.f32 %v369, %v382
      %v385 = vmul.f32 %v370, %v382
      %v386 = vmul.f32 %v371, %v382
      %v387 = vmul.f32 %v372, %v382
      %v388 = vmul.f32 %v373, %v382
      %v389 = vmul.f32 %v374, %v382
      %v390 = vmul.f32 %v375, %v382
      %v391 = vmul.f32 %v376, %v382
      %v392 = vld [vmem:[%s2] sm:$0x1]
      %v394 = vlaneseq
      %v395 = vshrl.u32 %v394, 7
      %v396 = vsub.s32 0, %v395
      %v397 = vrot.slane %v392, %v396
      %v399 = vadd.f32 %v384, %v397
      %v400 = vadd.f32 %v385, %v397
      %v401 = vadd.f32 %v386, %v397
      %v402 = vadd.f32 %v387, %v397
      %v403 = vadd.f32 %v388, %v397
      %v404 = vadd.f32 %v389, %v397
      %v405 = vadd.f32 %v390, %v397
      %v406 = vadd.f32 %v391, %v397
      %v407 = vld [vmem:[%s3] sm:$0xff]
      %v408 = vld [vmem:[%s3 + $0x8] sm:$0xff]
      %v409 = vld [vmem:[%s3 + $0x10] sm:$0xff]
      %v410 = vld [vmem:[%s3 + $0x18] sm:$0xff]
      %v411 = vld [vmem:[%s4] sm:$0x1]
      %v413 = vlaneseq
      %v414 = vshrl.u32 %v413, 7
      %v415 = vsub.s32 0, %v414
      %v416 = vrot.slane %v411, %v415
      %v419 = vsel %vm272, %v399, 0
      %v422 = vsel %vm272, %v400, 0
      %v425 = vsel %vm272, %v401, 0
      %v428 = vsel %vm272, %v402, 0
      %v431 = vsel %vm272, %v403, 0
      %v434 = vsel %vm272, %v404, 0
      %v437 = vsel %vm272, %v405, 0
      %v440 = vsel %vm272, %v406, 0
      %442 = vmatprep.subr.mxu0 0.0
      %443 = vmatpush1.msra.mxu0 0.0
      %444 = vmatprep.subr.mxu0 0.0
      %445 = vmatpush1.msra.mxu0 0.0
      %446 = vmatprep.subr.mxu0 0.0
      %447 = vmatpush1.msra.mxu0 0.0
      %448 = vmatprep.subr.mxu0 0.0
      %449 = vmatpush1.msra.mxu0 0.0
      %450 = vmatprep.subr.mxu0 0.0
      %451 = vmatpush1.msra.mxu0 0.0
      %452 = vmatprep.subr.mxu0 0.0
      %453 = vmatpush1.msra.mxu0 0.0
      %454 = vmatprep.subr.mxu0 0.0
      %455 = vmatpush1.msra.mxu0 0.0
      %456 = vmatprep.subr.mxu0 0.0
      %457 = vmatpush1.msra.mxu0 0.0
      %458 = vmatprep.subr.mxu0 0.0
      %459 = vmatpush1.msra.mxu0 0.0
      %460 = vmatprep.subr.mxu0 0.0
      %461 = vmatpush1.msra.mxu0 0.0
      %462 = vmatprep.subr.mxu0 0.0
      %463 = vmatpush1.msra.mxu0 0.0
      %464 = vmatprep.subr.mxu0 0.0
      %465 = vmatpush1.msra.mxu0 0.0
      %466 = vmatprep.subr.mxu0 0.0
      %467 = vmatpush1.msra.mxu0 %v410
      %468 = vmatprep.subr.mxu0 0.0
      %469 = vmatpush1.msra.mxu0 %v409
      %470 = vmatprep.subr.mxu0 0.0
      %471 = vmatpush1.msra.mxu0 %v408
      %472 = vmatprep.subr.mxu0 0.0
      %473 = vmatpush1.msra.mxu0 %v407
      %474 = vmatprep.subr.mxu0 0.0
      %475 = vmatpush2.msra.mxu0 0.0
      %476 = vmatprep.subr.mxu0 0.0
      %477 = vmatpush2.msra.mxu0 0.0
      %478 = vmatprep.subr.mxu0 0.0
      %479 = vmatpush2.msra.mxu0 0.0
      %480 = vmatprep.subr.mxu0 0.0
      %481 = vmatpush2.msra.mxu0 0.0
      %482 = vmatprep.subr.mxu0 0.0
      %483 = vmatpush2.msra.mxu0 0.0
      %484 = vmatprep.subr.mxu0 0.0
      %485 = vmatpush2.msra.mxu0 0.0
      %486 = vmatprep.subr.mxu0 0.0
      %487 = vmatpush2.msra.mxu0 0.0
      %488 = vmatprep.subr.mxu0 0.0
      %489 = vmatpush2.msra.mxu0 0.0
      %490 = vmatprep.subr.mxu0 0.0
      %491 = vmatpush2.msra.mxu0 0.0
      %492 = vmatprep.subr.mxu0 0.0
      %493 = vmatpush2.msra.mxu0 0.0
      %494 = vmatprep.subr.mxu0 0.0
      %495 = vmatpush2.msra.mxu0 0.0
      %496 = vmatprep.subr.mxu0 0.0
      %497 = vmatpush2.msra.mxu0 0.0
      %498 = vmatprep.subr.mxu0 0.0
      %499 = vmatpush2.msra.mxu0 0.0
      %500 = vmatprep.subr.mxu0 0.0
      %501 = vmatpush2.msra.mxu0 0.0
      %502 = vmatprep.subr.mxu0 0.0
      %503 = vmatpush2.msra.mxu0 0.0
      %504 = vmatprep.subr.mxu0 0.0
      %505 = vmatpush2.msra.mxu0 0.0
      %506 = vmatprep.mubr.f32.mxu0 0.0
      %507 = vmatmul.mubr.f32.gmra.mxu0 %v419
      %v508 = vpop.f32.mrf.mxu0
      %v509 = vadd.f32 %v416, %v508
      %v510 = vpop.f32.mrf.mxu0
      %511 = vmatprep.mubr.f32.mxu0 0.0
      %512 = vmatmul.mubr.f32.gmra.mxu0 %v422
      %v513 = vpop.f32.mrf.mxu0
      %v514 = vadd.f32 %v416, %v513
      %v515 = vpop.f32.mrf.mxu0
      %516 = vmatprep.mubr.f32.mxu0 0.0
      %517 = vmatmul.mubr.f32.gmra.mxu0 %v425
      %v518 = vpop.f32.mrf.mxu0
      %v519 = vadd.f32 %v416, %v518
      %v520 = vpop.f32.mrf.mxu0
      %521 = vmatprep.mubr.f32.mxu0 0.0
      %522 = vmatmul.mubr.f32.gmra.mxu0 %v428
      %v523 = vpop.f32.mrf.mxu0
      %v524 = vadd.f32 %v416, %v523
      %v525 = vpop.f32.mrf.mxu0
      %526 = vmatprep.mubr.f32.mxu0 0.0
      %527 = vmatmul.mubr.f32.gmra.mxu0 %v431
      %v528 = vpop.f32.mrf.mxu0
      %v529 = vadd.f32 %v416, %v528
      %v530 = vpop.f32.mrf.mxu0
      %531 = vmatprep.mubr.f32.mxu0 0.0
      %532 = vmatmul.mubr.f32.gmra.mxu0 %v434
      %v533 = vpop.f32.mrf.mxu0
      %v534 = vadd.f32 %v416, %v533
      %v535 = vpop.f32.mrf.mxu0
      %536 = vmatprep.mubr.f32.mxu0 0.0
      %537 = vmatmul.mubr.f32.gmra.mxu0 %v437
      %v538 = vpop.f32.mrf.mxu0
      %v539 = vadd.f32 %v416, %v538
      %v540 = vpop.f32.mrf.mxu0
      %541 = vmatprep.mubr.f32.mxu0 0.0
      %542 = vmatmul.mubr.f32.gmra.mxu0 %v440
      %v543 = vpop.f32.mrf.mxu0
      %v544 = vadd.f32 %v416, %v543
      %v545 = vpop.f32.mrf.mxu0
      %546 = vdwg.mxu0
      %vm547 = vcmask 785408
      %548 = vst.msk [vmem:[%s262] sm:$0xff] %vm547, %v509
      %549 = vst.msk [vmem:[%s262 + $0x8] sm:$0xff] %vm547, %v514
      %550 = vst.msk [vmem:[%s262 + $0x10] sm:$0xff] %vm547, %v519
      %551 = vst.msk [vmem:[%s262 + $0x18] sm:$0xff] %vm547, %v524
      %552 = vst.msk [vmem:[%s262 + $0x20] sm:$0xff] %vm547, %v529
      %553 = vst.msk [vmem:[%s262 + $0x28] sm:$0xff] %vm547, %v534
      %554 = vst.msk [vmem:[%s262 + $0x30] sm:$0xff] %vm547, %v539
      %555 = vst.msk [vmem:[%s262 + $0x38] sm:$0xff] %vm547, %v544
      %s556 = smul.u32 8, %s21
      %p557 = scmp.lt.s32.totalorder %s20, 1
      %s558 = scalar_select %p557, %s20, 1
      %p559 = scmp.lt.s32.totalorder %s556, 7
      %s560 = scalar_select %p559, %s556, 7
      %s561 = smul.addr %s558, 8
      %s562 = sadd.s32 %s560, %s561
      %s563 = smul.addr %s562, 8
      %s564 = scalar_lea.vmem %s5, %s563
      // Predicated region
      $region41: #{vision_transformer_block.5} parent=39 // pred_check
        %p565 = pneg %p160
      $region42: #{vision_transformer_block.5} parent=39 // pred_check_branch
        %567 = sbr.rel (%p565) target = $region44
      $region43: #{vision_transformer_block.5} parent=39 // pred_region
        %s568 = smul.u32 8, %s21
      $region44: #{vision_transformer_block.5} parent=39 // pred_fallthru
        _
    $region40: #{vision_transformer_block.5} parent=5 // pred_fallthru
      _
    %p569 = scmp.le.s32.totalorder 2, %s11
    // Predicated region
    $region45: #{vision_transformer_block.5} parent=5 // pred_check
      %p570 = pneg %p569
    $region46: #{vision_transformer_block.5} parent=5 // pred_check_branch
      %572 = sbr.rel (%p570) target = $region48
    $region47: #{vision_transformer_block.5} parent=5 // pred_region
      %s573 = ssub.s32 %s11, 2
      // Predicated region
      $region49: #{vision_transformer_block.5} parent=47 // pred_check
        %p574 = pneg %p166
      $region50: #{vision_transformer_block.5} parent=47 // pred_check_branch
        %576 = sbr.rel (%p574) target = $region52
      $region51: #{vision_transformer_block.5} parent=47 // pred_region
        %s577 = smul.u32 8, %s23
        %p578 = scmp.lt.s32.totalorder %s22, 1
        %s579 = scalar_select %p578, %s22, 1
        %p580 = scmp.lt.s32.totalorder %s577, 7
        %s581 = scalar_select %p580, %s577, 7
        %s582 = smul.addr %s579, 8
        %s583 = sadd.s32 %s581, %s582
        %s584 = smul.addr %s583, 8
        %s585 = scalar_lea.vmem %s5, %s584
      $region52: #{vision_transformer_block.5} parent=47 // pred_fallthru
        _
    $region48: #{vision_transformer_block.5} parent=5 // pred_fallthru
      _
  $region6: #{vision_transformer_block.5} parent=0 // loop_footer
    %s15 = sadd.s32 1, %s11
  $region7: #{vision_transformer_block.5} parent=0 // loop_footer_branch
    %10 = sbr.rel target = $region3
  $region8: #{vision_transformer_block.5} parent=0 // loop_exit
    _

// kernel: vision_transformer_block.7
$region0: #{vision_transformer_block.7}
  #allocation0 [shape = 'u32[]', space=smem, size = 0x4, offset = 0x4, fixed_abs, tag = 'smem constant byte address 0x4 - core index']
  #allocation1 [shape = 'u32[144,128]{1,0:T(1,128)}', space=vmem, size = 0x12000, scoped, tag = 'internal scratch']
  %s0 = inlined_call_operand.vmem [shape: f32[2,64,32], index: 0, kind: input, shape index: {}]
  %s1 = inlined_call_operand.vmem [shape: f32[32,32], index: 1, kind: input, shape index: {}]
  %s2 = inlined_call_operand.vmem [shape: f32[1,32], index: 2, kind: input, shape index: {}]
  %s3 = inlined_call_operand.vmem [shape: f32[2,64,32], index: 3, kind: input, shape index: {}]
  %s4 = inlined_call_operand.vmem [shape: f32[2,64,32], index: 4, kind: output, shape index: {}]
  %s5 = sld [smem:[#allocation0]]
  $region49: #{vision_transformer_block.7} parent=0
    _
  %s7 = ssub.s32 1, %s5
  %s8 = scalar_select 0, %s7, %s5
  loop: start=0, step=1, limit=4
  $region2: #{vision_transformer_block.7} parent=0 // loop_pre_header
    _
  $region3: #{vision_transformer_block.7} parent=0 // loop_header
    %s10 = sphi 0, %s14
    %p11 = scmp.ge.s32.totalorder %s10, 4
    %s17 = sphi 0, %s29
    %s18 = sphi 0, %s25
    %s19 = sphi 0, %s17
    %s20 = sphi 0, %s18
    %s21 = sphi 0, %s19
    %s22 = sphi 0, %s20
    %s34 = sphi 0, %s36
    %s37 = sphi 0, %s34
    %s38 = sphi 0, %s37
    %s54 = sphi 0, %s38
    %s58 = sphi 0, %s58
    %s60 = sphi 0, %s58
    %s61 = sphi 0, %s60
    %s75 = sphi 0, %s61
    %s79 = sphi 0, %s79
    %s81 = sphi 0, %s79
    %s82 = sphi 0, %s81
    %s96 = sphi 0, %s82
    %s104 = sphi 0, %s106
    %s107 = sphi 0, %s104
    %s108 = sphi 0, %s107
    %s124 = sphi 0, %s108
    %s132 = sphi 0, %s134
    %s135 = sphi 0, %s132
    %s136 = sphi 0, %s135
    %s152 = sphi 0, %s136
  $region4: #{vision_transformer_block.7} parent=0 // loop_header_branch
    %13 = sbr.rel (%p11) target = $region8
  $region5: #{vision_transformer_block.7} parent=0 // loop_body
    %s15 = ssub.s32 %s10, 1
    %s16 = ssub.s32 %s10, 2
    %s23 = sadd.s32 1, %s18
    %p24 = scmp.ge.s32.totalorder %s23, 1
    %s25 = scalar_select %p24, 0, %s23
    %s26 = sadd.s32 1, %s17
    %s27 = scalar_select %p24, %s26, %s17
    %p28 = scmp.ge.s32.totalorder %s27, 2
    %s29 = scalar_select %p28, 0, %s27
    %s30 = ssub.s32 %s17, %s29
    %s31 = ssub.s32 %s18, %s25
    %s32 = sor.u32 %s30, %s31
    %p33 = scmp.eq.s32.totalorder %s32, 0
    %s35 = sadd.s32 %s34, 1
    %s36 = scalar_select %p33, %s34, %s35
    %p39 = pneg %p33
    %p40 = scmp.eq.s32.totalorder %s10, 1
    %p41 = por %p39, %p40
    %p42 = scmp.ne.s32.totalorder %s34, %s37
    %p43 = scmp.eq.s32.totalorder %s10, 0
    %p44 = por %p42, %p43
    %p45 = scmp.ne.s32.totalorder %s34, %s37
    %p46 = scmp.eq.s32.totalorder %s15, 1
    %p47 = por %p45, %p46
    %p48 = scmp.ne.s32.totalorder %s37, %s38
    %p49 = scmp.eq.s32.totalorder %s15, 0
    %p50 = por %p48, %p49
    %p51 = scmp.ne.s32.totalorder %s37, %s38
    %p52 = scmp.eq.s32.totalorder %s16, 1
    %p53 = por %p51, %p52
    %p55 = scmp.ne.s32.totalorder %s38, %s54
    %p56 = scmp.eq.s32.totalorder %s16, 0
    %p57 = por %p55, %p56
    %s59 = sadd.s32 %s58, 1
    %p62 = scmp.eq.s32.totalorder %s10, 1
    %p63 = scmp.ne.s32.totalorder %s58, %s60
    %p64 = scmp.eq.s32.totalorder %s10, 0
    %p65 = por %p63, %p64
    %p66 = scmp.ne.s32.totalorder %s58, %s60
    %p67 = scmp.eq.s32.totalorder %s15, 1
    %p68 = por %p66, %p67
    %p69 = scmp.ne.s32.totalorder %s60, %s61
    %p70 = scmp.eq.s32.totalorder %s15, 0
    %p71 = por %p69, %p70
    %p72 = scmp.ne.s32.totalorder %s60, %s61
    %p73 = scmp.eq.s32.totalorder %s16, 1
    %p74 = por %p72, %p73
    %p76 = scmp.ne.s32.totalorder %s61, %s75
    %p77 = scmp.eq.s32.totalorder %s16, 0
    %p78 = por %p76, %p77
    %s80 = sadd.s32 %s79, 1
    %p83 = scmp.eq.s32.totalorder %s10, 1
    %p84 = scmp.ne.s32.totalorder %s79, %s81
    %p85 = scmp.eq.s32.totalorder %s10, 0
    %p86 = por %p84, %p85
    %p87 = scmp.ne.s32.totalorder %s79, %s81
    %p88 = scmp.eq.s32.totalorder %s15, 1
    %p89 = por %p87, %p88
    %p90 = scmp.ne.s32.totalorder %s81, %s82
    %p91 = scmp.eq.s32.totalorder %s15, 0
    %p92 = por %p90, %p91
    %p93 = scmp.ne.s32.totalorder %s81, %s82
    %p94 = scmp.eq.s32.totalorder %s16, 1
    %p95 = por %p93, %p94
    %p97 = scmp.ne.s32.totalorder %s82, %s96
    %p98 = scmp.eq.s32.totalorder %s16, 0
    %p99 = por %p97, %p98
    %s100 = ssub.s32 %s17, %s29
    %s101 = ssub.s32 %s18, %s25
    %s102 = sor.u32 %s100, %s101
    %p103 = scmp.eq.s32.totalorder %s102, 0
    %s105 = sadd.s32 %s104, 1
    %s106 = scalar_select %p103, %s104, %s105
    %p109 = pneg %p103
    %p110 = scmp.eq.s32.totalorder %s10, 1
    %p111 = por %p109, %p110
    %p112 = scmp.ne.s32.totalorder %s104, %s107
    %p113 = scmp.eq.s32.totalorder %s10, 0
    %p114 = por %p112, %p113
    %p115 = scmp.ne.s32.totalorder %s104, %s107
    %p116 = scmp.eq.s32.totalorder %s15, 1
    %p117 = por %p115, %p116
    %p118 = scmp.ne.s32.totalorder %s107, %s108
    %p119 = scmp.eq.s32.totalorder %s15, 0
    %p120 = por %p118, %p119
    %p121 = scmp.ne.s32.totalorder %s107, %s108
    %p122 = scmp.eq.s32.totalorder %s16, 1
    %p123 = por %p121, %p122
    %p125 = scmp.ne.s32.totalorder %s108, %s124
    %p126 = scmp.eq.s32.totalorder %s16, 0
    %p127 = por %p125, %p126
    %s128 = ssub.s32 %s17, %s29
    %s129 = ssub.s32 %s18, %s25
    %s130 = sor.u32 %s128, %s129
    %p131 = scmp.eq.s32.totalorder %s130, 0
    %s133 = sadd.s32 %s132, 1
    %s134 = scalar_select %p131, %s132, %s133
    %p137 = pneg %p131
    %p138 = scmp.eq.s32.totalorder %s10, 1
    %p139 = por %p137, %p138
    %p140 = scmp.ne.s32.totalorder %s132, %s135
    %p141 = scmp.eq.s32.totalorder %s10, 0
    %p142 = por %p140, %p141
    %p143 = scmp.ne.s32.totalorder %s132, %s135
    %p144 = scmp.eq.s32.totalorder %s15, 1
    %p145 = por %p143, %p144
    %p146 = scmp.ne.s32.totalorder %s135, %s136
    %p147 = scmp.eq.s32.totalorder %s15, 0
    %p148 = por %p146, %p147
    %p149 = scmp.ne.s32.totalorder %s135, %s136
    %p150 = scmp.eq.s32.totalorder %s16, 1
    %p151 = por %p149, %p150
    %p153 = scmp.ne.s32.totalorder %s136, %s152
    %p154 = scmp.eq.s32.totalorder %s16, 0
    %p155 = por %p153, %p154
    %p156 = scmp.le.s32.totalorder 1, %s10
    %p157 = scmp.lt.s32.totalorder %s10, 3
    %p158 = pnand %p156, %p157
    %p159 = pneg %p158
    // Predicated region
    $region9: #{vision_transformer_block.7} parent=5 // pred_check
      _
    $region10: #{vision_transformer_block.7} parent=5 // pred_check_branch
      %161 = sbr.rel (%p158) target = $region12
    $region11: #{vision_transformer_block.7} parent=5 // pred_region
      %s162 = ssub.s32 %s10, 1
      // Predicated region
      $region13: #{vision_transformer_block.7} parent=11 // pred_check
        %p163 = pneg %p71
      $region14: #{vision_transformer_block.7} parent=11 // pred_check_branch
        %165 = sbr.rel (%p163) target = $region16
      $region15: #{vision_transformer_block.7} parent=11 // pred_region
        _
      $region16: #{vision_transformer_block.7} parent=11 // pred_fallthru
        _
      // Predicated region
      $region17: #{vision_transformer_block.7} parent=11 // pred_check
        %p166 = pneg %p92
      $region18: #{vision_transformer_block.7} parent=11 // pred_check_branch
        %168 = sbr.rel (%p166) target = $region20
      $region19: #{vision_transformer_block.7} parent=11 // pred_region
        _
      $region20: #{vision_transformer_block.7} parent=11 // pred_fallthru
        _
    $region12: #{vision_transformer_block.7} parent=5 // pred_fallthru
      _
    %p169 = scmp.lt.s32.totalorder %s10, 2
    // Predicated region
    $region21: #{vision_transformer_block.7} parent=5 // pred_check
      %p170 = pneg %p169
    $region22: #{vision_transformer_block.7} parent=5 // pred_check_branch
      %172 = sbr.rel (%p170) target = $region24
    $region23: #{vision_transformer_block.7} parent=5 // pred_region
      // Predicated region
      $region25: #{vision_transformer_block.7} parent=23 // pred_check
        %p173 = pneg %p44
      $region26: #{vision_transformer_block.7} parent=23 // pred_check_branch
        %175 = sbr.rel (%p173) target = $region28
      $region27: #{vision_transformer_block.7} parent=23 // pred_region
        %s176 = smul.u32 8, %s18
        %p177 = scmp.lt.s32.totalorder %s17, 1
        %s178 = scalar_select %p177, %s17, 1
        %p179 = scmp.lt.s32.totalorder %s176, 7
        %s180 = scalar_select %p179, %s176, 7
        %s181 = smul.addr %s178, 8
        %s182 = sadd.s32 %s180, %s181
        %s183 = smul.addr %s182, 8
        %s184 = scalar_lea.vmem %s0, %s183
        %s185 = smul.u32 8, %s18
      $region28: #{vision_transformer_block.7} parent=23 // pred_fallthru
        _
      // Predicated region
      $region29: #{vision_transformer_block.7} parent=23 // pred_check
        %p186 = pneg %p114
      $region30: #{vision_transformer_block.7} parent=23 // pred_check_branch
        %188 = sbr.rel (%p186) target = $region32
      $region31: #{vision_transformer_block.7} parent=23 // pred_region
        %s189 = smul.u32 8, %s18
        %p190 = scmp.lt.s32.totalorder %s17, 1
        %s191 = scalar_select %p190, %s17, 1
        %p192 = scmp.lt.s32.totalorder %s189, 7
        %s193 = scalar_select %p192, %s189, 7
        %s194 = smul.addr %s191, 8
        %s195 = sadd.s32 %s193, %s194
        %s196 = smul.addr %s195, 8
        %s197 = scalar_lea.vmem %s3, %s196
        %s198 = smul.u32 8, %s18
      $region32: #{vision_transformer_block.7} parent=23 // pred_fallthru
        _
    $region24: #{vision_transformer_block.7} parent=5 // pred_fallthru
      _
    %p199 = scmp.le.s32.totalorder 1, %s10
    %p200 = scmp.lt.s32.totalorder %s10, 3
    %p201 = pnand %p199, %p200
    %p202 = pneg %p201
    // Predicated region
    $region33: #{vision_transformer_block.7} parent=5 // pred_check
      _
    $region34: #{vision_transformer_block.7} parent=5 // pred_check_branch
      %204 = sbr.rel (%p201) target = $region36
    $region35: #{vision_transformer_block.7} parent=5 // pred_region
      %s205 = ssub.s32 %s10, 1
      %s206 = smul.u32 8, %s20
      %p207 = scmp.lt.s32.totalorder %s19, 1
      %s208 = scalar_select %p207, %s19, 1
      %p209 = scmp.lt.s32.totalorder %s206, 7
      %s210 = scalar_select %p209, %s206, 7
      %s211 = smul.addr %s208, 8
      %s212 = sadd.s32 %s210, %s211
      %s213 = smul.addr %s212, 8
      %s214 = scalar_lea.vmem %s0, %s213
      %p215 = pneg %p50
      %p216 = pneg %p47
      %p217 = pneg %p71
      %p218 = pneg %p68
      %p219 = pneg %p92
      %p220 = pneg %p89
      %s221 = smul.u32 8, %s20
      %p222 = scmp.lt.s32.totalorder %s19, 1
      %s223 = scalar_select %p222, %s19, 1
      %p224 = scmp.lt.s32.totalorder %s221, 7
      %s225 = scalar_select %p224, %s221, 7
      %s226 = smul.addr %s223, 8
      %s227 = sadd.s32 %s225, %s226
      %s228 = smul.addr %s227, 8
      %s229 = scalar_lea.vmem %s3, %s228
      %p230 = pneg %p120
      %p231 = pneg %p117
      %p232 = pneg %p148
      %p233 = pneg %p145
      %s234 = smul.u32 8, %s20
      %p235 = scmp.lt.s32.totalorder %s19, 1
      %s236 = scalar_select %p235, %s19, 1
      %p237 = scmp.lt.s32.totalorder %s234, 7
      %s238 = scalar_select %p237, %s234, 7
      %s239 = smul.addr %s236, 8
      %s240 = sadd.s32 %s238, %s239
      %s241 = smul.addr %s240, 8
      %s242 = scalar_lea.vmem %s4, %s241
      %s243 = smul.u32 8, %s20
      %p244 = scmp.lt.s32.totalorder %s19, 1
      %s245 = scalar_select %p244, %s19, 1
      %p246 = scmp.lt.s32.totalorder %s243, 7
      %s247 = scalar_select %p246, %s243, 7
      %s248 = smul.addr %s245, 8
      %s249 = sadd.s32 %s247, %s248
      %s250 = smul.addr %s249, 8
      %s251 = scalar_lea.vmem %s0, %s250
      %s252 = smul.u32 8, %s20
      %s253 = smul.u32 8, %s20
      %p254 = scmp.lt.s32.totalorder %s19, 1
      %s255 = scalar_select %p254, %s19, 1
      %p256 = scmp.lt.s32.totalorder %s253, 7
      %s257 = scalar_select %p256, %s253, 7
      %s258 = smul.addr %s255, 8
      %s259 = sadd.s32 %s257, %s258
      %s260 = smul.addr %s259, 8
      %s261 = scalar_lea.vmem %s3, %s260
      %s262 = smul.u32 8, %s20
      %s263 = smul.u32 8, %s20
      %p264 = scmp.lt.s32.totalorder %s19, 1
      %s265 = scalar_select %p264, %s19, 1
      %p266 = scmp.lt.s32.totalorder %s263, 7
      %s267 = scalar_select %p266, %s263, 7
      %s268 = smul.addr %s265, 8
      %s269 = sadd.s32 %s267, %s268
      %s270 = smul.addr %s269, 8
      %s271 = scalar_lea.vmem %s4, %s270
      %s272 = smul.u32 8, %s20
      %v273 = vld [vmem:[%s251] sm:$0xff]
      %v274 = vld [vmem:[%s251 + $0x8] sm:$0xff]
      %v275 = vld [vmem:[%s251 + $0x10] sm:$0xff]
      %v276 = vld [vmem:[%s251 + $0x18] sm:$0xff]
      %v277 = vld [vmem:[%s251 + $0x20] sm:$0xff]
      %v278 = vld [vmem:[%s251 + $0x28] sm:$0xff]
      %v279 = vld [vmem:[%s251 + $0x30] sm:$0xff]
      %v280 = vld [vmem:[%s251 + $0x38] sm:$0xff]
      %v281 = vld [vmem:[%s1] sm:$0xff]
      %v282 = vld [vmem:[%s1 + $0x8] sm:$0xff]
      %v283 = vld [vmem:[%s1 + $0x10] sm:$0xff]
      %v284 = vld [vmem:[%s1 + $0x18] sm:$0xff]
      %v285 = vld [vmem:[%s2] sm:$0x1]
      %v287 = vlaneseq
      %v288 = vshrl.u32 %v287, 7
      %v289 = vsub.s32 0, %v288
      %v290 = vrot.slane %v285, %v289
      %vm292 = vcmask 261120
      %v294 = vsel %vm292, %v273, 0
      %v297 = vsel %vm292, %v274, 0
      %v300 = vsel %vm292, %v275, 0
      %v303 = vsel %vm292, %v276, 0
      %v306 = vsel %vm292, %v277, 0
      %v309 = vsel %vm292, %v278, 0
      %v312 = vsel %vm292, %v279, 0
      %v315 = vsel %vm292, %v280, 0
      %317 = vmatprep.subr.mxu0 0.0
      %318 = vmatpush1.msra.mxu0 0.0
      %319 = vmatprep.subr.mxu0 0.0
      %320 = vmatpush1.msra.mxu0 0.0
      %321 = vmatprep.subr.mxu0 0.0
      %322 = vmatpush1.msra.mxu0 0.0
      %323 = vmatprep.subr.mxu0 0.0
      %324 = vmatpush1.msra.mxu0 0.0
      %325 = vmatprep.subr.mxu0 0.0
      %326 = vmatpush1.msra.mxu0 0.0
      %327 = vmatprep.subr.mxu0 0.0
      %328 = vmatpush1.msra.mxu0 0.0
      %329 = vmatprep.subr.mxu0 0.0
      %330 = vmatpush1.msra.mxu0 0.0
      %331 = vmatprep.subr.mxu0 0.0
      %332 = vmatpush1.msra.mxu0 0.0
      %333 = vmatprep.subr.mxu0 0.0
      %334 = vmatpush1.msra.mxu0 0.0
      %335 = vmatprep.subr.mxu0 0.0
      %336 = vmatpush1.msra.mxu0 0.0
      %337 = vmatprep.subr.mxu0 0.0
      %338 = vmatpush1.msra.mxu0 0.0
      %339 = vmatprep.subr.mxu0 0.0
      %340 = vmatpush1.msra.mxu0 0.0
      %341 = vmatprep.subr.mxu0 0.0
      %342 = vmatpush1.msra.mxu0 %v284
      %343 = vmatprep.subr.mxu0 0.0
      %344 = vmatpush1.msra.mxu0 %v283
      %345 = vmatprep.subr.mxu0 0.0
      %346 = vmatpush1.msra.mxu0 %v282
      %347 = vmatprep.subr.mxu0 0.0
      %348 = vmatpush1.msra.mxu0 %v281
      %349 = vmatprep.subr.mxu0 0.0
      %350 = vmatpush2.msra.mxu0 0.0
      %351 = vmatprep.subr.mxu0 0.0
      %352 = vmatpush2.msra.mxu0 0.0
      %353 = vmatprep.subr.mxu0 0.0
      %354 = vmatpush2.msra.mxu0 0.0
      %355 = vmatprep.subr.mxu0 0.0
      %356 = vmatpush2.msra.mxu0 0.0
      %357 = vmatprep.subr.mxu0 0.0
      %358 = vmatpush2.msra.mxu0 0.0
      %359 = vmatprep.subr.mxu0 0.0
      %360 = vmatpush2.msra.mxu0 0.0
      %361 = vmatprep.subr.mxu0 0.0
      %362 = vmatpush2.msra.mxu0 0.0
      %363 = vmatprep.subr.mxu0 0.0
      %364 = vmatpush2.msra.mxu0 0.0
      %365 = vmatprep.subr.mxu0 0.0
      %366 = vmatpush2.msra.mxu0 0.0
      %367 = vmatprep.subr.mxu0 0.0
      %368 = vmatpush2.msra.mxu0 0.0
      %369 = vmatprep.subr.mxu0 0.0
      %370 = vmatpush2.msra.mxu0 0.0
      %371 = vmatprep.subr.mxu0 0.0
      %372 = vmatpush2.msra.mxu0 0.0
      %373 = vmatprep.subr.mxu0 0.0
      %374 = vmatpush2.msra.mxu0 0.0
      %375 = vmatprep.subr.mxu0 0.0
      %376 = vmatpush2.msra.mxu0 0.0
      %377 = vmatprep.subr.mxu0 0.0
      %378 = vmatpush2.msra.mxu0 0.0
      %379 = vmatprep.subr.mxu0 0.0
      %380 = vmatpush2.msra.mxu0 0.0
      %381 = vmatprep.mubr.f32.mxu0 0.0
      %382 = vmatmul.mubr.f32.gmra.mxu0 %v294
      %v383 = vpop.f32.mrf.mxu0
      %v384 = vadd.f32 %v290, %v383
      %v385 = vpop.f32.mrf.mxu0
      %386 = vmatprep.mubr.f32.mxu0 0.0
      %387 = vmatmul.mubr.f32.gmra.mxu0 %v297
      %v388 = vpop.f32.mrf.mxu0
      %v389 = vadd.f32 %v290, %v388
      %v390 = vpop.f32.mrf.mxu0
      %391 = vmatprep.mubr.f32.mxu0 0.0
      %392 = vmatmul.mubr.f32.gmra.mxu0 %v300
      %v393 = vpop.f32.mrf.mxu0
      %v394 = vadd.f32 %v290, %v393
      %v395 = vpop.f32.mrf.mxu0
      %396 = vmatprep.mubr.f32.mxu0 0.0
      %397 = vmatmul.mubr.f32.gmra.mxu0 %v303
      %v398 = vpop.f32.mrf.mxu0
      %v399 = vadd.f32 %v290, %v398
      %v400 = vpop.f32.mrf.mxu0
      %401 = vmatprep.mubr.f32.mxu0 0.0
      %402 = vmatmul.mubr.f32.gmra.mxu0 %v306
      %v403 = vpop.f32.mrf.mxu0
      %v404 = vadd.f32 %v290, %v403
      %v405 = vpop.f32.mrf.mxu0
      %406 = vmatprep.mubr.f32.mxu0 0.0
      %407 = vmatmul.mubr.f32.gmra.mxu0 %v309
      %v408 = vpop.f32.mrf.mxu0
      %v409 = vadd.f32 %v290, %v408
      %v410 = vpop.f32.mrf.mxu0
      %411 = vmatprep.mubr.f32.mxu0 0.0
      %412 = vmatmul.mubr.f32.gmra.mxu0 %v312
      %v413 = vpop.f32.mrf.mxu0
      %v414 = vadd.f32 %v290, %v413
      %v415 = vpop.f32.mrf.mxu0
      %416 = vmatprep.mubr.f32.mxu0 0.0
      %417 = vmatmul.mubr.f32.gmra.mxu0 %v315
      %v418 = vpop.f32.mrf.mxu0
      %v419 = vadd.f32 %v290, %v418
      %v420 = vpop.f32.mrf.mxu0
      %421 = vdwg.mxu0
      %v422 = vld [vmem:[%s261] sm:$0xff]
      %v423 = vld [vmem:[%s261 + $0x8] sm:$0xff]
      %v424 = vld [vmem:[%s261 + $0x10] sm:$0xff]
      %v425 = vld [vmem:[%s261 + $0x18] sm:$0xff]
      %v426 = vld [vmem:[%s261 + $0x20] sm:$0xff]
      %v427 = vld [vmem:[%s261 + $0x28] sm:$0xff]
      %v428 = vld [vmem:[%s261 + $0x30] sm:$0xff]
      %v429 = vld [vmem:[%s261 + $0x38] sm:$0xff]
      %v430 = vadd.f32 %v384, %v422
      %v431 = vadd.f32 %v389, %v423
      %v432 = vadd.f32 %v394, %v424
      %v433 = vadd.f32 %v399, %v425
      %v434 = vadd.f32 %v404, %v426
      %v435 = vadd.f32 %v409, %v427
      %v436 = vadd.f32 %v414, %v428
      %v437 = vadd.f32 %v419, %v429
      %438 = vst.msk [vmem:[%s271] sm:$0xff] %vm292, %v430
      %439 = vst.msk [vmem:[%s271 + $0x8] sm:$0xff] %vm292, %v431
      %440 = vst.msk [vmem:[%s271 + $0x10] sm:$0xff] %vm292, %v432
      %441 = vst.msk [vmem:[%s271 + $0x18] sm:$0xff] %vm292, %v433
      %442 = vst.msk [vmem:[%s271 + $0x20] sm:$0xff] %vm292, %v434
      %443 = vst.msk [vmem:[%s271 + $0x28] sm:$0xff] %vm292, %v435
      %444 = vst.msk [vmem:[%s271 + $0x30] sm:$0xff] %vm292, %v436
      %445 = vst.msk [vmem:[%s271 + $0x38] sm:$0xff] %vm292, %v437
      %s446 = smul.u32 8, %s20
      %p447 = scmp.lt.s32.totalorder %s19, 1
      %s448 = scalar_select %p447, %s19, 1
      %p449 = scmp.lt.s32.totalorder %s446, 7
      %s450 = scalar_select %p449, %s446, 7
      %s451 = smul.addr %s448, 8
      %s452 = sadd.s32 %s450, %s451
      %s453 = smul.addr %s452, 8
      %s454 = scalar_lea.vmem %s4, %s453
      // Predicated region
      $region37: #{vision_transformer_block.7} parent=35 // pred_check
        %p455 = pneg %p145
      $region38: #{vision_transformer_block.7} parent=35 // pred_check_branch
        %457 = sbr.rel (%p455) target = $region40
      $region39: #{vision_transformer_block.7} parent=35 // pred_region
        %s458 = smul.u32 8, %s20
      $region40: #{vision_transformer_block.7} parent=35 // pred_fallthru
        _
    $region36: #{vision_transformer_block.7} parent=5 // pred_fallthru
      _
    %p459 = scmp.le.s32.totalorder 2, %s10
    // Predicated region
    $region41: #{vision_transformer_block.7} parent=5 // pred_check
      %p460 = pneg %p459
    $region42: #{vision_transformer_block.7} parent=5 // pred_check_branch
      %462 = sbr.rel (%p460) target = $region44
    $region43: #{vision_transformer_block.7} parent=5 // pred_region
      %s463 = ssub.s32 %s10, 2
      // Predicated region
      $region45: #{vision_transformer_block.7} parent=43 // pred_check
        %p464 = pneg %p151
      $region46: #{vision_transformer_block.7} parent=43 // pred_check_branch
        %466 = sbr.rel (%p464) target = $region48
      $region47: #{vision_transformer_block.7} parent=43 // pred_region
        %s467 = smul.u32 8, %s22
        %p468 = scmp.lt.s32.totalorder %s21, 1
        %s469 = scalar_select %p468, %s21, 1
        %p470 = scmp.lt.s32.totalorder %s467, 7
        %s471 = scalar_select %p470, %s467, 7
        %s472 = smul.addr %s469, 8
        %s473 = sadd.s32 %s471, %s472
        %s474 = smul.addr %s473, 8
        %s475 = scalar_lea.vmem %s4, %s474
      $region48: #{vision_transformer_block.7} parent=43 // pred_fallthru
        _
    $region44: #{vision_transformer_block.7} parent=5 // pred_fallthru
      _
  $region6: #{vision_transformer_block.7} parent=0 // loop_footer
    %s14 = sadd.s32 1, %s10
  $region7: #{vision_transformer_block.7} parent=0 // loop_footer_branch
    %9 = sbr.rel target = $region3
  $region8: #{vision_transformer_block.7} parent=0 // loop_exit
    _

// kernel: vision_transformer_block.6
$region0: #{vision_transformer_block.6}
  #allocation0 [shape = 'u32[]', space=smem, size = 0x4, offset = 0x4, fixed_abs, tag = 'smem constant byte address 0x4 - core index']
  #allocation1 [shape = 'u32[144,128]{1,0:T(1,128)}', space=vmem, size = 0x12000, scoped, tag = 'internal scratch']
  #allocation2 [shape = 'f32[64,1]{1,0:T(8,128)}', space=vmem, size = 0x8000, scoped, tag = 'scratch operand']
  #allocation3 [shape = 'f32[64,1]{1,0:T(8,128)}', space=vmem, size = 0x8000, scoped, tag = 'scratch operand']
  #allocation4 [shape = 'f32[64,8]{1,0:T(8,128)}', space=vmem, size = 0x8000, scoped, tag = 'scratch operand']
  %s0 = inlined_call_operand.vmem [shape: f32[8,64,8], index: 0, kind: input, shape index: {}]
  %s1 = inlined_call_operand.vmem [shape: f32[8,64,8], index: 1, kind: input, shape index: {}]
  %s2 = inlined_call_operand.vmem [shape: f32[8,64,8], index: 2, kind: input, shape index: {}]
  %s3 = inlined_call_operand.vmem [shape: f32[8,64,8], index: 3, kind: output, shape index: {}]
  %s4 = sld [smem:[#allocation0]]
  $region53: #{vision_transformer_block.6} parent=0
    _
  %s6 = ssub.s32 1, %s4
  %s7 = scalar_select 0, %s6, %s4
  loop: start=0, step=1, limit=10
  $region2: #{vision_transformer_block.6} parent=0 // loop_pre_header
    _
  $region3: #{vision_transformer_block.6} parent=0 // loop_header
    %s9 = sphi 0, %s13
    %p10 = scmp.ge.s32.totalorder %s9, 10
    %s16 = sphi 0, %s35
    %s17 = sphi 0, %s31
    %s18 = sphi 0, %s27
    %s19 = sphi 0, %s16
    %s20 = sphi 0, %s17
    %s21 = sphi 0, %s18
    %s22 = sphi 0, %s19
    %s23 = sphi 0, %s20
    %s24 = sphi 0, %s21
    %s40 = sphi 0, %s42
    %s43 = sphi 0, %s40
    %s44 = sphi 0, %s43
    %s60 = sphi 0, %s44
    %s68 = sphi 0, %s70
    %s71 = sphi 0, %s68
    %s72 = sphi 0, %s71
    %s88 = sphi 0, %s72
    %s96 = sphi 0, %s98
    %s99 = sphi 0, %s96
    %s100 = sphi 0, %s99
    %s116 = sphi 0, %s100
    %s124 = sphi 0, %s126
    %s127 = sphi 0, %s124
    %s128 = sphi 0, %s127
    %s144 = sphi 0, %s128
  $region4: #{vision_transformer_block.6} parent=0 // loop_header_branch
    %12 = sbr.rel (%p10) target = $region8
  $region5: #{vision_transformer_block.6} parent=0 // loop_body
    %s14 = ssub.s32 %s9, 1
    %s15 = ssub.s32 %s9, 2
    %s25 = sadd.s32 1, %s18
    %p26 = scmp.ge.s32.totalorder %s25, 1
    %s27 = scalar_select %p26, 0, %s25
    %s28 = sadd.s32 1, %s17
    %s29 = scalar_select %p26, %s28, %s17
    %p30 = scmp.ge.s32.totalorder %s29, 1
    %s31 = scalar_select %p30, 0, %s29
    %s32 = sadd.s32 1, %s16
    %s33 = scalar_select %p30, %s32, %s16
    %p34 = scmp.ge.s32.totalorder %s33, 8
    %s35 = scalar_select %p34, 0, %s33
    %s36 = ssub.s32 %s16, %s35
    %s37 = ssub.s32 %s17, %s31
    %s38 = sor.u32 %s36, %s37
    %p39 = scmp.eq.s32.totalorder %s38, 0
    %s41 = sadd.s32 %s40, 1
    %s42 = scalar_select %p39, %s40, %s41
    %p45 = pneg %p39
    %p46 = scmp.eq.s32.totalorder %s9, 7
    %p47 = por %p45, %p46
    %p48 = scmp.ne.s32.totalorder %s40, %s43
    %p49 = scmp.eq.s32.totalorder %s9, 0
    %p50 = por %p48, %p49
    %p51 = scmp.ne.s32.totalorder %s40, %s43
    %p52 = scmp.eq.s32.totalorder %s14, 7
    %p53 = por %p51, %p52
    %p54 = scmp.ne.s32.totalorder %s43, %s44
    %p55 = scmp.eq.s32.totalorder %s14, 0
    %p56 = por %p54, %p55
    %p57 = scmp.ne.s32.totalorder %s43, %s44
    %p58 = scmp.eq.s32.totalorder %s15, 7
    %p59 = por %p57, %p58
    %p61 = scmp.ne.s32.totalorder %s44, %s60
    %p62 = scmp.eq.s32.totalorder %s15, 0
    %p63 = por %p61, %p62
    %s64 = ssub.s32 %s16, %s35
    %s65 = ssub.s32 %s18, %s27
    %s66 = sor.u32 %s64, %s65
    %p67 = scmp.eq.s32.totalorder %s66, 0
    %s69 = sadd.s32 %s68, 1
    %s70 = scalar_select %p67, %s68, %s69
    %p73 = pneg %p67
    %p74 = scmp.eq.s32.totalorder %s9, 7
    %p75 = por %p73, %p74
    %p76 = scmp.ne.s32.totalorder %s68, %s71
    %p77 = scmp.eq.s32.totalorder %s9, 0
    %p78 = por %p76, %p77
    %p79 = scmp.ne.s32.totalorder %s68, %s71
    %p80 = scmp.eq.s32.totalorder %s14, 7
    %p81 = por %p79, %p80
    %p82 = scmp.ne.s32.totalorder %s71, %s72
    %p83 = scmp.eq.s32.totalorder %s14, 0
    %p84 = por %p82, %p83
    %p85 = scmp.ne.s32.totalorder %s71, %s72
    %p86 = scmp.eq.s32.totalorder %s15, 7
    %p87 = por %p85, %p86
    %p89 = scmp.ne.s32.totalorder %s72, %s88
    %p90 = scmp.eq.s32.totalorder %s15, 0
    %p91 = por %p89, %p90
    %s92 = ssub.s32 %s16, %s35
    %s93 = ssub.s32 %s18, %s27
    %s94 = sor.u32 %s92, %s93
    %p95 = scmp.eq.s32.totalorder %s94, 0
    %s97 = sadd.s32 %s96, 1
    %s98 = scalar_select %p95, %s96, %s97
    %p101 = pneg %p95
    %p102 = scmp.eq.s32.totalorder %s9, 7
    %p103 = por %p101, %p102
    %p104 = scmp.ne.s32.totalorder %s96, %s99
    %p105 = scmp.eq.s32.totalorder %s9, 0
    %p106 = por %p104, %p105
    %p107 = scmp.ne.s32.totalorder %s96, %s99
    %p108 = scmp.eq.s32.totalorder %s14, 7
    %p109 = por %p107, %p108
    %p110 = scmp.ne.s32.totalorder %s99, %s100
    %p111 = scmp.eq.s32.totalorder %s14, 0
    %p112 = por %p110, %p111
    %p113 = scmp.ne.s32.totalorder %s99, %s100
    %p114 = scmp.eq.s32.totalorder %s15, 7
    %p115 = por %p113, %p114
    %p117 = scmp.ne.s32.totalorder %s100, %s116
    %p118 = scmp.eq.s32.totalorder %s15, 0
    %p119 = por %p117, %p118
    %s120 = ssub.s32 %s16, %s35
    %s121 = ssub.s32 %s17, %s31
    %s122 = sor.u32 %s120, %s121
    %p123 = scmp.eq.s32.totalorder %s122, 0
    %s125 = sadd.s32 %s124, 1
    %s126 = scalar_select %p123, %s124, %s125
    %p129 = pneg %p123
    %p130 = scmp.eq.s32.totalorder %s9, 7
    %p131 = por %p129, %p130
    %p132 = scmp.ne.s32.totalorder %s124, %s127
    %p133 = scmp.eq.s32.totalorder %s9, 0
    %p134 = por %p132, %p133
    %p135 = scmp.ne.s32.totalorder %s124, %s127
    %p136 = scmp.eq.s32.totalorder %s14, 7
    %p137 = por %p135, %p136
    %p138 = scmp.ne.s32.totalorder %s127, %s128
    %p139 = scmp.eq.s32.totalorder %s14, 0
    %p140 = por %p138, %p139
    %p141 = scmp.ne.s32.totalorder %s127, %s128
    %p142 = scmp.eq.s32.totalorder %s15, 7
    %p143 = por %p141, %p142
    %p145 = scmp.ne.s32.totalorder %s128, %s144
    %p146 = scmp.eq.s32.totalorder %s15, 0
    %p147 = por %p145, %p146
    %p148 = scmp.le.s32.totalorder 1, %s9
    %p149 = scmp.lt.s32.totalorder %s9, 9
    %p150 = pnand %p148, %p149
    %p151 = pneg %p150
    // Predicated region
    $region9: #{vision_transformer_block.6} parent=5 // pred_check
      _
    $region10: #{vision_transformer_block.6} parent=5 // pred_check_branch
      %153 = sbr.rel (%p150) target = $region12
    $region11: #{vision_transformer_block.6} parent=5 // pred_region
      %s154 = ssub.s32 %s9, 1
    $region12: #{vision_transformer_block.6} parent=5 // pred_fallthru
      _
    %p155 = scmp.lt.s32.totalorder %s9, 8
    // Predicated region
    $region13: #{vision_transformer_block.6} parent=5 // pred_check
      %p156 = pneg %p155
    $region14: #{vision_transformer_block.6} parent=5 // pred_check_branch
      %158 = sbr.rel (%p156) target = $region16
    $region15: #{vision_transformer_block.6} parent=5 // pred_region
      // Predicated region
      $region17: #{vision_transformer_block.6} parent=15 // pred_check
        %p159 = pneg %p50
      $region18: #{vision_transformer_block.6} parent=15 // pred_check_branch
        %161 = sbr.rel (%p159) target = $region20
      $region19: #{vision_transformer_block.6} parent=15 // pred_region
        %s162 = smul.u32 8, %s17
        %p163 = scmp.lt.s32.totalorder %s16, 7
        %s164 = scalar_select %p163, %s16, 7
        %p165 = scmp.lt.s32.totalorder %s162, 7
        %s166 = scalar_select %p165, %s162, 7
        %s167 = smul.addr %s164, 8
        %s168 = sadd.s32 %s166, %s167
        %s169 = smul.addr %s168, 8
        %s170 = scalar_lea.vmem %s0, %s169
        %s171 = smul.u32 8, %s17
      $region20: #{vision_transformer_block.6} parent=15 // pred_fallthru
        _
      // Predicated region
      $region21: #{vision_transformer_block.6} parent=15 // pred_check
        %p172 = pneg %p78
      $region22: #{vision_transformer_block.6} parent=15 // pred_check_branch
        %174 = sbr.rel (%p172) target = $region24
      $region23: #{vision_transformer_block.6} parent=15 // pred_region
        %s175 = smul.u32 8, %s18
        %p176 = scmp.lt.s32.totalorder %s16, 7
        %s177 = scalar_select %p176, %s16, 7
        %p178 = scmp.lt.s32.totalorder %s175, 7
        %s179 = scalar_select %p178, %s175, 7
        %s180 = smul.addr %s177, 8
        %s181 = sadd.s32 %s179, %s180
        %s182 = smul.addr %s181, 8
        %s183 = scalar_lea.vmem %s1, %s182
        %s184 = smul.u32 8, %s18
      $region24: #{vision_transformer_block.6} parent=15 // pred_fallthru
        _
      // Predicated region
      $region25: #{vision_transformer_block.6} parent=15 // pred_check
        %p185 = pneg %p106
      $region26: #{vision_transformer_block.6} parent=15 // pred_check_branch
        %187 = sbr.rel (%p185) target = $region28
      $region27: #{vision_transformer_block.6} parent=15 // pred_region
        %s188 = smul.u32 8, %s18
        %p189 = scmp.lt.s32.totalorder %s16, 7
        %s190 = scalar_select %p189, %s16, 7
        %p191 = scmp.lt.s32.totalorder %s188, 7
        %s192 = scalar_select %p191, %s188, 7
        %s193 = smul.addr %s190, 8
        %s194 = sadd.s32 %s192, %s193
        %s195 = smul.addr %s194, 8
        %s196 = scalar_lea.vmem %s2, %s195
        %s197 = smul.u32 8, %s18
      $region28: #{vision_transformer_block.6} parent=15 // pred_fallthru
        _
    $region16: #{vision_transformer_block.6} parent=5 // pred_fallthru
      _
    %p198 = scmp.le.s32.totalorder 1, %s9
    %p199 = scmp.lt.s32.totalorder %s9, 9
    %p200 = pnand %p198, %p199
    %p201 = pneg %p200
    // Predicated region
    $region29: #{vision_transformer_block.6} parent=5 // pred_check
      _
    $region30: #{vision_transformer_block.6} parent=5 // pred_check_branch
      %203 = sbr.rel (%p200) target = $region32
    $region31: #{vision_transformer_block.6} parent=5 // pred_region
      %s204 = ssub.s32 %s9, 1
      %s205 = smul.u32 8, %s20
      %p206 = scmp.lt.s32.totalorder %s19, 7
      %s207 = scalar_select %p206, %s19, 7
      %p208 = scmp.lt.s32.totalorder %s205, 7
      %s209 = scalar_select %p208, %s205, 7
      %s210 = smul.addr %s207, 8
      %s211 = sadd.s32 %s209, %s210
      %s212 = smul.addr %s211, 8
      %s213 = scalar_lea.vmem %s0, %s212
      %p214 = pneg %p56
      %p215 = pneg %p53
      %s216 = smul.u32 8, %s21
      %p217 = scmp.lt.s32.totalorder %s19, 7
      %s218 = scalar_select %p217, %s19, 7
      %p219 = scmp.lt.s32.totalorder %s216, 7
      %s220 = scalar_select %p219, %s216, 7
      %s221 = smul.addr %s218, 8
      %s222 = sadd.s32 %s220, %s221
      %s223 = smul.addr %s222, 8
      %s224 = scalar_lea.vmem %s1, %s223
      %p225 = pneg %p84
      %p226 = pneg %p81
      %s227 = smul.u32 8, %s21
      %p228 = scmp.lt.s32.totalorder %s19, 7
      %s229 = scalar_select %p228, %s19, 7
      %p230 = scmp.lt.s32.totalorder %s227, 7
      %s231 = scalar_select %p230, %s227, 7
      %s232 = smul.addr %s229, 8
      %s233 = sadd.s32 %s231, %s232
      %s234 = smul.addr %s233, 8
      %s235 = scalar_lea.vmem %s2, %s234
      %p236 = pneg %p112
      %p237 = pneg %p109
      %p238 = pneg %p140
      %p239 = pneg %p137
      %s240 = smul.u32 8, %s20
      %p241 = scmp.lt.s32.totalorder %s19, 7
      %s242 = scalar_select %p241, %s19, 7
      %p243 = scmp.lt.s32.totalorder %s240, 7
      %s244 = scalar_select %p243, %s240, 7
      %s245 = smul.addr %s242, 8
      %s246 = sadd.s32 %s244, %s245
      %s247 = smul.addr %s246, 8
      %s248 = scalar_lea.vmem %s3, %s247
      %s249 = smul.u32 8, %s20
      %p250 = scmp.lt.s32.totalorder %s19, 7
      %s251 = scalar_select %p250, %s19, 7
      %p252 = scmp.lt.s32.totalorder %s249, 7
      %s253 = scalar_select %p252, %s249, 7
      %s254 = smul.addr %s251, 8
      %s255 = sadd.s32 %s253, %s254
      %s256 = smul.addr %s255, 8
      %s257 = scalar_lea.vmem %s0, %s256
      %s258 = smul.u32 8, %s20
      %s259 = smul.u32 8, %s21
      %p260 = scmp.lt.s32.totalorder %s19, 7
      %s261 = scalar_select %p260, %s19, 7
      %p262 = scmp.lt.s32.totalorder %s259, 7
      %s263 = scalar_select %p262, %s259, 7
      %s264 = smul.addr %s261, 8
      %s265 = sadd.s32 %s263, %s264
      %s266 = smul.addr %s265, 8
      %s267 = scalar_lea.vmem %s1, %s266
      %s268 = smul.u32 8, %s21
      %s269 = smul.u32 8, %s21
      %p270 = scmp.lt.s32.totalorder %s19, 7
      %s271 = scalar_select %p270, %s19, 7
      %p272 = scmp.lt.s32.totalorder %s269, 7
      %s273 = scalar_select %p272, %s269, 7
      %s274 = smul.addr %s271, 8
      %s275 = sadd.s32 %s273, %s274
      %s276 = smul.addr %s275, 8
      %s277 = scalar_lea.vmem %s2, %s276
      %s278 = smul.u32 8, %s21
      %s279 = smul.u32 8, %s20
      %p280 = scmp.lt.s32.totalorder %s19, 7
      %s281 = scalar_select %p280, %s19, 7
      %p282 = scmp.lt.s32.totalorder %s279, 7
      %s283 = scalar_select %p282, %s279, 7
      %s284 = smul.addr %s281, 8
      %s285 = sadd.s32 %s283, %s284
      %s286 = smul.addr %s285, 8
      %s287 = scalar_lea.vmem %s3, %s286
      %s288 = smul.u32 8, %s20
      %p289 = scmp.eq.s32.totalorder %s21, 0
      // Predicated region
      $region33: #{vision_transformer_block.6} parent=31 // pred_check
        %p290 = pneg %p289
      $region34: #{vision_transformer_block.6} parent=31 // pred_check_branch
        %292 = sbr.rel (%p290) target = $region36
      $region35: #{vision_transformer_block.6} parent=31 // pred_region
        %vm293 = vcmask 7168
        %294 = vst.msk [vmem:[#allocation2] sm:$0xff] %vm293, -inf
        %295 = vst.msk [vmem:[#allocation2 + $0x8] sm:$0xff] %vm293, -inf
        %296 = vst.msk [vmem:[#allocation2 + $0x10] sm:$0xff] %vm293, -inf
        %297 = vst.msk [vmem:[#allocation2 + $0x18] sm:$0xff] %vm293, -inf
        %298 = vst.msk [vmem:[#allocation2 + $0x20] sm:$0xff] %vm293, -inf
        %299 = vst.msk [vmem:[#allocation2 + $0x28] sm:$0xff] %vm293, -inf
        %300 = vst.msk [vmem:[#allocation2 + $0x30] sm:$0xff] %vm293, -inf
        %301 = vst.msk [vmem:[#allocation2 + $0x38] sm:$0xff] %vm293, -inf
        %302 = vst.msk [vmem:[#allocation3] sm:$0xff] %vm293, 0.0
        %303 = vst.msk [vmem:[#allocation3 + $0x8] sm:$0xff] %vm293, 0.0
        %304 = vst.msk [vmem:[#allocation3 + $0x10] sm:$0xff] %vm293, 0.0
        %305 = vst.msk [vmem:[#allocation3 + $0x18] sm:$0xff] %vm293, 0.0
        %306 = vst.msk [vmem:[#allocation3 + $0x20] sm:$0xff] %vm293, 0.0
        %307 = vst.msk [vmem:[#allocation3 + $0x28] sm:$0xff] %vm293, 0.0
        %308 = vst.msk [vmem:[#allocation3 + $0x30] sm:$0xff] %vm293, 0.0
        %309 = vst.msk [vmem:[#allocation3 + $0x38] sm:$0xff] %vm293, 0.0
        %vm310 = vcmask 64512
        %311 = vst.msk [vmem:[#allocation4] sm:$0xff] %vm310, 0.0
        %312 = vst.msk [vmem:[#allocation4 + $0x8] sm:$0xff] %vm310, 0.0
        %313 = vst.msk [vmem:[#allocation4 + $0x10] sm:$0xff] %vm310, 0.0
        %314 = vst.msk [vmem:[#allocation4 + $0x18] sm:$0xff] %vm310, 0.0
        %315 = vst.msk [vmem:[#allocation4 + $0x20] sm:$0xff] %vm310, 0.0
        %316 = vst.msk [vmem:[#allocation4 + $0x28] sm:$0xff] %vm310, 0.0
        %317 = vst.msk [vmem:[#allocation4 + $0x30] sm:$0xff] %vm310, 0.0
        %318 = vst.msk [vmem:[#allocation4 + $0x38] sm:$0xff] %vm310, 0.0
      $region36: #{vision_transformer_block.6} parent=31 // pred_fallthru
        _
      %v319 = vld [vmem:[%s257] sm:$0xff]
      %v320 = vld [vmem:[%s257 + $0x8] sm:$0xff]
      %v321 = vld [vmem:[%s257 + $0x10] sm:$0xff]
      %v322 = vld [vmem:[%s257 + $0x18] sm:$0xff]
      %v323 = vld [vmem:[%s257 + $0x20] sm:$0xff]
      %v324 = vld [vmem:[%s257 + $0x28] sm:$0xff]
      %v325 = vld [vmem:[%s257 + $0x30] sm:$0xff]
      %v326 = vld [vmem:[%s257 + $0x38] sm:$0xff]
      %v327 = vld [vmem:[%s267] sm:$0xff]
      %v328 = vld [vmem:[%s267 + $0x8] sm:$0xff]
      %v329 = vld [vmem:[%s267 + $0x10] sm:$0xff]
      %v330 = vld [vmem:[%s267 + $0x18] sm:$0xff]
      %v331 = vld [vmem:[%s267 + $0x20] sm:$0xff]
      %v332 = vld [vmem:[%s267 + $0x28] sm:$0xff]
      %v333 = vld [vmem:[%s267 + $0x30] sm:$0xff]
      %v334 = vld [vmem:[%s267 + $0x38] sm:$0xff]
      %vm335 = vcmask 64512
      %v337 = vsel %vm335, %v319, 0
      %v340 = vsel %vm335, %v320, 0
      %v343 = vsel %vm335, %v321, 0
      %v346 = vsel %vm335, %v322, 0
      %v349 = vsel %vm335, %v323, 0
      %v352 = vsel %vm335, %v324, 0
      %v355 = vsel %vm335, %v325, 0
      %v358 = vsel %vm335, %v326, 0
      %v361 = vsel %vm335, %v327, 0
      %v364 = vsel %vm335, %v328, 0
      %v367 = vsel %vm335, %v329, 0
      %v370 = vsel %vm335, %v330, 0
      %v373 = vsel %vm335, %v331, 0
      %v376 = vsel %vm335, %v332, 0
      %v379 = vsel %vm335, %v333, 0
      %v382 = vsel %vm335, %v334, 0
      %384 = vmatprep.subr.mxu0 0.0
      %385 = vmatpush1.xpose.msra.mxu0 0.0
      %386 = vmatprep.subr.mxu0 0.0
      %387 = vmatpush1.xpose.msra.mxu0 0.0
      %388 = vmatprep.subr.mxu0 0.0
      %389 = vmatpush1.xpose.msra.mxu0 0.0
      %390 = vmatprep.subr.mxu0 0.0
      %391 = vmatpush1.xpose.msra.mxu0 0.0
      %392 = vmatprep.subr.mxu0 0.0
      %393 = vmatpush1.xpose.msra.mxu0 0.0
      %394 = vmatprep.subr.mxu0 0.0
      %395 = vmatpush1.xpose.msra.mxu0 0.0
      %396 = vmatprep.subr.mxu0 0.0
      %397 = vmatpush1.xpose.msra.mxu0 0.0
      %398 = vmatprep.subr.mxu0 0.0
      %399 = vmatpush1.xpose.msra.mxu0 0.0
      %400 = vmatprep.subr.mxu0 0.0
      %401 = vmatpush1.xpose.msra.mxu0 %v382
      %402 = vmatprep.subr.mxu0 0.0
      %403 = vmatpush1.xpose.msra.mxu0 %v379
      %404 = vmatprep.subr.mxu0 0.0
      %405 = vmatpush1.xpose.msra.mxu0 %v376
      %406 = vmatprep.subr.mxu0 0.0
      %407 = vmatpush1.xpose.msra.mxu0 %v373
      %408 = vmatprep.subr.mxu0 0.0
      %409 = vmatpush1.xpose.msra.mxu0 %v370
      %410 = vmatprep.subr.mxu0 0.0
      %411 = vmatpush1.xpose.msra.mxu0 %v367
      %412 = vmatprep.subr.mxu0 0.0
      %413 = vmatpush1.xpose.msra.mxu0 %v364
      %414 = vmatprep.subr.mxu0 0.0
      %415 = vmatpush1.xpose.msra.mxu0 %v361
      %416 = vmatprep.subr.mxu0 0.0
      %417 = vmatpush2.xpose.msra.mxu0 0.0
      %418 = vmatprep.subr.mxu0 0.0
      %419 = vmatpush2.xpose.msra.mxu0 0.0
      %420 = vmatprep.subr.mxu0 0.0
      %421 = vmatpush2.xpose.msra.mxu0 0.0
      %422 = vmatprep.subr.mxu0 0.0
      %423 = vmatpush2.xpose.msra.mxu0 0.0
      %424 = vmatprep.subr.mxu0 0.0
      %425 = vmatpush2.xpose.msra.mxu0 0.0
      %426 = vmatprep.subr.mxu0 0.0
      %427 = vmatpush2.xpose.msra.mxu0 0.0
      %428 = vmatprep.subr.mxu0 0.0
      %429 = vmatpush2.xpose.msra.mxu0 0.0
      %430 = vmatprep.subr.mxu0 0.0
      %431 = vmatpush2.xpose.msra.mxu0 0.0
      %432 = vmatprep.subr.mxu0 0.0
      %433 = vmatpush2.xpose.msra.mxu0 0.0
      %434 = vmatprep.subr.mxu0 0.0
      %435 = vmatpush2.xpose.msra.mxu0 0.0
      %436 = vmatprep.subr.mxu0 0.0
      %437 = vmatpush2.xpose.msra.mxu0 0.0
      %438 = vmatprep.subr.mxu0 0.0
      %439 = vmatpush2.xpose.msra.mxu0 0.0
      %440 = vmatprep.subr.mxu0 0.0
      %441 = vmatpush2.xpose.msra.mxu0 0.0
      %442 = vmatprep.subr.mxu0 0.0
      %443 = vmatpush2.xpose.msra.mxu0 0.0
      %444 = vmatprep.subr.mxu0 0.0
      %445 = vmatpush2.xpose.msra.mxu0 0.0
      %446 = vmatprep.subr.mxu0 0.0
      %447 = vmatpush2.xpose.msra.mxu0 0.0
      %448 = vmatprep.mubr.f32.mxu0 0.0
      %449 = vmatmul.mubr.f32.gmra.mxu0 %v337
      %v450 = vpop.f32.mrf.mxu0
      %v451 = vadd.f32 0.0, %v450
      %v452 = vpop.f32.mrf.mxu0
      %453 = vmatprep.mubr.f32.mxu0 0.0
      %454 = vmatmul.mubr.f32.gmra.mxu0 %v340
      %v455 = vpop.f32.mrf.mxu0
      %v456 = vadd.f32 0.0, %v455
      %v457 = vpop.f32.mrf.mxu0
      %458 = vmatprep.mubr.f32.mxu0 0.0
      %459 = vmatmul.mubr.f32.gmra.mxu0 %v343
      %v460 = vpop.f32.mrf.mxu0
      %v461 = vadd.f32 0.0, %v460
      %v462 = vpop.f32.mrf.mxu0
      %463 = vmatprep.mubr.f32.mxu0 0.0
      %464 = vmatmul.mubr.f32.gmra.mxu0 %v346
      %v465 = vpop.f32.mrf.mxu0
      %v466 = vadd.f32 0.0, %v465
      %v467 = vpop.f32.mrf.mxu0
      %468 = vmatprep.mubr.f32.mxu0 0.0
      %469 = vmatmul.mubr.f32.gmra.mxu0 %v349
      %v470 = vpop.f32.mrf.mxu0
      %v471 = vadd.f32 0.0, %v470
      %v472 = vpop.f32.mrf.mxu0
      %473 = vmatprep.mubr.f32.mxu0 0.0
      %474 = vmatmul.mubr.f32.gmra.mxu0 %v352
      %v475 = vpop.f32.mrf.mxu0
      %v476 = vadd.f32 0.0, %v475
      %v477 = vpop.f32.mrf.mxu0
      %478 = vmatprep.mubr.f32.mxu0 0.0
      %479 = vmatmul.mubr.f32.gmra.mxu0 %v355
      %v480 = vpop.f32.mrf.mxu0
      %v481 = vadd.f32 0.0, %v480
      %v482 = vpop.f32.mrf.mxu0
      %483 = vmatprep.mubr.f32.mxu0 0.0
      %484 = vmatmul.mubr.f32.gmra.mxu0 %v358
      %v485 = vpop.f32.mrf.mxu0
      %v486 = vadd.f32 0.0, %v485
      %v487 = vpop.f32.mrf.mxu0
      %488 = vdwg.mxu0
      %v489 = vmul.f32 %v451, 0.35355338
      %v490 = vmul.f32 %v456, 0.35355338
      %v491 = vmul.f32 %v461, 0.35355338
      %v492 = vmul.f32 %v466, 0.35355338
      %v493 = vmul.f32 %v471, 0.35355338
      %v494 = vmul.f32 %v476, 0.35355338
      %v495 = vmul.f32 %v481, 0.35355338
      %v496 = vmul.f32 %v486, 0.35355338
      %v497 = vld [vmem:[#allocation2] sm:$0xff]
      %v498 = vld [vmem:[#allocation2 + $0x8] sm:$0xff]
      %v499 = vld [vmem:[#allocation2 + $0x10] sm:$0xff]
      %v500 = vld [vmem:[#allocation2 + $0x18] sm:$0xff]
      %v501 = vld [vmem:[#allocation2 + $0x20] sm:$0xff]
      %v502 = vld [vmem:[#allocation2 + $0x28] sm:$0xff]
      %v503 = vld [vmem:[#allocation2 + $0x30] sm:$0xff]
      %v504 = vld [vmem:[#allocation2 + $0x38] sm:$0xff]
      %vm505 = vcmask 523264
      %v506 = vsel %vm505, %v489, -inf
      %507 = vmax.xlane.f32.xlu0 %v506
      %v508 = vpop.xlane.xlu0 %507
      %v509 = vsel %vm505, %v490, -inf
      %510 = vmax.xlane.f32.xlu0 %v509
      %v511 = vpop.xlane.xlu0 %510
      %v512 = vsel %vm505, %v491, -inf
      %513 = vmax.xlane.f32.xlu0 %v512
      %v514 = vpop.xlane.xlu0 %513
      %v515 = vsel %vm505, %v492, -inf
      %516 = vmax.xlane.f32.xlu0 %v515
      %v517 = vpop.xlane.xlu0 %516
      %v518 = vsel %vm505, %v493, -inf
      %519 = vmax.xlane.f32.xlu0 %v518
      %v520 = vpop.xlane.xlu0 %519
      %v521 = vsel %vm505, %v494, -inf
      %522 = vmax.xlane.f32.xlu0 %v521
      %v523 = vpop.xlane.xlu0 %522
      %v524 = vsel %vm505, %v495, -inf
      %525 = vmax.xlane.f32.xlu0 %v524
      %v526 = vpop.xlane.xlu0 %525
      %v527 = vsel %vm505, %v496, -inf
      %528 = vmax.xlane.f32.xlu0 %v527
      %v529 = vpop.xlane.xlu0 %528
      %v530 = vmax.f32 %v497, %v508
      %v531 = vmax.f32 %v498, %v511
      %v532 = vmax.f32 %v499, %v514
      %v533 = vmax.f32 %v500, %v517
      %v534 = vmax.f32 %v501, %v520
      %v535 = vmax.f32 %v502, %v523
      %v536 = vmax.f32 %v503, %v526
      %v537 = vmax.f32 %v504, %v529
      %v538 = vsub.f32 %v497, %v530
      %v539 = vsub.f32 %v498, %v531
      %v540 = vsub.f32 %v499, %v532
      %v541 = vsub.f32 %v500, %v533
      %v542 = vsub.f32 %v501, %v534
      %v543 = vsub.f32 %v502, %v535
      %v544 = vsub.f32 %v503, %v536
      %v545 = vsub.f32 %v504, %v537
      %v546 = vmul.f32 %v538, 1.442695
      %v547 = vpow.pop %v546
      %v548 = vmul.f32 %v539, 1.442695
      %v549 = vpow.pop %v548
      %v550 = vmul.f32 %v540, 1.442695
      %v551 = vpow.pop %v550
      %v552 = vmul.f32 %v541, 1.442695
      %v553 = vpow.pop %v552
      %v554 = vmul.f32 %v542, 1.442695
      %v555 = vpow.pop %v554
      %v556 = vmul.f32 %v543, 1.442695
      %v557 = vpow.pop %v556
      %v558 = vmul.f32 %v544, 1.442695
      %v559 = vpow.pop %v558
      %v560 = vmul.f32 %v545, 1.442695
      %v561 = vpow.pop %v560
      %563 = vset.pattern.permute.xlu0 0
      %564 = vperm.xlu0 %563, %v530
      %v565 = vpop.permute.xlu0 %564
      %568 = vset.pattern.permute.xlu0 0
      %569 = vperm.xlu0 %568, %v531
      %v570 = vpop.permute.xlu0 %569
      %573 = vset.pattern.permute.xlu0 0
      %574 = vperm.xlu0 %573, %v532
      %v575 = vpop.permute.xlu0 %574
      %578 = vset.pattern.permute.xlu0 0
      %579 = vperm.xlu0 %578, %v533
      %v580 = vpop.permute.xlu0 %579
      %583 = vset.pattern.permute.xlu0 0
      %584 = vperm.xlu0 %583, %v534
      %v585 = vpop.permute.xlu0 %584
      %588 = vset.pattern.permute.xlu0 0
      %589 = vperm.xlu0 %588, %v535
      %v590 = vpop.permute.xlu0 %589
      %593 = vset.pattern.permute.xlu0 0
      %594 = vperm.xlu0 %593, %v536
      %v595 = vpop.permute.xlu0 %594
      %598 = vset.pattern.permute.xlu0 0
      %599 = vperm.xlu0 %598, %v537
      %v600 = vpop.permute.xlu0 %599
      %v602 = vsub.f32 %v489, %v565
      %v603 = vsub.f32 %v490, %v570
      %v604 = vsub.f32 %v491, %v575
      %v605 = vsub.f32 %v492, %v580
      %v606 = vsub.f32 %v493, %v585
      %v607 = vsub.f32 %v494, %v590
      %v608 = vsub.f32 %v495, %v595
      %v609 = vsub.f32 %v496, %v600
      %v610 = vmul.f32 %v602, 1.442695
      %v611 = vpow.pop %v610
      %v612 = vmul.f32 %v603, 1.442695
      %v613 = vpow.pop %v612
      %v614 = vmul.f32 %v604, 1.442695
      %v615 = vpow.pop %v614
      %v616 = vmul.f32 %v605, 1.442695
      %v617 = vpow.pop %v616
      %v618 = vmul.f32 %v606, 1.442695
      %v619 = vpow.pop %v618
      %v620 = vmul.f32 %v607, 1.442695
      %v621 = vpow.pop %v620
      %v622 = vmul.f32 %v608, 1.442695
      %v623 = vpow.pop %v622
      %v624 = vmul.f32 %v609, 1.442695
      %v625 = vpow.pop %v624
      %v626 = vld [vmem:[#allocation3] sm:$0xff]
      %v627 = vld [vmem:[#allocation3 + $0x8] sm:$0xff]
      %v628 = vld [vmem:[#allocation3 + $0x10] sm:$0xff]
      %v629 = vld [vmem:[#allocation3 + $0x18] sm:$0xff]
      %v630 = vld [vmem:[#allocation3 + $0x20] sm:$0xff]
      %v631 = vld [vmem:[#allocation3 + $0x28] sm:$0xff]
      %v632 = vld [vmem:[#allocation3 + $0x30] sm:$0xff]
      %v633 = vld [vmem:[#allocation3 + $0x38] sm:$0xff]
      %v634 = vmul.f32 %v547, %v626
      %v635 = vmul.f32 %v549, %v627
      %v636 = vmul.f32 %v551, %v628
      %v637 = vmul.f32 %v553, %v629
      %v638 = vmul.f32 %v555, %v630
      %v639 = vmul.f32 %v557, %v631
      %v640 = vmul.f32 %v559, %v632
      %v641 = vmul.f32 %v561, %v633
      %v642 = vsel %vm505, %v611, 0.0
      %643 = vadd.xlane.f32.xlu0 %v642
      %v644 = vpop.xlane.xlu0 %643
      %v645 = vsel %vm505, %v613, 0.0
      %646 = vadd.xlane.f32.xlu0 %v645
      %v647 = vpop.xlane.xlu0 %646
      %v648 = vsel %vm505, %v615, 0.0
      %649 = vadd.xlane.f32.xlu0 %v648
      %v650 = vpop.xlane.xlu0 %649
      %v651 = vsel %vm505, %v617, 0.0
      %652 = vadd.xlane.f32.xlu0 %v651
      %v653 = vpop.xlane.xlu0 %652
      %v654 = vsel %vm505, %v619, 0.0
      %655 = vadd.xlane.f32.xlu0 %v654
      %v656 = vpop.xlane.xlu0 %655
      %v657 = vsel %vm505, %v621, 0.0
      %658 = vadd.xlane.f32.xlu0 %v657
      %v659 = vpop.xlane.xlu0 %658
      %v660 = vsel %vm505, %v623, 0.0
      %661 = vadd.xlane.f32.xlu0 %v660
      %v662 = vpop.xlane.xlu0 %661
      %v663 = vsel %vm505, %v625, 0.0
      %664 = vadd.xlane.f32.xlu0 %v663
      %v665 = vpop.xlane.xlu0 %664
      %v666 = vadd.f32 %v634, %v644
      %v667 = vadd.f32 %v635, %v647
      %v668 = vadd.f32 %v636, %v650
      %v669 = vadd.f32 %v637, %v653
      %v670 = vadd.f32 %v638, %v656
      %v671 = vadd.f32 %v639, %v659
      %v672 = vadd.f32 %v640, %v662
      %v673 = vadd.f32 %v641, %v665
      %vm674 = vcmask 7168
      %675 = vst.msk [vmem:[#allocation3] sm:$0xff] %vm674, %v666
      %676 = vst.msk [vmem:[#allocation3 + $0x8] sm:$0xff] %vm674, %v667
      %677 = vst.msk [vmem:[#allocation3 + $0x10] sm:$0xff] %vm674, %v668
      %678 = vst.msk [vmem:[#allocation3 + $0x18] sm:$0xff] %vm674, %v669
      %679 = vst.msk [vmem:[#allocation3 + $0x20] sm:$0xff] %vm674, %v670
      %680 = vst.msk [vmem:[#allocation3 + $0x28] sm:$0xff] %vm674, %v671
      %681 = vst.msk [vmem:[#allocation3 + $0x30] sm:$0xff] %vm674, %v672
      %682 = vst.msk [vmem:[#allocation3 + $0x38] sm:$0xff] %vm674, %v673
      %v683 = vld [vmem:[#allocation4] sm:$0xff]
      %v684 = vld [vmem:[#allocation4 + $0x8] sm:$0xff]
      %v685 = vld [vmem:[#allocation4 + $0x10] sm:$0xff]
      %v686 = vld [vmem:[#allocation4 + $0x18] sm:$0xff]
      %v687 = vld [vmem:[#allocation4 + $0x20] sm:$0xff]
      %v688 = vld [vmem:[#allocation4 + $0x28] sm:$0xff]
      %v689 = vld [vmem:[#allocation4 + $0x30] sm:$0xff]
      %v690 = vld [vmem:[#allocation4 + $0x38] sm:$0xff]
      %692 = vset.pattern.permute.xlu0 0
      %693 = vperm.xlu0 %692, %v547
      %v694 = vpop.permute.xlu0 %693
      %697 = vset.pattern.permute.xlu0 0
      %698 = vperm.xlu0 %697, %v549
      %v699 = vpop.permute.xlu0 %698
      %702 = vset.pattern.permute.xlu0 0
      %703 = vperm.xlu0 %702, %v551
      %v704 = vpop.permute.xlu0 %703
      %707 = vset.pattern.permute.xlu0 0
      %708 = vperm.xlu0 %707, %v553
      %v709 = vpop.permute.xlu0 %708
      %712 = vset.pattern.permute.xlu0 0
      %713 = vperm.xlu0 %712, %v555
      %v714 = vpop.permute.xlu0 %713
      %717 = vset.pattern.permute.xlu0 0
      %718 = vperm.xlu0 %717, %v557
      %v719 = vpop.permute.xlu0 %718
      %722 = vset.pattern.permute.xlu0 0
      %723 = vperm.xlu0 %722, %v559
      %v724 = vpop.permute.xlu0 %723
      %727 = vset.pattern.permute.xlu0 0
      %728 = vperm.xlu0 %727, %v561
      %v729 = vpop.permute.xlu0 %728
      %v731 = vmul.f32 %v694, %v683
      %v732 = vmul.f32 %v699, %v684
      %v733 = vmul.f32 %v704, %v685
      %v734 = vmul.f32 %v709, %v686
      %v735 = vmul.f32 %v714, %v687
      %v736 = vmul.f32 %v719, %v688
      %v737 = vmul.f32 %v724, %v689
      %v738 = vmul.f32 %v729, %v690
      %v739 = vld [vmem:[%s277] sm:$0xff]
      %v740 = vld [vmem:[%s277 + $0x8] sm:$0xff]
      %v741 = vld [vmem:[%s277 + $0x10] sm:$0xff]
      %v742 = vld [vmem:[%s277 + $0x18] sm:$0xff]
      %v743 = vld [vmem:[%s277 + $0x20] sm:$0xff]
      %v744 = vld [vmem:[%s277 + $0x28] sm:$0xff]
      %v745 = vld [vmem:[%s277 + $0x30] sm:$0xff]
      %v746 = vld [vmem:[%s277 + $0x38] sm:$0xff]
      %v748 = vsel %vm505, %v611, 0
      %v751 = vsel %vm505, %v613, 0
      %v754 = vsel %vm505, %v615, 0
      %v757 = vsel %vm505, %v617, 0
      %v760 = vsel %vm505, %v619, 0
      %v763 = vsel %vm505, %v621, 0
      %v766 = vsel %vm505, %v623, 0
      %v769 = vsel %vm505, %v625, 0
      %771 = vmatprep.subr.mxu0 0.0
      %772 = vmatpush1.msra.mxu0 0.0
      %773 = vmatprep.subr.mxu0 0.0
      %774 = vmatpush1.msra.mxu0 0.0
      %775 = vmatprep.subr.mxu0 0.0
      %776 = vmatpush1.msra.mxu0 0.0
      %777 = vmatprep.subr.mxu0 0.0
      %778 = vmatpush1.msra.mxu0 0.0
      %779 = vmatprep.subr.mxu0 0.0
      %780 = vmatpush1.msra.mxu0 0.0
      %781 = vmatprep.subr.mxu0 0.0
      %782 = vmatpush1.msra.mxu0 0.0
      %783 = vmatprep.subr.mxu0 0.0
      %784 = vmatpush1.msra.mxu0 0.0
      %785 = vmatprep.subr.mxu0 0.0
      %786 = vmatpush1.msra.mxu0 0.0
      %787 = vmatprep.subr.mxu0 0.0
      %788 = vmatpush1.msra.mxu0 %v746
      %789 = vmatprep.subr.mxu0 0.0
      %790 = vmatpush1.msra.mxu0 %v745
      %791 = vmatprep.subr.mxu0 0.0
      %792 = vmatpush1.msra.mxu0 %v744
      %793 = vmatprep.subr.mxu0 0.0
      %794 = vmatpush1.msra.mxu0 %v743
      %795 = vmatprep.subr.mxu0 0.0
      %796 = vmatpush1.msra.mxu0 %v742
      %797 = vmatprep.subr.mxu0 0.0
      %798 = vmatpush1.msra.mxu0 %v741
      %799 = vmatprep.subr.mxu0 0.0
      %800 = vmatpush1.msra.mxu0 %v740
      %801 = vmatprep.subr.mxu0 0.0
      %802 = vmatpush1.msra.mxu0 %v739
      %803 = vmatprep.subr.mxu0 0.0
      %804 = vmatpush2.msra.mxu0 0.0
      %805 = vmatprep.subr.mxu0 0.0
      %806 = vmatpush2.msra.mxu0 0.0
      %807 = vmatprep.subr.mxu0 0.0
      %808 = vmatpush2.msra.mxu0 0.0
      %809 = vmatprep.subr.mxu0 0.0
      %810 = vmatpush2.msra.mxu0 0.0
      %811 = vmatprep.subr.mxu0 0.0
      %812 = vmatpush2.msra.mxu0 0.0
      %813 = vmatprep.subr.mxu0 0.0
      %814 = vmatpush2.msra.mxu0 0.0
      %815 = vmatprep.subr.mxu0 0.0
      %816 = vmatpush2.msra.mxu0 0.0
      %817 = vmatprep.subr.mxu0 0.0
      %818 = vmatpush2.msra.mxu0 0.0
      %819 = vmatprep.subr.mxu0 0.0
      %820 = vmatpush2.msra.mxu0 0.0
      %821 = vmatprep.subr.mxu0 0.0
      %822 = vmatpush2.msra.mxu0 0.0
      %823 = vmatprep.subr.mxu0 0.0
      %824 = vmatpush2.msra.mxu0 0.0
      %825 = vmatprep.subr.mxu0 0.0
      %826 = vmatpush2.msra.mxu0 0.0
      %827 = vmatprep.subr.mxu0 0.0
      %828 = vmatpush2.msra.mxu0 0.0
      %829 = vmatprep.subr.mxu0 0.0
      %830 = vmatpush2.msra.mxu0 0.0
      %831 = vmatprep.subr.mxu0 0.0
      %832 = vmatpush2.msra.mxu0 0.0
      %833 = vmatprep.subr.mxu0 0.0
      %834 = vmatpush2.msra.mxu0 0.0
      %835 = vmatprep.mubr.f32.mxu0 0.0
      %836 = vmatmul.mubr.f32.gmra.mxu0 %v748
      %v837 = vpop.f32.mrf.mxu0
      %v838 = vadd.f32 0.0, %v837
      %v839 = vpop.f32.mrf.mxu0
      %840 = vmatprep.mubr.f32.mxu0 0.0
      %841 = vmatmul.mubr.f32.gmra.mxu0 %v751
      %v842 = vpop.f32.mrf.mxu0
      %v843 = vadd.f32 0.0, %v842
      %v844 = vpop.f32.mrf.mxu0
      %845 = vmatprep.mubr.f32.mxu0 0.0
      %846 = vmatmul.mubr.f32.gmra.mxu0 %v754
      %v847 = vpop.f32.mrf.mxu0
      %v848 = vadd.f32 0.0, %v847
      %v849 = vpop.f32.mrf.mxu0
      %850 = vmatprep.mubr.f32.mxu0 0.0
      %851 = vmatmul.mubr.f32.gmra.mxu0 %v757
      %v852 = vpop.f32.mrf.mxu0
      %v853 = vadd.f32 0.0, %v852
      %v854 = vpop.f32.mrf.mxu0
      %855 = vmatprep.mubr.f32.mxu0 0.0
      %856 = vmatmul.mubr.f32.gmra.mxu0 %v760
      %v857 = vpop.f32.mrf.mxu0
      %v858 = vadd.f32 0.0, %v857
      %v859 = vpop.f32.mrf.mxu0
      %860 = vmatprep.mubr.f32.mxu0 0.0
      %861 = vmatmul.mubr.f32.gmra.mxu0 %v763
      %v862 = vpop.f32.mrf.mxu0
      %v863 = vadd.f32 0.0, %v862
      %v864 = vpop.f32.mrf.mxu0
      %865 = vmatprep.mubr.f32.mxu0 0.0
      %866 = vmatmul.mubr.f32.gmra.mxu0 %v766
      %v867 = vpop.f32.mrf.mxu0
      %v868 = vadd.f32 0.0, %v867
      %v869 = vpop.f32.mrf.mxu0
      %870 = vmatprep.mubr.f32.mxu0 0.0
      %871 = vmatmul.mubr.f32.gmra.mxu0 %v769
      %v872 = vpop.f32.mrf.mxu0
      %v873 = vadd.f32 0.0, %v872
      %v874 = vpop.f32.mrf.mxu0
      %875 = vdwg.mxu0
      %v876 = vadd.f32 %v731, %v838
      %v877 = vadd.f32 %v732, %v843
      %v878 = vadd.f32 %v733, %v848
      %v879 = vadd.f32 %v734, %v853
      %v880 = vadd.f32 %v735, %v858
      %v881 = vadd.f32 %v736, %v863
      %v882 = vadd.f32 %v737, %v868
      %v883 = vadd.f32 %v738, %v873
      %884 = vst.msk [vmem:[#allocation4] sm:$0xff] %vm335, %v876
      %885 = vst.msk [vmem:[#allocation4 + $0x8] sm:$0xff] %vm335, %v877
      %886 = vst.msk [vmem:[#allocation4 + $0x10] sm:$0xff] %vm335, %v878
      %887 = vst.msk [vmem:[#allocation4 + $0x18] sm:$0xff] %vm335, %v879
      %888 = vst.msk [vmem:[#allocation4 + $0x20] sm:$0xff] %vm335, %v880
      %889 = vst.msk [vmem:[#allocation4 + $0x28] sm:$0xff] %vm335, %v881
      %890 = vst.msk [vmem:[#allocation4 + $0x30] sm:$0xff] %vm335, %v882
      %891 = vst.msk [vmem:[#allocation4 + $0x38] sm:$0xff] %vm335, %v883
      %892 = vst.msk [vmem:[#allocation2] sm:$0xff] %vm674, %v530
      %893 = vst.msk [vmem:[#allocation2 + $0x8] sm:$0xff] %vm674, %v531
      %894 = vst.msk [vmem:[#allocation2 + $0x10] sm:$0xff] %vm674, %v532
      %895 = vst.msk [vmem:[#allocation2 + $0x18] sm:$0xff] %vm674, %v533
      %896 = vst.msk [vmem:[#allocation2 + $0x20] sm:$0xff] %vm674, %v534
      %897 = vst.msk [vmem:[#allocation2 + $0x28] sm:$0xff] %vm674, %v535
      %898 = vst.msk [vmem:[#allocation2 + $0x30] sm:$0xff] %vm674, %v536
      %899 = vst.msk [vmem:[#allocation2 + $0x38] sm:$0xff] %vm674, %v537
      // Predicated region
      $region37: #{vision_transformer_block.6} parent=31 // pred_check
        %p900 = pneg %p289
      $region38: #{vision_transformer_block.6} parent=31 // pred_check_branch
        %902 = sbr.rel (%p900) target = $region40
      $region39: #{vision_transformer_block.6} parent=31 // pred_region
        %v903 = vld [vmem:[#allocation4] sm:$0xff]
        %v904 = vld [vmem:[#allocation4 + $0x8] sm:$0xff]
        %v905 = vld [vmem:[#allocation4 + $0x10] sm:$0xff]
        %v906 = vld [vmem:[#allocation4 + $0x18] sm:$0xff]
        %v907 = vld [vmem:[#allocation4 + $0x20] sm:$0xff]
        %v908 = vld [vmem:[#allocation4 + $0x28] sm:$0xff]
        %v909 = vld [vmem:[#allocation4 + $0x30] sm:$0xff]
        %v910 = vld [vmem:[#allocation4 + $0x38] sm:$0xff]
        %v911 = vld [vmem:[#allocation3] sm:$0xff]
        %v912 = vld [vmem:[#allocation3 + $0x8] sm:$0xff]
        %v913 = vld [vmem:[#allocation3 + $0x10] sm:$0xff]
        %v914 = vld [vmem:[#allocation3 + $0x18] sm:$0xff]
        %v915 = vld [vmem:[#allocation3 + $0x20] sm:$0xff]
        %v916 = vld [vmem:[#allocation3 + $0x28] sm:$0xff]
        %v917 = vld [vmem:[#allocation3 + $0x30] sm:$0xff]
        %v918 = vld [vmem:[#allocation3 + $0x38] sm:$0xff]
        %920 = vset.pattern.permute.xlu0 0
        %921 = vperm.xlu0 %920, %v911
        %v922 = vpop.permute.xlu0 %921
        %925 = vset.pattern.permute.xlu0 0
        %926 = vperm.xlu0 %925, %v912
        %v927 = vpop.permute.xlu0 %926
        %930 = vset.pattern.permute.xlu0 0
        %931 = vperm.xlu0 %930, %v913
        %v932 = vpop.permute.xlu0 %931
        %935 = vset.pattern.permute.xlu0 0
        %936 = vperm.xlu0 %935, %v914
        %v937 = vpop.permute.xlu0 %936
        %940 = vset.pattern.permute.xlu0 0
        %941 = vperm.xlu0 %940, %v915
        %v942 = vpop.permute.xlu0 %941
        %945 = vset.pattern.permute.xlu0 0
        %946 = vperm.xlu0 %945, %v916
        %v947 = vpop.permute.xlu0 %946
        %950 = vset.pattern.permute.xlu0 0
        %951 = vperm.xlu0 %950, %v917
        %v952 = vpop.permute.xlu0 %951
        %955 = vset.pattern.permute.xlu0 0
        %956 = vperm.xlu0 %955, %v918
        %v957 = vpop.permute.xlu0 %956
        %v959 = vrcp.pop %v922
        %v960 = vmul.f32 %v903, %v959
        %v961 = vrcp.pop %v927
        %v962 = vmul.f32 %v904, %v961
        %v963 = vrcp.pop %v932
        %v964 = vmul.f32 %v905, %v963
        %v965 = vrcp.pop %v937
        %v966 = vmul.f32 %v906, %v965
        %v967 = vrcp.pop %v942
        %v968 = vmul.f32 %v907, %v967
        %v969 = vrcp.pop %v947
        %v970 = vmul.f32 %v908, %v969
        %v971 = vrcp.pop %v952
        %v972 = vmul.f32 %v909, %v971
        %v973 = vrcp.pop %v957
        %v974 = vmul.f32 %v910, %v973
        %975 = vst.msk [vmem:[%s287] sm:$0xff] %vm335, %v960
        %976 = vst.msk [vmem:[%s287 + $0x8] sm:$0xff] %vm335, %v962
        %977 = vst.msk [vmem:[%s287 + $0x10] sm:$0xff] %vm335, %v964
        %978 = vst.msk [vmem:[%s287 + $0x18] sm:$0xff] %vm335, %v966
        %979 = vst.msk [vmem:[%s287 + $0x20] sm:$0xff] %vm335, %v968
        %980 = vst.msk [vmem:[%s287 + $0x28] sm:$0xff] %vm335, %v970
        %981 = vst.msk [vmem:[%s287 + $0x30] sm:$0xff] %vm335, %v972
        %982 = vst.msk [vmem:[%s287 + $0x38] sm:$0xff] %vm335, %v974
      $region40: #{vision_transformer_block.6} parent=31 // pred_fallthru
        _
      %s983 = smul.u32 8, %s20
      %p984 = scmp.lt.s32.totalorder %s19, 7
      %s985 = scalar_select %p984, %s19, 7
      %p986 = scmp.lt.s32.totalorder %s983, 7
      %s987 = scalar_select %p986, %s983, 7
      %s988 = smul.addr %s985, 8
      %s989 = sadd.s32 %s987, %s988
      %s990 = smul.addr %s989, 8
      %s991 = scalar_lea.vmem %s3, %s990
      // Predicated region
      $region41: #{vision_transformer_block.6} parent=31 // pred_check
        %p992 = pneg %p137
      $region42: #{vision_transformer_block.6} parent=31 // pred_check_branch
        %994 = sbr.rel (%p992) target = $region44
      $region43: #{vision_transformer_block.6} parent=31 // pred_region
        %s995 = smul.u32 8, %s20
      $region44: #{vision_transformer_block.6} parent=31 // pred_fallthru
        _
    $region32: #{vision_transformer_block.6} parent=5 // pred_fallthru
      _
    %p996 = scmp.le.s32.totalorder 2, %s9
    // Predicated region
    $region45: #{vision_transformer_block.6} parent=5 // pred_check
      %p997 = pneg %p996
    $region46: #{vision_transformer_block.6} parent=5 // pred_check_branch
      %999 = sbr.rel (%p997) target = $region48
    $region47: #{vision_transformer_block.6} parent=5 // pred_region
      %s1000 = ssub.s32 %s9, 2
      // Predicated region
      $region49: #{vision_transformer_block.6} parent=47 // pred_check
        %p1001 = pneg %p143
      $region50: #{vision_transformer_block.6} parent=47 // pred_check_branch
        %1003 = sbr.rel (%p1001) target = $region52
      $region51: #{vision_transformer_block.6} parent=47 // pred_region
        %s1004 = smul.u32 8, %s23
        %p1005 = scmp.lt.s32.totalorder %s22, 7
        %s1006 = scalar_select %p1005, %s22, 7
        %p1007 = scmp.lt.s32.totalorder %s1004, 7
        %s1008 = scalar_select %p1007, %s1004, 7
        %s1009 = smul.addr %s1006, 8
        %s1010 = sadd.s32 %s1008, %s1009
        %s1011 = smul.addr %s1010, 8
        %s1012 = scalar_lea.vmem %s3, %s1011
      $region52: #{vision_transformer_block.6} parent=47 // pred_fallthru
        _
    $region48: #{vision_transformer_block.6} parent=5 // pred_fallthru
      _
  $region6: #{vision_transformer_block.6} parent=0 // loop_footer
    %s13 = sadd.s32 1, %s9
  $region7: #{vision_transformer_block.6} parent=0 // loop_footer_branch
    %8 = sbr.rel target = $region3
  $region8: #{vision_transformer_block.6} parent=0 // loop_exit
    _

// kernel: vision_transformer_block.8
$region0: #{vision_transformer_block.8}
  #allocation0 [shape = 'u32[]', space=smem, size = 0x4, offset = 0x4, fixed_abs, tag = 'smem constant byte address 0x4 - core index']
  #allocation1 [shape = 'u32[144,128]{1,0:T(1,128)}', space=vmem, size = 0x12000, scoped, tag = 'internal scratch']
  %s0 = inlined_call_operand.vmem [shape: f32[2,64,32], index: 0, kind: input, shape index: {}]
  %s1 = inlined_call_operand.vmem [shape: f32[1,32], index: 1, kind: input, shape index: {}]
  %s2 = inlined_call_operand.vmem [shape: f32[1,32], index: 2, kind: input, shape index: {}]
  %s3 = inlined_call_operand.vmem [shape: f32[32,128], index: 3, kind: input, shape index: {}]
  %s4 = inlined_call_operand.vmem [shape: f32[1,128], index: 4, kind: input, shape index: {}]
  %s5 = inlined_call_operand.vmem [shape: f32[2,64,128], index: 5, kind: output, shape index: {}]
  %s6 = sld [smem:[#allocation0]]
  $region53: #{vision_transformer_block.8} parent=0
    _
  %s8 = ssub.s32 1, %s6
  %s9 = scalar_select 0, %s8, %s6
  loop: start=0, step=1, limit=4
  $region2: #{vision_transformer_block.8} parent=0 // loop_pre_header
    _
  $region3: #{vision_transformer_block.8} parent=0 // loop_header
    %s11 = sphi 0, %s15
    %p12 = scmp.ge.s32.totalorder %s11, 4
    %s18 = sphi 0, %s30
    %s19 = sphi 0, %s26
    %s20 = sphi 0, %s18
    %s21 = sphi 0, %s19
    %s22 = sphi 0, %s20
    %s23 = sphi 0, %s21
    %s35 = sphi 0, %s37
    %s38 = sphi 0, %s35
    %s39 = sphi 0, %s38
    %s55 = sphi 0, %s39
    %s59 = sphi 0, %s59
    %s61 = sphi 0, %s59
    %s62 = sphi 0, %s61
    %s76 = sphi 0, %s62
    %s80 = sphi 0, %s80
    %s82 = sphi 0, %s80
    %s83 = sphi 0, %s82
    %s97 = sphi 0, %s83
    %s101 = sphi 0, %s101
    %s103 = sphi 0, %s101
    %s104 = sphi 0, %s103
    %s118 = sphi 0, %s104
    %s122 = sphi 0, %s122
    %s124 = sphi 0, %s122
    %s125 = sphi 0, %s124
    %s139 = sphi 0, %s125
    %s147 = sphi 0, %s149
    %s150 = sphi 0, %s147
    %s151 = sphi 0, %s150
    %s167 = sphi 0, %s151
  $region4: #{vision_transformer_block.8} parent=0 // loop_header_branch
    %14 = sbr.rel (%p12) target = $region8
  $region5: #{vision_transformer_block.8} parent=0 // loop_body
    %s16 = ssub.s32 %s11, 1
    %s17 = ssub.s32 %s11, 2
    %s24 = sadd.s32 1, %s19
    %p25 = scmp.ge.s32.totalorder %s24, 1
    %s26 = scalar_select %p25, 0, %s24
    %s27 = sadd.s32 1, %s18
    %s28 = scalar_select %p25, %s27, %s18
    %p29 = scmp.ge.s32.totalorder %s28, 2
    %s30 = scalar_select %p29, 0, %s28
    %s31 = ssub.s32 %s18, %s30
    %s32 = ssub.s32 %s19, %s26
    %s33 = sor.u32 %s31, %s32
    %p34 = scmp.eq.s32.totalorder %s33, 0
    %s36 = sadd.s32 %s35, 1
    %s37 = scalar_select %p34, %s35, %s36
    %p40 = pneg %p34
    %p41 = scmp.eq.s32.totalorder %s11, 1
    %p42 = por %p40, %p41
    %p43 = scmp.ne.s32.totalorder %s35, %s38
    %p44 = scmp.eq.s32.totalorder %s11, 0
    %p45 = por %p43, %p44
    %p46 = scmp.ne.s32.totalorder %s35, %s38
    %p47 = scmp.eq.s32.totalorder %s16, 1
    %p48 = por %p46, %p47
    %p49 = scmp.ne.s32.totalorder %s38, %s39
    %p50 = scmp.eq.s32.totalorder %s16, 0
    %p51 = por %p49, %p50
    %p52 = scmp.ne.s32.totalorder %s38, %s39
    %p53 = scmp.eq.s32.totalorder %s17, 1
    %p54 = por %p52, %p53
    %p56 = scmp.ne.s32.totalorder %s39, %s55
    %p57 = scmp.eq.s32.totalorder %s17, 0
    %p58 = por %p56, %p57
    %s60 = sadd.s32 %s59, 1
    %p63 = scmp.eq.s32.totalorder %s11, 1
    %p64 = scmp.ne.s32.totalorder %s59, %s61
    %p65 = scmp.eq.s32.totalorder %s11, 0
    %p66 = por %p64, %p65
    %p67 = scmp.ne.s32.totalorder %s59, %s61
    %p68 = scmp.eq.s32.totalorder %s16, 1
    %p69 = por %p67, %p68
    %p70 = scmp.ne.s32.totalorder %s61, %s62
    %p71 = scmp.eq.s32.totalorder %s16, 0
    %p72 = por %p70, %p71
    %p73 = scmp.ne.s32.totalorder %s61, %s62
    %p74 = scmp.eq.s32.totalorder %s17, 1
    %p75 = por %p73, %p74
    %p77 = scmp.ne.s32.totalorder %s62, %s76
    %p78 = scmp.eq.s32.totalorder %s17, 0
    %p79 = por %p77, %p78
    %s81 = sadd.s32 %s80, 1
    %p84 = scmp.eq.s32.totalorder %s11, 1
    %p85 = scmp.ne.s32.totalorder %s80, %s82
    %p86 = scmp.eq.s32.totalorder %s11, 0
    %p87 = por %p85, %p86
    %p88 = scmp.ne.s32.totalorder %s80, %s82
    %p89 = scmp.eq.s32.totalorder %s16, 1
    %p90 = por %p88, %p89
    %p91 = scmp.ne.s32.totalorder %s82, %s83
    %p92 = scmp.eq.s32.totalorder %s16, 0
    %p93 = por %p91, %p92
    %p94 = scmp.ne.s32.totalorder %s82, %s83
    %p95 = scmp.eq.s32.totalorder %s17, 1
    %p96 = por %p94, %p95
    %p98 = scmp.ne.s32.totalorder %s83, %s97
    %p99 = scmp.eq.s32.totalorder %s17, 0
    %p100 = por %p98, %p99
    %s102 = sadd.s32 %s101, 1
    %p105 = scmp.eq.s32.totalorder %s11, 1
    %p106 = scmp.ne.s32.totalorder %s101, %s103
    %p107 = scmp.eq.s32.totalorder %s11, 0
    %p108 = por %p106, %p107
    %p109 = scmp.ne.s32.totalorder %s101, %s103
    %p110 = scmp.eq.s32.totalorder %s16, 1
    %p111 = por %p109, %p110
    %p112 = scmp.ne.s32.totalorder %s103, %s104
    %p113 = scmp.eq.s32.totalorder %s16, 0
    %p114 = por %p112, %p113
    %p115 = scmp.ne.s32.totalorder %s103, %s104
    %p116 = scmp.eq.s32.totalorder %s17, 1
    %p117 = por %p115, %p116
    %p119 = scmp.ne.s32.totalorder %s104, %s118
    %p120 = scmp.eq.s32.totalorder %s17, 0
    %p121 = por %p119, %p120
    %s123 = sadd.s32 %s122, 1
    %p126 = scmp.eq.s32.totalorder %s11, 1
    %p127 = scmp.ne.s32.totalorder %s122, %s124
    %p128 = scmp.eq.s32.totalorder %s11, 0
    %p129 = por %p127, %p128
    %p130 = scmp.ne.s32.totalorder %s122, %s124
    %p131 = scmp.eq.s32.totalorder %s16, 1
    %p132 = por %p130, %p131
    %p133 = scmp.ne.s32.totalorder %s124, %s125
    %p134 = scmp.eq.s32.totalorder %s16, 0
    %p135 = por %p133, %p134
    %p136 = scmp.ne.s32.totalorder %s124, %s125
    %p137 = scmp.eq.s32.totalorder %s17, 1
    %p138 = por %p136, %p137
    %p140 = scmp.ne.s32.totalorder %s125, %s139
    %p141 = scmp.eq.s32.totalorder %s17, 0
    %p142 = por %p140, %p141
    %s143 = ssub.s32 %s18, %s30
    %s144 = ssub.s32 %s19, %s26
    %s145 = sor.u32 %s143, %s144
    %p146 = scmp.eq.s32.totalorder %s145, 0
    %s148 = sadd.s32 %s147, 1
    %s149 = scalar_select %p146, %s147, %s148
    %p152 = pneg %p146
    %p153 = scmp.eq.s32.totalorder %s11, 1
    %p154 = por %p152, %p153
    %p155 = scmp.ne.s32.totalorder %s147, %s150
    %p156 = scmp.eq.s32.totalorder %s11, 0
    %p157 = por %p155, %p156
    %p158 = scmp.ne.s32.totalorder %s147, %s150
    %p159 = scmp.eq.s32.totalorder %s16, 1
    %p160 = por %p158, %p159
    %p161 = scmp.ne.s32.totalorder %s150, %s151
    %p162 = scmp.eq.s32.totalorder %s16, 0
    %p163 = por %p161, %p162
    %p164 = scmp.ne.s32.totalorder %s150, %s151
    %p165 = scmp.eq.s32.totalorder %s17, 1
    %p166 = por %p164, %p165
    %p168 = scmp.ne.s32.totalorder %s151, %s167
    %p169 = scmp.eq.s32.totalorder %s17, 0
    %p170 = por %p168, %p169
    %p171 = scmp.le.s32.totalorder 1, %s11
    %p172 = scmp.lt.s32.totalorder %s11, 3
    %p173 = pnand %p171, %p172
    %p174 = pneg %p173
    // Predicated region
    $region9: #{vision_transformer_block.8} parent=5 // pred_check
      _
    $region10: #{vision_transformer_block.8} parent=5 // pred_check_branch
      %176 = sbr.rel (%p173) target = $region12
    $region11: #{vision_transformer_block.8} parent=5 // pred_region
      %s177 = ssub.s32 %s11, 1
      // Predicated region
      $region13: #{vision_transformer_block.8} parent=11 // pred_check
        %p178 = pneg %p72
      $region14: #{vision_transformer_block.8} parent=11 // pred_check_branch
        %180 = sbr.rel (%p178) target = $region16
      $region15: #{vision_transformer_block.8} parent=11 // pred_region
        _
      $region16: #{vision_transformer_block.8} parent=11 // pred_fallthru
        _
      // Predicated region
      $region17: #{vision_transformer_block.8} parent=11 // pred_check
        %p181 = pneg %p93
      $region18: #{vision_transformer_block.8} parent=11 // pred_check_branch
        %183 = sbr.rel (%p181) target = $region20
      $region19: #{vision_transformer_block.8} parent=11 // pred_region
        _
      $region20: #{vision_transformer_block.8} parent=11 // pred_fallthru
        _
      // Predicated region
      $region21: #{vision_transformer_block.8} parent=11 // pred_check
        %p184 = pneg %p114
      $region22: #{vision_transformer_block.8} parent=11 // pred_check_branch
        %186 = sbr.rel (%p184) target = $region24
      $region23: #{vision_transformer_block.8} parent=11 // pred_region
        _
      $region24: #{vision_transformer_block.8} parent=11 // pred_fallthru
        _
      // Predicated region
      $region25: #{vision_transformer_block.8} parent=11 // pred_check
        %p187 = pneg %p135
      $region26: #{vision_transformer_block.8} parent=11 // pred_check_branch
        %189 = sbr.rel (%p187) target = $region28
      $region27: #{vision_transformer_block.8} parent=11 // pred_region
        _
      $region28: #{vision_transformer_block.8} parent=11 // pred_fallthru
        _
    $region12: #{vision_transformer_block.8} parent=5 // pred_fallthru
      _
    %p190 = scmp.lt.s32.totalorder %s11, 2
    // Predicated region
    $region29: #{vision_transformer_block.8} parent=5 // pred_check
      %p191 = pneg %p190
    $region30: #{vision_transformer_block.8} parent=5 // pred_check_branch
      %193 = sbr.rel (%p191) target = $region32
    $region31: #{vision_transformer_block.8} parent=5 // pred_region
      // Predicated region
      $region33: #{vision_transformer_block.8} parent=31 // pred_check
        %p194 = pneg %p45
      $region34: #{vision_transformer_block.8} parent=31 // pred_check_branch
        %196 = sbr.rel (%p194) target = $region36
      $region35: #{vision_transformer_block.8} parent=31 // pred_region
        %s197 = smul.u32 8, %s19
        %p198 = scmp.lt.s32.totalorder %s18, 1
        %s199 = scalar_select %p198, %s18, 1
        %p200 = scmp.lt.s32.totalorder %s197, 7
        %s201 = scalar_select %p200, %s197, 7
        %s202 = smul.addr %s199, 8
        %s203 = sadd.s32 %s201, %s202
        %s204 = smul.addr %s203, 8
        %s205 = scalar_lea.vmem %s0, %s204
        %s206 = smul.u32 8, %s19
      $region36: #{vision_transformer_block.8} parent=31 // pred_fallthru
        _
    $region32: #{vision_transformer_block.8} parent=5 // pred_fallthru
      _
    %p207 = scmp.le.s32.totalorder 1, %s11
    %p208 = scmp.lt.s32.totalorder %s11, 3
    %p209 = pnand %p207, %p208
    %p210 = pneg %p209
    // Predicated region
    $region37: #{vision_transformer_block.8} parent=5 // pred_check
      _
    $region38: #{vision_transformer_block.8} parent=5 // pred_check_branch
      %212 = sbr.rel (%p209) target = $region40
    $region39: #{vision_transformer_block.8} parent=5 // pred_region
      %s213 = ssub.s32 %s11, 1
      %s214 = smul.u32 8, %s21
      %p215 = scmp.lt.s32.totalorder %s20, 1
      %s216 = scalar_select %p215, %s20, 1
      %p217 = scmp.lt.s32.totalorder %s214, 7
      %s218 = scalar_select %p217, %s214, 7
      %s219 = smul.addr %s216, 8
      %s220 = sadd.s32 %s218, %s219
      %s221 = smul.addr %s220, 8
      %s222 = scalar_lea.vmem %s0, %s221
      %p223 = pneg %p51
      %p224 = pneg %p48
      %p225 = pneg %p72
      %p226 = pneg %p69
      %p227 = pneg %p93
      %p228 = pneg %p90
      %p229 = pneg %p114
      %p230 = pneg %p111
      %p231 = pneg %p135
      %p232 = pneg %p132
      %p233 = pneg %p163
      %p234 = pneg %p160
      %s235 = smul.u32 8, %s21
      %p236 = scmp.lt.s32.totalorder %s20, 1
      %s237 = scalar_select %p236, %s20, 1
      %p238 = scmp.lt.s32.totalorder %s235, 7
      %s239 = scalar_select %p238, %s235, 7
      %s240 = smul.addr %s237, 8
      %s241 = sadd.s32 %s239, %s240
      %s242 = smul.addr %s241, 8
      %s243 = scalar_lea.vmem %s5, %s242
      %s244 = smul.u32 8, %s21
      %p245 = scmp.lt.s32.totalorder %s20, 1
      %s246 = scalar_select %p245, %s20, 1
      %p247 = scmp.lt.s32.totalorder %s244, 7
      %s248 = scalar_select %p247, %s244, 7
      %s249 = smul.addr %s246, 8
      %s250 = sadd.s32 %s248, %s249
      %s251 = smul.addr %s250, 8
      %s252 = scalar_lea.vmem %s0, %s251
      %s253 = smul.u32 8, %s21
      %s254 = smul.u32 8, %s21
      %p255 = scmp.lt.s32.totalorder %s20, 1
      %s256 = scalar_select %p255, %s20, 1
      %p257 = scmp.lt.s32.totalorder %s254, 7
      %s258 = scalar_select %p257, %s254, 7
      %s259 = smul.addr %s256, 8
      %s260 = sadd.s32 %s258, %s259
      %s261 = smul.addr %s260, 8
      %s262 = scalar_lea.vmem %s5, %s261
      %s263 = smul.u32 8, %s21
      %v264 = vld [vmem:[%s252] sm:$0xff]
      %v265 = vld [vmem:[%s252 + $0x8] sm:$0xff]
      %v266 = vld [vmem:[%s252 + $0x10] sm:$0xff]
      %v267 = vld [vmem:[%s252 + $0x18] sm:$0xff]
      %v268 = vld [vmem:[%s252 + $0x20] sm:$0xff]
      %v269 = vld [vmem:[%s252 + $0x28] sm:$0xff]
      %v270 = vld [vmem:[%s252 + $0x30] sm:$0xff]
      %v271 = vld [vmem:[%s252 + $0x38] sm:$0xff]
      %vm272 = vcmask 261120
      %v273 = vsel %vm272, %v264, 0.0
      %274 = vadd.xlane.f32.xlu0 %v273
      %v275 = vpop.xlane.xlu0 %274
      %v276 = vsel %vm272, %v265, 0.0
      %277 = vadd.xlane.f32.xlu0 %v276
      %v278 = vpop.xlane.xlu0 %277
      %v279 = vsel %vm272, %v266, 0.0
      %280 = vadd.xlane.f32.xlu0 %v279
      %v281 = vpop.xlane.xlu0 %280
      %v282 = vsel %vm272, %v267, 0.0
      %283 = vadd.xlane.f32.xlu0 %v282
      %v284 = vpop.xlane.xlu0 %283
      %v285 = vsel %vm272, %v268, 0.0
      %286 = vadd.xlane.f32.xlu0 %v285
      %v287 = vpop.xlane.xlu0 %286
      %v288 = vsel %vm272, %v269, 0.0
      %289 = vadd.xlane.f32.xlu0 %v288
      %v290 = vpop.xlane.xlu0 %289
      %v291 = vsel %vm272, %v270, 0.0
      %292 = vadd.xlane.f32.xlu0 %v291
      %v293 = vpop.xlane.xlu0 %292
      %v294 = vsel %vm272, %v271, 0.0
      %295 = vadd.xlane.f32.xlu0 %v294
      %v296 = vpop.xlane.xlu0 %295
      %v297 = vmul.f32 %v275, 0.03125
      %v298 = vmul.f32 %v278, 0.03125
      %v299 = vmul.f32 %v281, 0.03125
      %v300 = vmul.f32 %v284, 0.03125
      %v301 = vmul.f32 %v287, 0.03125
      %v302 = vmul.f32 %v290, 0.03125
      %v303 = vmul.f32 %v293, 0.03125
      %v304 = vmul.f32 %v296, 0.03125
      %v305 = vsub.f32 %v264, %v297
      %v306 = vsub.f32 %v265, %v298
      %v307 = vsub.f32 %v266, %v299
      %v308 = vsub.f32 %v267, %v300
      %v309 = vsub.f32 %v268, %v301
      %v310 = vsub.f32 %v269, %v302
      %v311 = vsub.f32 %v270, %v303
      %v312 = vsub.f32 %v271, %v304
      %v313 = vmul.f32 %v305, %v305
      %v314 = vmul.f32 %v306, %v306
      %v315 = vmul.f32 %v307, %v307
      %v316 = vmul.f32 %v308, %v308
      %v317 = vmul.f32 %v309, %v309
      %v318 = vmul.f32 %v310, %v310
      %v319 = vmul.f32 %v311, %v311
      %v320 = vmul.f32 %v312, %v312
      %v321 = vsel %vm272, %v313, 0.0
      %322 = vadd.xlane.f32.xlu0 %v321
      %v323 = vpop.xlane.xlu0 %322
      %v324 = vsel %vm272, %v314, 0.0
      %325 = vadd.xlane.f32.xlu0 %v324
      %v326 = vpop.xlane.xlu0 %325
      %v327 = vsel %vm272, %v315, 0.0
      %328 = vadd.xlane.f32.xlu0 %v327
      %v329 = vpop.xlane.xlu0 %328
      %v330 = vsel %vm272, %v316, 0.0
      %331 = vadd.xlane.f32.xlu0 %v330
      %v332 = vpop.xlane.xlu0 %331
      %v333 = vsel %vm272, %v317, 0.0
      %334 = vadd.xlane.f32.xlu0 %v333
      %v335 = vpop.xlane.xlu0 %334
      %v336 = vsel %vm272, %v318, 0.0
      %337 = vadd.xlane.f32.xlu0 %v336
      %v338 = vpop.xlane.xlu0 %337
      %v339 = vsel %vm272, %v319, 0.0
      %340 = vadd.xlane.f32.xlu0 %v339
      %v341 = vpop.xlane.xlu0 %340
      %v342 = vsel %vm272, %v320, 0.0
      %343 = vadd.xlane.f32.xlu0 %v342
      %v344 = vpop.xlane.xlu0 %343
      %v345 = vmul.f32 %v323, 0.03125
      %v346 = vmul.f32 %v326, 0.03125
      %v347 = vmul.f32 %v329, 0.03125
      %v348 = vmul.f32 %v332, 0.03125
      %v349 = vmul.f32 %v335, 0.03125
      %v350 = vmul.f32 %v338, 0.03125
      %v351 = vmul.f32 %v341, 0.03125
      %v352 = vmul.f32 %v344, 0.03125
      %v353 = vadd.f32 %v345, 1e-05
      %v354 = vadd.f32 %v346, 1e-05
      %v355 = vadd.f32 %v347, 1e-05
      %v356 = vadd.f32 %v348, 1e-05
      %v357 = vadd.f32 %v349, 1e-05
      %v358 = vadd.f32 %v350, 1e-05
      %v359 = vadd.f32 %v351, 1e-05
      %v360 = vadd.f32 %v352, 1e-05
      %v361 = vrsqrt.pop %v353
      %v362 = vrsqrt.pop %v354
      %v363 = vrsqrt.pop %v355
      %v364 = vrsqrt.pop %v356
      %v365 = vrsqrt.pop %v357
      %v366 = vrsqrt.pop %v358
      %v367 = vrsqrt.pop %v359
      %v368 = vrsqrt.pop %v360
      %v369 = vmul.f32 %v305, %v361
      %v370 = vmul.f32 %v306, %v362
      %v371 = vmul.f32 %v307, %v363
      %v372 = vmul.f32 %v308, %v364
      %v373 = vmul.f32 %v309, %v365
      %v374 = vmul.f32 %v310, %v366
      %v375 = vmul.f32 %v311, %v367
      %v376 = vmul.f32 %v312, %v368
      %v377 = vld [vmem:[%s1] sm:$0x1]
      %v379 = vlaneseq
      %v380 = vshrl.u32 %v379, 7
      %v381 = vsub.s32 0, %v380
      %v382 = vrot.slane %v377, %v381
      %v384 = vmul.f32 %v369, %v382
      %v385 = vmul.f32 %v370, %v382
      %v386 = vmul.f32 %v371, %v382
      %v387 = vmul.f32 %v372, %v382
      %v388 = vmul.f32 %v373, %v382
      %v389 = vmul.f32 %v374, %v382
      %v390 = vmul.f32 %v375, %v382
      %v391 = vmul.f32 %v376, %v382
      %v392 = vld [vmem:[%s2] sm:$0x1]
      %v394 = vlaneseq
      %v395 = vshrl.u32 %v394, 7
      %v396 = vsub.s32 0, %v395
      %v397 = vrot.slane %v392, %v396
      %v399 = vadd.f32 %v384, %v397
      %v400 = vadd.f32 %v385, %v397
      %v401 = vadd.f32 %v386, %v397
      %v402 = vadd.f32 %v387, %v397
      %v403 = vadd.f32 %v388, %v397
      %v404 = vadd.f32 %v389, %v397
      %v405 = vadd.f32 %v390, %v397
      %v406 = vadd.f32 %v391, %v397
      %v407 = vld [vmem:[%s3] sm:$0xff]
      %v408 = vld [vmem:[%s3 + $0x8] sm:$0xff]
      %v409 = vld [vmem:[%s3 + $0x10] sm:$0xff]
      %v410 = vld [vmem:[%s3 + $0x18] sm:$0xff]
      %v411 = vld [vmem:[%s4] sm:$0x1]
      %v413 = vlaneseq
      %v414 = vshrl.u32 %v413, 7
      %v415 = vsub.s32 0, %v414
      %v416 = vrot.slane %v411, %v415
      %v419 = vsel %vm272, %v399, 0
      %v422 = vsel %vm272, %v400, 0
      %v425 = vsel %vm272, %v401, 0
      %v428 = vsel %vm272, %v402, 0
      %v431 = vsel %vm272, %v403, 0
      %v434 = vsel %vm272, %v404, 0
      %v437 = vsel %vm272, %v405, 0
      %v440 = vsel %vm272, %v406, 0
      %442 = vmatprep.subr.mxu0 0.0
      %443 = vmatpush1.msra.mxu0 0.0
      %444 = vmatprep.subr.mxu0 0.0
      %445 = vmatpush1.msra.mxu0 0.0
      %446 = vmatprep.subr.mxu0 0.0
      %447 = vmatpush1.msra.mxu0 0.0
      %448 = vmatprep.subr.mxu0 0.0
      %449 = vmatpush1.msra.mxu0 0.0
      %450 = vmatprep.subr.mxu0 0.0
      %451 = vmatpush1.msra.mxu0 0.0
      %452 = vmatprep.subr.mxu0 0.0
      %453 = vmatpush1.msra.mxu0 0.0
      %454 = vmatprep.subr.mxu0 0.0
      %455 = vmatpush1.msra.mxu0 0.0
      %456 = vmatprep.subr.mxu0 0.0
      %457 = vmatpush1.msra.mxu0 0.0
      %458 = vmatprep.subr.mxu0 0.0
      %459 = vmatpush1.msra.mxu0 0.0
      %460 = vmatprep.subr.mxu0 0.0
      %461 = vmatpush1.msra.mxu0 0.0
      %462 = vmatprep.subr.mxu0 0.0
      %463 = vmatpush1.msra.mxu0 0.0
      %464 = vmatprep.subr.mxu0 0.0
      %465 = vmatpush1.msra.mxu0 0.0
      %466 = vmatprep.subr.mxu0 0.0
      %467 = vmatpush1.msra.mxu0 %v410
      %468 = vmatprep.subr.mxu0 0.0
      %469 = vmatpush1.msra.mxu0 %v409
      %470 = vmatprep.subr.mxu0 0.0
      %471 = vmatpush1.msra.mxu0 %v408
      %472 = vmatprep.subr.mxu0 0.0
      %473 = vmatpush1.msra.mxu0 %v407
      %474 = vmatprep.subr.mxu0 0.0
      %475 = vmatpush2.msra.mxu0 0.0
      %476 = vmatprep.subr.mxu0 0.0
      %477 = vmatpush2.msra.mxu0 0.0
      %478 = vmatprep.subr.mxu0 0.0
      %479 = vmatpush2.msra.mxu0 0.0
      %480 = vmatprep.subr.mxu0 0.0
      %481 = vmatpush2.msra.mxu0 0.0
      %482 = vmatprep.subr.mxu0 0.0
      %483 = vmatpush2.msra.mxu0 0.0
      %484 = vmatprep.subr.mxu0 0.0
      %485 = vmatpush2.msra.mxu0 0.0
      %486 = vmatprep.subr.mxu0 0.0
      %487 = vmatpush2.msra.mxu0 0.0
      %488 = vmatprep.subr.mxu0 0.0
      %489 = vmatpush2.msra.mxu0 0.0
      %490 = vmatprep.subr.mxu0 0.0
      %491 = vmatpush2.msra.mxu0 0.0
      %492 = vmatprep.subr.mxu0 0.0
      %493 = vmatpush2.msra.mxu0 0.0
      %494 = vmatprep.subr.mxu0 0.0
      %495 = vmatpush2.msra.mxu0 0.0
      %496 = vmatprep.subr.mxu0 0.0
      %497 = vmatpush2.msra.mxu0 0.0
      %498 = vmatprep.subr.mxu0 0.0
      %499 = vmatpush2.msra.mxu0 0.0
      %500 = vmatprep.subr.mxu0 0.0
      %501 = vmatpush2.msra.mxu0 0.0
      %502 = vmatprep.subr.mxu0 0.0
      %503 = vmatpush2.msra.mxu0 0.0
      %504 = vmatprep.subr.mxu0 0.0
      %505 = vmatpush2.msra.mxu0 0.0
      %506 = vmatprep.mubr.f32.mxu0 0.0
      %507 = vmatmul.mubr.f32.gmra.mxu0 %v419
      %v508 = vpop.f32.mrf.mxu0
      %v509 = vadd.f32 %v416, %v508
      %v510 = vpop.f32.mrf.mxu0
      %511 = vmatprep.mubr.f32.mxu0 0.0
      %512 = vmatmul.mubr.f32.gmra.mxu0 %v422
      %v513 = vpop.f32.mrf.mxu0
      %v514 = vadd.f32 %v416, %v513
      %v515 = vpop.f32.mrf.mxu0
      %516 = vmatprep.mubr.f32.mxu0 0.0
      %517 = vmatmul.mubr.f32.gmra.mxu0 %v425
      %v518 = vpop.f32.mrf.mxu0
      %v519 = vadd.f32 %v416, %v518
      %v520 = vpop.f32.mrf.mxu0
      %521 = vmatprep.mubr.f32.mxu0 0.0
      %522 = vmatmul.mubr.f32.gmra.mxu0 %v428
      %v523 = vpop.f32.mrf.mxu0
      %v524 = vadd.f32 %v416, %v523
      %v525 = vpop.f32.mrf.mxu0
      %526 = vmatprep.mubr.f32.mxu0 0.0
      %527 = vmatmul.mubr.f32.gmra.mxu0 %v431
      %v528 = vpop.f32.mrf.mxu0
      %v529 = vadd.f32 %v416, %v528
      %v530 = vpop.f32.mrf.mxu0
      %531 = vmatprep.mubr.f32.mxu0 0.0
      %532 = vmatmul.mubr.f32.gmra.mxu0 %v434
      %v533 = vpop.f32.mrf.mxu0
      %v534 = vadd.f32 %v416, %v533
      %v535 = vpop.f32.mrf.mxu0
      %536 = vmatprep.mubr.f32.mxu0 0.0
      %537 = vmatmul.mubr.f32.gmra.mxu0 %v437
      %v538 = vpop.f32.mrf.mxu0
      %v539 = vadd.f32 %v416, %v538
      %v540 = vpop.f32.mrf.mxu0
      %541 = vmatprep.mubr.f32.mxu0 0.0
      %542 = vmatmul.mubr.f32.gmra.mxu0 %v440
      %v543 = vpop.f32.mrf.mxu0
      %v544 = vadd.f32 %v416, %v543
      %v545 = vpop.f32.mrf.mxu0
      %546 = vdwg.mxu0
      %v547 = vmul.f32 %v509, %v509
      %v548 = vmul.f32 %v514, %v514
      %v549 = vmul.f32 %v519, %v519
      %v550 = vmul.f32 %v524, %v524
      %v551 = vmul.f32 %v529, %v529
      %v552 = vmul.f32 %v534, %v534
      %v553 = vmul.f32 %v539, %v539
      %v554 = vmul.f32 %v544, %v544
      %v555 = vmul.f32 %v509, %v547
      %v556 = vmul.f32 %v514, %v548
      %v557 = vmul.f32 %v519, %v549
      %v558 = vmul.f32 %v524, %v550
      %v559 = vmul.f32 %v529, %v551
      %v560 = vmul.f32 %v534, %v552
      %v561 = vmul.f32 %v539, %v553
      %v562 = vmul.f32 %v544, %v554
      %v563 = vmul.f32 %v555, 0.044715
      %v564 = vmul.f32 %v556, 0.044715
      %v565 = vmul.f32 %v557, 0.044715
      %v566 = vmul.f32 %v558, 0.044715
      %v567 = vmul.f32 %v559, 0.044715
      %v568 = vmul.f32 %v560, 0.044715
      %v569 = vmul.f32 %v561, 0.044715
      %v570 = vmul.f32 %v562, 0.044715
      %v571 = vadd.f32 %v509, %v563
      %v572 = vadd.f32 %v514, %v564
      %v573 = vadd.f32 %v519, %v565
      %v574 = vadd.f32 %v524, %v566
      %v575 = vadd.f32 %v529, %v567
      %v576 = vadd.f32 %v534, %v568
      %v577 = vadd.f32 %v539, %v569
      %v578 = vadd.f32 %v544, %v570
      %v579 = vmul.f32 %v571, 0.7978846
      %v580 = vmul.f32 %v572, 0.7978846
      %v581 = vmul.f32 %v573, 0.7978846
      %v582 = vmul.f32 %v574, 0.7978846
      %v583 = vmul.f32 %v575, 0.7978846
      %v584 = vmul.f32 %v576, 0.7978846
      %v585 = vmul.f32 %v577, 0.7978846
      %v586 = vmul.f32 %v578, 0.7978846
      %v587 = vtanh.pop %v579
      %v588 = vtanh.pop %v580
      %v589 = vtanh.pop %v581
      %v590 = vtanh.pop %v582
      %v591 = vtanh.pop %v583
      %v592 = vtanh.pop %v584
      %v593 = vtanh.pop %v585
      %v594 = vtanh.pop %v586
      %v595 = vadd.f32 %v587, 1.0
      %v596 = vadd.f32 %v588, 1.0
      %v597 = vadd.f32 %v589, 1.0
      %v598 = vadd.f32 %v590, 1.0
      %v599 = vadd.f32 %v591, 1.0
      %v600 = vadd.f32 %v592, 1.0
      %v601 = vadd.f32 %v593, 1.0
      %v602 = vadd.f32 %v594, 1.0
      %v603 = vmul.f32 %v595, 0.5
      %v604 = vmul.f32 %v596, 0.5
      %v605 = vmul.f32 %v597, 0.5
      %v606 = vmul.f32 %v598, 0.5
      %v607 = vmul.f32 %v599, 0.5
      %v608 = vmul.f32 %v600, 0.5
      %v609 = vmul.f32 %v601, 0.5
      %v610 = vmul.f32 %v602, 0.5
      %v611 = vmul.f32 %v509, %v603
      %v612 = vmul.f32 %v514, %v604
      %v613 = vmul.f32 %v519, %v605
      %v614 = vmul.f32 %v524, %v606
      %v615 = vmul.f32 %v529, %v607
      %v616 = vmul.f32 %v534, %v608
      %v617 = vmul.f32 %v539, %v609
      %v618 = vmul.f32 %v544, %v610
      %619 = vst [vmem:[%s262] sm:$0xff] %v611
      %620 = vst [vmem:[%s262 + $0x8] sm:$0xff] %v612
      %621 = vst [vmem:[%s262 + $0x10] sm:$0xff] %v613
      %622 = vst [vmem:[%s262 + $0x18] sm:$0xff] %v614
      %623 = vst [vmem:[%s262 + $0x20] sm:$0xff] %v615
      %624 = vst [vmem:[%s262 + $0x28] sm:$0xff] %v616
      %625 = vst [vmem:[%s262 + $0x30] sm:$0xff] %v617
      %626 = vst [vmem:[%s262 + $0x38] sm:$0xff] %v618
      %s627 = smul.u32 8, %s21
      %p628 = scmp.lt.s32.totalorder %s20, 1
      %s629 = scalar_select %p628, %s20, 1
      %p630 = scmp.lt.s32.totalorder %s627, 7
      %s631 = scalar_select %p630, %s627, 7
      %s632 = smul.addr %s629, 8
      %s633 = sadd.s32 %s631, %s632
      %s634 = smul.addr %s633, 8
      %s635 = scalar_lea.vmem %s5, %s634
      // Predicated region
      $region41: #{vision_transformer_block.8} parent=39 // pred_check
        %p636 = pneg %p160
      $region42: #{vision_transformer_block.8} parent=39 // pred_check_branch
        %638 = sbr.rel (%p636) target = $region44
      $region43: #{vision_transformer_block.8} parent=39 // pred_region
        %s639 = smul.u32 8, %s21
      $region44: #{vision_transformer_block.8} parent=39 // pred_fallthru
        _
    $region40: #{vision_transformer_block.8} parent=5 // pred_fallthru
      _
    %p640 = scmp.le.s32.totalorder 2, %s11
    // Predicated region
    $region45: #{vision_transformer_block.8} parent=5 // pred_check
      %p641 = pneg %p640
    $region46: #{vision_transformer_block.8} parent=5 // pred_check_branch
      %643 = sbr.rel (%p641) target = $region48
    $region47: #{vision_transformer_block.8} parent=5 // pred_region
      %s644 = ssub.s32 %s11, 2
      // Predicated region
      $region49: #{vision_transformer_block.8} parent=47 // pred_check
        %p645 = pneg %p166
      $region50: #{vision_transformer_block.8} parent=47 // pred_check_branch
        %647 = sbr.rel (%p645) target = $region52
      $region51: #{vision_transformer_block.8} parent=47 // pred_region
        %s648 = smul.u32 8, %s23
        %p649 = scmp.lt.s32.totalorder %s22, 1
        %s650 = scalar_select %p649, %s22, 1
        %p651 = scmp.lt.s32.totalorder %s648, 7
        %s652 = scalar_select %p651, %s648, 7
        %s653 = smul.addr %s650, 8
        %s654 = sadd.s32 %s652, %s653
        %s655 = smul.addr %s654, 8
        %s656 = scalar_lea.vmem %s5, %s655
      $region52: #{vision_transformer_block.8} parent=47 // pred_fallthru
        _
    $region48: #{vision_transformer_block.8} parent=5 // pred_fallthru
      _
  $region6: #{vision_transformer_block.8} parent=0 // loop_footer
    %s15 = sadd.s32 1, %s11
  $region7: #{vision_transformer_block.8} parent=0 // loop_footer_branch
    %10 = sbr.rel target = $region3
  $region8: #{vision_transformer_block.8} parent=0 // loop_exit
    _

// kernel: vision_transformer_block.9
$region0: #{vision_transformer_block.9}
  #allocation0 [shape = 'u32[]', space=smem, size = 0x4, offset = 0x4, fixed_abs, tag = 'smem constant byte address 0x4 - core index']
  #allocation1 [shape = 'u32[144,128]{1,0:T(1,128)}', space=vmem, size = 0x12000, scoped, tag = 'internal scratch']
  %s0 = inlined_call_operand.vmem [shape: f32[2,64,128], index: 0, kind: input, shape index: {}]
  %s1 = inlined_call_operand.vmem [shape: f32[128,32], index: 1, kind: input, shape index: {}]
  %s2 = inlined_call_operand.vmem [shape: f32[1,32], index: 2, kind: input, shape index: {}]
  %s3 = inlined_call_operand.vmem [shape: f32[2,64,32], index: 3, kind: input, shape index: {}]
  %s4 = inlined_call_operand.vmem [shape: f32[2,64,32], index: 4, kind: output, shape index: {}]
  %s5 = sld [smem:[#allocation0]]
  $region49: #{vision_transformer_block.9} parent=0
    _
  %s7 = ssub.s32 1, %s5
  %s8 = scalar_select 0, %s7, %s5
  loop: start=0, step=1, limit=4
  $region2: #{vision_transformer_block.9} parent=0 // loop_pre_header
    _
  $region3: #{vision_transformer_block.9} parent=0 // loop_header
    %s10 = sphi 0, %s14
    %p11 = scmp.ge.s32.totalorder %s10, 4
    %s17 = sphi 0, %s29
    %s18 = sphi 0, %s25
    %s19 = sphi 0, %s17
    %s20 = sphi 0, %s18
    %s21 = sphi 0, %s19
    %s22 = sphi 0, %s20
    %s34 = sphi 0, %s36
    %s37 = sphi 0, %s34
    %s38 = sphi 0, %s37
    %s54 = sphi 0, %s38
    %s58 = sphi 0, %s58
    %s60 = sphi 0, %s58
    %s61 = sphi 0, %s60
    %s75 = sphi 0, %s61
    %s79 = sphi 0, %s79
    %s81 = sphi 0, %s79
    %s82 = sphi 0, %s81
    %s96 = sphi 0, %s82
    %s104 = sphi 0, %s106
    %s107 = sphi 0, %s104
    %s108 = sphi 0, %s107
    %s124 = sphi 0, %s108
    %s132 = sphi 0, %s134
    %s135 = sphi 0, %s132
    %s136 = sphi 0, %s135
    %s152 = sphi 0, %s136
  $region4: #{vision_transformer_block.9} parent=0 // loop_header_branch
    %13 = sbr.rel (%p11) target = $region8
  $region5: #{vision_transformer_block.9} parent=0 // loop_body
    %s15 = ssub.s32 %s10, 1
    %s16 = ssub.s32 %s10, 2
    %s23 = sadd.s32 1, %s18
    %p24 = scmp.ge.s32.totalorder %s23, 1
    %s25 = scalar_select %p24, 0, %s23
    %s26 = sadd.s32 1, %s17
    %s27 = scalar_select %p24, %s26, %s17
    %p28 = scmp.ge.s32.totalorder %s27, 2
    %s29 = scalar_select %p28, 0, %s27
    %s30 = ssub.s32 %s17, %s29
    %s31 = ssub.s32 %s18, %s25
    %s32 = sor.u32 %s30, %s31
    %p33 = scmp.eq.s32.totalorder %s32, 0
    %s35 = sadd.s32 %s34, 1
    %s36 = scalar_select %p33, %s34, %s35
    %p39 = pneg %p33
    %p40 = scmp.eq.s32.totalorder %s10, 1
    %p41 = por %p39, %p40
    %p42 = scmp.ne.s32.totalorder %s34, %s37
    %p43 = scmp.eq.s32.totalorder %s10, 0
    %p44 = por %p42, %p43
    %p45 = scmp.ne.s32.totalorder %s34, %s37
    %p46 = scmp.eq.s32.totalorder %s15, 1
    %p47 = por %p45, %p46
    %p48 = scmp.ne.s32.totalorder %s37, %s38
    %p49 = scmp.eq.s32.totalorder %s15, 0
    %p50 = por %p48, %p49
    %p51 = scmp.ne.s32.totalorder %s37, %s38
    %p52 = scmp.eq.s32.totalorder %s16, 1
    %p53 = por %p51, %p52
    %p55 = scmp.ne.s32.totalorder %s38, %s54
    %p56 = scmp.eq.s32.totalorder %s16, 0
    %p57 = por %p55, %p56
    %s59 = sadd.s32 %s58, 1
    %p62 = scmp.eq.s32.totalorder %s10, 1
    %p63 = scmp.ne.s32.totalorder %s58, %s60
    %p64 = scmp.eq.s32.totalorder %s10, 0
    %p65 = por %p63, %p64
    %p66 = scmp.ne.s32.totalorder %s58, %s60
    %p67 = scmp.eq.s32.totalorder %s15, 1
    %p68 = por %p66, %p67
    %p69 = scmp.ne.s32.totalorder %s60, %s61
    %p70 = scmp.eq.s32.totalorder %s15, 0
    %p71 = por %p69, %p70
    %p72 = scmp.ne.s32.totalorder %s60, %s61
    %p73 = scmp.eq.s32.totalorder %s16, 1
    %p74 = por %p72, %p73
    %p76 = scmp.ne.s32.totalorder %s61, %s75
    %p77 = scmp.eq.s32.totalorder %s16, 0
    %p78 = por %p76, %p77
    %s80 = sadd.s32 %s79, 1
    %p83 = scmp.eq.s32.totalorder %s10, 1
    %p84 = scmp.ne.s32.totalorder %s79, %s81
    %p85 = scmp.eq.s32.totalorder %s10, 0
    %p86 = por %p84, %p85
    %p87 = scmp.ne.s32.totalorder %s79, %s81
    %p88 = scmp.eq.s32.totalorder %s15, 1
    %p89 = por %p87, %p88
    %p90 = scmp.ne.s32.totalorder %s81, %s82
    %p91 = scmp.eq.s32.totalorder %s15, 0
    %p92 = por %p90, %p91
    %p93 = scmp.ne.s32.totalorder %s81, %s82
    %p94 = scmp.eq.s32.totalorder %s16, 1
    %p95 = por %p93, %p94
    %p97 = scmp.ne.s32.totalorder %s82, %s96
    %p98 = scmp.eq.s32.totalorder %s16, 0
    %p99 = por %p97, %p98
    %s100 = ssub.s32 %s17, %s29
    %s101 = ssub.s32 %s18, %s25
    %s102 = sor.u32 %s100, %s101
    %p103 = scmp.eq.s32.totalorder %s102, 0
    %s105 = sadd.s32 %s104, 1
    %s106 = scalar_select %p103, %s104, %s105
    %p109 = pneg %p103
    %p110 = scmp.eq.s32.totalorder %s10, 1
    %p111 = por %p109, %p110
    %p112 = scmp.ne.s32.totalorder %s104, %s107
    %p113 = scmp.eq.s32.totalorder %s10, 0
    %p114 = por %p112, %p113
    %p115 = scmp.ne.s32.totalorder %s104, %s107
    %p116 = scmp.eq.s32.totalorder %s15, 1
    %p117 = por %p115, %p116
    %p118 = scmp.ne.s32.totalorder %s107, %s108
    %p119 = scmp.eq.s32.totalorder %s15, 0
    %p120 = por %p118, %p119
    %p121 = scmp.ne.s32.totalorder %s107, %s108
    %p122 = scmp.eq.s32.totalorder %s16, 1
    %p123 = por %p121, %p122
    %p125 = scmp.ne.s32.totalorder %s108, %s124
    %p126 = scmp.eq.s32.totalorder %s16, 0
    %p127 = por %p125, %p126
    %s128 = ssub.s32 %s17, %s29
    %s129 = ssub.s32 %s18, %s25
    %s130 = sor.u32 %s128, %s129
    %p131 = scmp.eq.s32.totalorder %s130, 0
    %s133 = sadd.s32 %s132, 1
    %s134 = scalar_select %p131, %s132, %s133
    %p137 = pneg %p131
    %p138 = scmp.eq.s32.totalorder %s10, 1
    %p139 = por %p137, %p138
    %p140 = scmp.ne.s32.totalorder %s132, %s135
    %p141 = scmp.eq.s32.totalorder %s10, 0
    %p142 = por %p140, %p141
    %p143 = scmp.ne.s32.totalorder %s132, %s135
    %p144 = scmp.eq.s32.totalorder %s15, 1
    %p145 = por %p143, %p144
    %p146 = scmp.ne.s32.totalorder %s135, %s136
    %p147 = scmp.eq.s32.totalorder %s15, 0
    %p148 = por %p146, %p147
    %p149 = scmp.ne.s32.totalorder %s135, %s136
    %p150 = scmp.eq.s32.totalorder %s16, 1
    %p151 = por %p149, %p150
    %p153 = scmp.ne.s32.totalorder %s136, %s152
    %p154 = scmp.eq.s32.totalorder %s16, 0
    %p155 = por %p153, %p154
    %p156 = scmp.le.s32.totalorder 1, %s10
    %p157 = scmp.lt.s32.totalorder %s10, 3
    %p158 = pnand %p156, %p157
    %p159 = pneg %p158
    // Predicated region
    $region9: #{vision_transformer_block.9} parent=5 // pred_check
      _
    $region10: #{vision_transformer_block.9} parent=5 // pred_check_branch
      %161 = sbr.rel (%p158) target = $region12
    $region11: #{vision_transformer_block.9} parent=5 // pred_region
      %s162 = ssub.s32 %s10, 1
      // Predicated region
      $region13: #{vision_transformer_block.9} parent=11 // pred_check
        %p163 = pneg %p71
      $region14: #{vision_transformer_block.9} parent=11 // pred_check_branch
        %165 = sbr.rel (%p163) target = $region16
      $region15: #{vision_transformer_block.9} parent=11 // pred_region
        _
      $region16: #{vision_transformer_block.9} parent=11 // pred_fallthru
        _
      // Predicated region
      $region17: #{vision_transformer_block.9} parent=11 // pred_check
        %p166 = pneg %p92
      $region18: #{vision_transformer_block.9} parent=11 // pred_check_branch
        %168 = sbr.rel (%p166) target = $region20
      $region19: #{vision_transformer_block.9} parent=11 // pred_region
        _
      $region20: #{vision_transformer_block.9} parent=11 // pred_fallthru
        _
    $region12: #{vision_transformer_block.9} parent=5 // pred_fallthru
      _
    %p169 = scmp.lt.s32.totalorder %s10, 2
    // Predicated region
    $region21: #{vision_transformer_block.9} parent=5 // pred_check
      %p170 = pneg %p169
    $region22: #{vision_transformer_block.9} parent=5 // pred_check_branch
      %172 = sbr.rel (%p170) target = $region24
    $region23: #{vision_transformer_block.9} parent=5 // pred_region
      // Predicated region
      $region25: #{vision_transformer_block.9} parent=23 // pred_check
        %p173 = pneg %p44
      $region26: #{vision_transformer_block.9} parent=23 // pred_check_branch
        %175 = sbr.rel (%p173) target = $region28
      $region27: #{vision_transformer_block.9} parent=23 // pred_region
        %s176 = smul.u32 8, %s18
        %p177 = scmp.lt.s32.totalorder %s17, 1
        %s178 = scalar_select %p177, %s17, 1
        %p179 = scmp.lt.s32.totalorder %s176, 7
        %s180 = scalar_select %p179, %s176, 7
        %s181 = smul.addr %s178, 8
        %s182 = sadd.s32 %s180, %s181
        %s183 = smul.addr %s182, 8
        %s184 = scalar_lea.vmem %s0, %s183
        %s185 = smul.u32 8, %s18
      $region28: #{vision_transformer_block.9} parent=23 // pred_fallthru
        _
      // Predicated region
      $region29: #{vision_transformer_block.9} parent=23 // pred_check
        %p186 = pneg %p114
      $region30: #{vision_transformer_block.9} parent=23 // pred_check_branch
        %188 = sbr.rel (%p186) target = $region32
      $region31: #{vision_transformer_block.9} parent=23 // pred_region
        %s189 = smul.u32 8, %s18
        %p190 = scmp.lt.s32.totalorder %s17, 1
        %s191 = scalar_select %p190, %s17, 1
        %p192 = scmp.lt.s32.totalorder %s189, 7
        %s193 = scalar_select %p192, %s189, 7
        %s194 = smul.addr %s191, 8
        %s195 = sadd.s32 %s193, %s194
        %s196 = smul.addr %s195, 8
        %s197 = scalar_lea.vmem %s3, %s196
        %s198 = smul.u32 8, %s18
      $region32: #{vision_transformer_block.9} parent=23 // pred_fallthru
        _
    $region24: #{vision_transformer_block.9} parent=5 // pred_fallthru
      _
    %p199 = scmp.le.s32.totalorder 1, %s10
    %p200 = scmp.lt.s32.totalorder %s10, 3
    %p201 = pnand %p199, %p200
    %p202 = pneg %p201
    // Predicated region
    $region33: #{vision_transformer_block.9} parent=5 // pred_check
      _
    $region34: #{vision_transformer_block.9} parent=5 // pred_check_branch
      %204 = sbr.rel (%p201) target = $region36
    $region35: #{vision_transformer_block.9} parent=5 // pred_region
      %s205 = ssub.s32 %s10, 1
      %s206 = smul.u32 8, %s20
      %p207 = scmp.lt.s32.totalorder %s19, 1
      %s208 = scalar_select %p207, %s19, 1
      %p209 = scmp.lt.s32.totalorder %s206, 7
      %s210 = scalar_select %p209, %s206, 7
      %s211 = smul.addr %s208, 8
      %s212 = sadd.s32 %s210, %s211
      %s213 = smul.addr %s212, 8
      %s214 = scalar_lea.vmem %s0, %s213
      %p215 = pneg %p50
      %p216 = pneg %p47
      %p217 = pneg %p71
      %p218 = pneg %p68
      %p219 = pneg %p92
      %p220 = pneg %p89
      %s221 = smul.u32 8, %s20
      %p222 = scmp.lt.s32.totalorder %s19, 1
      %s223 = scalar_select %p222, %s19, 1
      %p224 = scmp.lt.s32.totalorder %s221, 7
      %s225 = scalar_select %p224, %s221, 7
      %s226 = smul.addr %s223, 8
      %s227 = sadd.s32 %s225, %s226
      %s228 = smul.addr %s227, 8
      %s229 = scalar_lea.vmem %s3, %s228
      %p230 = pneg %p120
      %p231 = pneg %p117
      %p232 = pneg %p148
      %p233 = pneg %p145
      %s234 = smul.u32 8, %s20
      %p235 = scmp.lt.s32.totalorder %s19, 1
      %s236 = scalar_select %p235, %s19, 1
      %p237 = scmp.lt.s32.totalorder %s234, 7
      %s238 = scalar_select %p237, %s234, 7
      %s239 = smul.addr %s236, 8
      %s240 = sadd.s32 %s238, %s239
      %s241 = smul.addr %s240, 8
      %s242 = scalar_lea.vmem %s4, %s241
      %s243 = smul.u32 8, %s20
      %p244 = scmp.lt.s32.totalorder %s19, 1
      %s245 = scalar_select %p244, %s19, 1
      %p246 = scmp.lt.s32.totalorder %s243, 7
      %s247 = scalar_select %p246, %s243, 7
      %s248 = smul.addr %s245, 8
      %s249 = sadd.s32 %s247, %s248
      %s250 = smul.addr %s249, 8
      %s251 = scalar_lea.vmem %s0, %s250
      %s252 = smul.u32 8, %s20
      %s253 = smul.u32 8, %s20
      %p254 = scmp.lt.s32.totalorder %s19, 1
      %s255 = scalar_select %p254, %s19, 1
      %p256 = scmp.lt.s32.totalorder %s253, 7
      %s257 = scalar_select %p256, %s253, 7
      %s258 = smul.addr %s255, 8
      %s259 = sadd.s32 %s257, %s258
      %s260 = smul.addr %s259, 8
      %s261 = scalar_lea.vmem %s3, %s260
      %s262 = smul.u32 8, %s20
      %s263 = smul.u32 8, %s20
      %p264 = scmp.lt.s32.totalorder %s19, 1
      %s265 = scalar_select %p264, %s19, 1
      %p266 = scmp.lt.s32.totalorder %s263, 7
      %s267 = scalar_select %p266, %s263, 7
      %s268 = smul.addr %s265, 8
      %s269 = sadd.s32 %s267, %s268
      %s270 = smul.addr %s269, 8
      %s271 = scalar_lea.vmem %s4, %s270
      %s272 = smul.u32 8, %s20
      %v273 = vld [vmem:[%s251] sm:$0xff]
      %v274 = vld [vmem:[%s251 + $0x8] sm:$0xff]
      %v275 = vld [vmem:[%s251 + $0x10] sm:$0xff]
      %v276 = vld [vmem:[%s251 + $0x18] sm:$0xff]
      %v277 = vld [vmem:[%s251 + $0x20] sm:$0xff]
      %v278 = vld [vmem:[%s251 + $0x28] sm:$0xff]
      %v279 = vld [vmem:[%s251 + $0x30] sm:$0xff]
      %v280 = vld [vmem:[%s251 + $0x38] sm:$0xff]
      %v281 = vld [vmem:[%s1] sm:$0xff]
      %v282 = vld [vmem:[%s1 + $0x8] sm:$0xff]
      %v283 = vld [vmem:[%s1 + $0x10] sm:$0xff]
      %v284 = vld [vmem:[%s1 + $0x18] sm:$0xff]
      %v285 = vld [vmem:[%s1 + $0x20] sm:$0xff]
      %v286 = vld [vmem:[%s1 + $0x28] sm:$0xff]
      %v287 = vld [vmem:[%s1 + $0x30] sm:$0xff]
      %v288 = vld [vmem:[%s1 + $0x38] sm:$0xff]
      %v289 = vld [vmem:[%s1 + $0x40] sm:$0xff]
      %v290 = vld [vmem:[%s1 + $0x48] sm:$0xff]
      %v291 = vld [vmem:[%s1 + $0x50] sm:$0xff]
      %v292 = vld [vmem:[%s1 + $0x58] sm:$0xff]
      %v293 = vld [vmem:[%s1 + $0x60] sm:$0xff]
      %v294 = vld [vmem:[%s1 + $0x68] sm:$0xff]
      %v295 = vld [vmem:[%s1 + $0x70] sm:$0xff]
      %v296 = vld [vmem:[%s1 + $0x78] sm:$0xff]
      %v297 = vld [vmem:[%s2] sm:$0x1]
      %v299 = vlaneseq
      %v300 = vshrl.u32 %v299, 7
      %v301 = vsub.s32 0, %v300
      %v302 = vrot.slane %v297, %v301
      %304 = vmatprep.subr.mxu0 0.0
      %305 = vmatpush1.msra.mxu0 %v296
      %306 = vmatprep.subr.mxu0 0.0
      %307 = vmatpush1.msra.mxu0 %v295
      %308 = vmatprep.subr.mxu0 0.0
      %309 = vmatpush1.msra.mxu0 %v294
      %310 = vmatprep.subr.mxu0 0.0
      %311 = vmatpush1.msra.mxu0 %v293
      %312 = vmatprep.subr.mxu0 0.0
      %313 = vmatpush1.msra.mxu0 %v292
      %314 = vmatprep.subr.mxu0 0.0
      %315 = vmatpush1.msra.mxu0 %v291
      %316 = vmatprep.subr.mxu0 0.0
      %317 = vmatpush1.msra.mxu0 %v290
      %318 = vmatprep.subr.mxu0 0.0
      %319 = vmatpush1.msra.mxu0 %v289
      %320 = vmatprep.subr.mxu0 0.0
      %321 = vmatpush1.msra.mxu0 %v288
      %322 = vmatprep.subr.mxu0 0.0
      %323 = vmatpush1.msra.mxu0 %v287
      %324 = vmatprep.subr.mxu0 0.0
      %325 = vmatpush1.msra.mxu0 %v286
      %326 = vmatprep.subr.mxu0 0.0
      %327 = vmatpush1.msra.mxu0 %v285
      %328 = vmatprep.subr.mxu0 0.0
      %329 = vmatpush1.msra.mxu0 %v284
      %330 = vmatprep.subr.mxu0 0.0
      %331 = vmatpush1.msra.mxu0 %v283
      %332 = vmatprep.subr.mxu0 0.0
      %333 = vmatpush1.msra.mxu0 %v282
      %334 = vmatprep.subr.mxu0 0.0
      %335 = vmatpush1.msra.mxu0 %v281
      %336 = vmatprep.subr.mxu0 0.0
      %337 = vmatpush2.msra.mxu0 0.0
      %338 = vmatprep.subr.mxu0 0.0
      %339 = vmatpush2.msra.mxu0 0.0
      %340 = vmatprep.subr.mxu0 0.0
      %341 = vmatpush2.msra.mxu0 0.0
      %342 = vmatprep.subr.mxu0 0.0
      %343 = vmatpush2.msra.mxu0 0.0
      %344 = vmatprep.subr.mxu0 0.0
      %345 = vmatpush2.msra.mxu0 0.0
      %346 = vmatprep.subr.mxu0 0.0
      %347 = vmatpush2.msra.mxu0 0.0
      %348 = vmatprep.subr.mxu0 0.0
      %349 = vmatpush2.msra.mxu0 0.0
      %350 = vmatprep.subr.mxu0 0.0
      %351 = vmatpush2.msra.mxu0 0.0
      %352 = vmatprep.subr.mxu0 0.0
      %353 = vmatpush2.msra.mxu0 0.0
      %354 = vmatprep.subr.mxu0 0.0
      %355 = vmatpush2.msra.mxu0 0.0
      %356 = vmatprep.subr.mxu0 0.0
      %357 = vmatpush2.msra.mxu0 0.0
      %358 = vmatprep.subr.mxu0 0.0
      %359 = vmatpush2.msra.mxu0 0.0
      %360 = vmatprep.subr.mxu0 0.0
      %361 = vmatpush2.msra.mxu0 0.0
      %362 = vmatprep.subr.mxu0 0.0
      %363 = vmatpush2.msra.mxu0 0.0
      %364 = vmatprep.subr.mxu0 0.0
      %365 = vmatpush2.msra.mxu0 0.0
      %366 = vmatprep.subr.mxu0 0.0
      %367 = vmatpush2.msra.mxu0 0.0
      %368 = vmatprep.mubr.f32.mxu0 0.0
      %369 = vmatmul.mubr.f32.gmra.mxu0 %v273
      %v370 = vpop.f32.mrf.mxu0
      %v371 = vadd.f32 %v302, %v370
      %v372 = vpop.f32.mrf.mxu0
      %373 = vmatprep.mubr.f32.mxu0 0.0
      %374 = vmatmul.mubr.f32.gmra.mxu0 %v274
      %v375 = vpop.f32.mrf.mxu0
      %v376 = vadd.f32 %v302, %v375
      %v377 = vpop.f32.mrf.mxu0
      %378 = vmatprep.mubr.f32.mxu0 0.0
      %379 = vmatmul.mubr.f32.gmra.mxu0 %v275
      %v380 = vpop.f32.mrf.mxu0
      %v381 = vadd.f32 %v302, %v380
      %v382 = vpop.f32.mrf.mxu0
      %383 = vmatprep.mubr.f32.mxu0 0.0
      %384 = vmatmul.mubr.f32.gmra.mxu0 %v276
      %v385 = vpop.f32.mrf.mxu0
      %v386 = vadd.f32 %v302, %v385
      %v387 = vpop.f32.mrf.mxu0
      %388 = vmatprep.mubr.f32.mxu0 0.0
      %389 = vmatmul.mubr.f32.gmra.mxu0 %v277
      %v390 = vpop.f32.mrf.mxu0
      %v391 = vadd.f32 %v302, %v390
      %v392 = vpop.f32.mrf.mxu0
      %393 = vmatprep.mubr.f32.mxu0 0.0
      %394 = vmatmul.mubr.f32.gmra.mxu0 %v278
      %v395 = vpop.f32.mrf.mxu0
      %v396 = vadd.f32 %v302, %v395
      %v397 = vpop.f32.mrf.mxu0
      %398 = vmatprep.mubr.f32.mxu0 0.0
      %399 = vmatmul.mubr.f32.gmra.mxu0 %v279
      %v400 = vpop.f32.mrf.mxu0
      %v401 = vadd.f32 %v302, %v400
      %v402 = vpop.f32.mrf.mxu0
      %403 = vmatprep.mubr.f32.mxu0 0.0
      %404 = vmatmul.mubr.f32.gmra.mxu0 %v280
      %v405 = vpop.f32.mrf.mxu0
      %v406 = vadd.f32 %v302, %v405
      %v407 = vpop.f32.mrf.mxu0
      %408 = vdwg.mxu0
      %v409 = vld [vmem:[%s261] sm:$0xff]
      %v410 = vld [vmem:[%s261 + $0x8] sm:$0xff]
      %v411 = vld [vmem:[%s261 + $0x10] sm:$0xff]
      %v412 = vld [vmem:[%s261 + $0x18] sm:$0xff]
      %v413 = vld [vmem:[%s261 + $0x20] sm:$0xff]
      %v414 = vld [vmem:[%s261 + $0x28] sm:$0xff]
      %v415 = vld [vmem:[%s261 + $0x30] sm:$0xff]
      %v416 = vld [vmem:[%s261 + $0x38] sm:$0xff]
      %v417 = vadd.f32 %v371, %v409
      %v418 = vadd.f32 %v376, %v410
      %v419 = vadd.f32 %v381, %v411
      %v420 = vadd.f32 %v386, %v412
      %v421 = vadd.f32 %v391, %v413
      %v422 = vadd.f32 %v396, %v414
      %v423 = vadd.f32 %v401, %v415
      %v424 = vadd.f32 %v406, %v416
      %vm425 = vcmask 261120
      %426 = vst.msk [vmem:[%s271] sm:$0xff] %vm425, %v417
      %427 = vst.msk [vmem:[%s271 + $0x8] sm:$0xff] %vm425, %v418
      %428 = vst.msk [vmem:[%s271 + $0x10] sm:$0xff] %vm425, %v419
      %429 = vst.msk [vmem:[%s271 + $0x18] sm:$0xff] %vm425, %v420
      %430 = vst.msk [vmem:[%s271 + $0x20] sm:$0xff] %vm425, %v421
      %431 = vst.msk [vmem:[%s271 + $0x28] sm:$0xff] %vm425, %v422
      %432 = vst.msk [vmem:[%s271 + $0x30] sm:$0xff] %vm425, %v423
      %433 = vst.msk [vmem:[%s271 + $0x38] sm:$0xff] %vm425, %v424
      %s434 = smul.u32 8, %s20
      %p435 = scmp.lt.s32.totalorder %s19, 1
      %s436 = scalar_select %p435, %s19, 1
      %p437 = scmp.lt.s32.totalorder %s434, 7
      %s438 = scalar_select %p437, %s434, 7
      %s439 = smul.addr %s436, 8
      %s440 = sadd.s32 %s438, %s439
      %s441 = smul.addr %s440, 8
      %s442 = scalar_lea.vmem %s4, %s441
      // Predicated region
      $region37: #{vision_transformer_block.9} parent=35 // pred_check
        %p443 = pneg %p145
      $region38: #{vision_transformer_block.9} parent=35 // pred_check_branch
        %445 = sbr.rel (%p443) target = $region40
      $region39: #{vision_transformer_block.9} parent=35 // pred_region
        %s446 = smul.u32 8, %s20
      $region40: #{vision_transformer_block.9} parent=35 // pred_fallthru
        _
    $region36: #{vision_transformer_block.9} parent=5 // pred_fallthru
      _
    %p447 = scmp.le.s32.totalorder 2, %s10
    // Predicated region
    $region41: #{vision_transformer_block.9} parent=5 // pred_check
      %p448 = pneg %p447
    $region42: #{vision_transformer_block.9} parent=5 // pred_check_branch
      %450 = sbr.rel (%p448) target = $region44
    $region43: #{vision_transformer_block.9} parent=5 // pred_region
      %s451 = ssub.s32 %s10, 2
      // Predicated region
      $region45: #{vision_transformer_block.9} parent=43 // pred_check
        %p452 = pneg %p151
      $region46: #{vision_transformer_block.9} parent=43 // pred_check_branch
        %454 = sbr.rel (%p452) target = $region48
      $region47: #{vision_transformer_block.9} parent=43 // pred_region
        %s455 = smul.u32 8, %s22
        %p456 = scmp.lt.s32.totalorder %s21, 1
        %s457 = scalar_select %p456, %s21, 1
        %p458 = scmp.lt.s32.totalorder %s455, 7
        %s459 = scalar_select %p458, %s455, 7
        %s460 = smul.addr %s457, 8
        %s461 = sadd.s32 %s459, %s460
        %s462 = smul.addr %s461, 8
        %s463 = scalar_lea.vmem %s4, %s462
      $region48: #{vision_transformer_block.9} parent=43 // pred_fallthru
        _
    $region44: #{vision_transformer_block.9} parent=5 // pred_fallthru
      _
  $region6: #{vision_transformer_block.9} parent=0 // loop_footer
    %s14 = sadd.s32 1, %s10
  $region7: #{vision_transformer_block.9} parent=0 // loop_footer_branch
    %9 = sbr.rel target = $region3
  $region8: #{vision_transformer_block.9} parent=0 // loop_exit
    _

</llo_original>
